<compile_context>
chip_gen: v5e
topology: v5e:2x2
jax: 0.10.0
libtpu: 0.0.40
codegen_flags: <defaults>
</compile_context>

<pallas_src>
import functools

import jax
import jax.numpy as jnp
from jax import lax
from jax.experimental import pallas as pl
from jax.experimental.pallas import tpu as pltpu


def _round_up(n, m):
    return ((n + m - 1) // m) * m


_VMEM = pl.BlockSpec(memory_space=pltpu.MemorySpace.VMEM)


# ----------------------------------------------------------------------------
# Fused kernel factory: num_layers x BiLSTM + classifier in one pallas_call.
# Gate lane layout per direction half: [ i | f | o | g ] (H lanes each),
# forward half at lanes [0:4H], backward half at lanes [4H:8H].
# ----------------------------------------------------------------------------
def _make_fused_kernel(T, Bp, H, num_layers):
    H2, H4, H8 = 2 * H, 4 * H, 8 * H

    def kernel(*refs):
        # inputs | outputs | scratch
        x_ref = refs[0]
        layer_w = [refs[1 + 3 * l: 4 + 3 * l] for l in range(num_layers)]
        base = 1 + 3 * num_layers
        cls_w_ref, cls_b_ref = refs[base], refs[base + 1]
        logits_ref, h_out_ref, c_out_ref = refs[base + 2], refs[base + 3], refs[base + 4]
        xproj_ref, buf0_ref, buf1_ref = refs[base + 5], refs[base + 6], refs[base + 7]
        bufs = (buf0_ref, buf1_ref)

        def run_layer(layer_idx, x2d, out_buf):
            w_ih_ref, w_hh_ref, b_ref = layer_w[layer_idx]

            # -- hoisted input projection: ONE MXU slab for both directions ------
            proj = (jnp.dot(x2d, w_ih_ref[...], preferred_element_type=jnp.float32)
                    + b_ref[...])                                  # (T*Bp, 8H)
            # fwd gates in time order; bwd gates stored time-reversed so the loop
            # reads one aligned (Bp, 8H) slab per step.  Static preamble loop.
            xproj_ref[:, 0:H4] = proj[:, 0:H4]
            for tt in range(T):
                xproj_ref[pl.ds(tt * Bp, Bp), H4:H8] = (
                    proj[(T - 1 - tt) * Bp:(T - tt) * Bp, H4:H8])

            w_hh = w_hh_ref[...]                                   # (2H, 8H) block-diag

            def step(t, carry):
                h_f, h_b, c_f, c_b = carry                         # vreg-resident carries
                tb = T - 1 - t
                row_t = pl.multiple_of(t * Bp, Bp)
                row_b = pl.multiple_of(tb * Bp, Bp)
                # single recurrent MXU push for both directions
                h_cat = jnp.concatenate([h_f, h_b], axis=-1)       # (Bp, 2H)
                gates = xproj_ref[pl.ds(row_t, Bp)] + jnp.dot(
                    h_cat, w_hh, preferred_element_type=jnp.float32)   # (Bp, 8H)
                # batched activations: one sigmoid over the whole gate slab,
                # tanh only on g lanes and the new cell state.
                sig = jax.nn.sigmoid(gates)
                g_f = jnp.tanh(gates[:, 3 * H:4 * H])
                g_b = jnp.tanh(gates[:, 7 * H:8 * H])
                c_f = sig[:, H:2 * H] * c_f + sig[:, 0:H] * g_f
                c_b = sig[:, 5 * H:6 * H] * c_b + sig[:, 4 * H:5 * H] * g_b
                h_f = sig[:, 2 * H:3 * H] * jnp.tanh(c_f)
                h_b = sig[:, 6 * H:7 * H] * jnp.tanh(c_b)
                # output stores are off the serial critical path
                out_buf[pl.ds(row_t, Bp), 0:H] = h_f
                out_buf[pl.ds(row_b, Bp), H:H2] = h_b
                return h_f, h_b, c_f, c_b

            zero = jnp.zeros((Bp, H), jnp.float32)
            h_f, h_b, c_f, c_b = lax.fori_loop(
                0, T, step, (zero, zero, zero, zero),
                unroll=True if T <= 16 else 4)

            # final states written once, after the loop
            h_out_ref[2 * layer_idx] = h_f
            h_out_ref[2 * layer_idx + 1] = h_b
            c_out_ref[2 * layer_idx] = c_f
            c_out_ref[2 * layer_idx + 1] = c_b

        x2d = x_ref[...]                                           # (T*Bp, D_in)
        for l in range(num_layers):
            out_buf = bufs[l % 2]
            run_layer(l, x2d, out_buf)
            x2d = out_buf[...]                                     # (T*Bp, 2H)

        # ---- dropout (eval-mode identity) + classifier, fused in-kernel --------
        logits_ref[...] = (
            jnp.dot(x2d, cls_w_ref[...], preferred_element_type=jnp.float32)
            + cls_b_ref[...])

    return kernel


# ----------------------------------------------------------------------------
# Wrapper
# ----------------------------------------------------------------------------
@functools.partial(jax.jit, static_argnames=("num_labels",))
def rnn_bilstm_forward(x, params, num_labels):
    """Inference forward of RNN_BiLSTM.  Returns (logits (B,T,L), (h_n, c_n))."""
    B, T, D = x.shape
    lstm = params["lstm"]
    num_layers = len(lstm)
    H = lstm[0][1].shape[0] // 2            # w_hh_fused: (2H, 8H)
    Lp = params["cls_w"].shape[-1]

    Bp = _round_up(max(B, 1), 8)            # sublane-aligned batch
    xt = jnp.transpose(x, (1, 0, 2))        # (T, B, D) time-major
    if Bp != B:
        xt = jnp.pad(xt, ((0, 0), (0, Bp - B), (0, 0)))
    x2d = xt.reshape(T * Bp, D)

    flat_w = []
    for (w_ih, w_hh, b) in lstm:
        flat_w += [w_ih, w_hh, b]

    # advisory cost estimate
    flops, d_prev = 0, D
    for _ in range(num_layers):
        flops += 2 * T * Bp * d_prev * 8 * H + 2 * T * Bp * 2 * H * 8 * H
        d_prev = 2 * H
    flops += 2 * T * Bp * 2 * H * Lp
    transcendentals = num_layers * T * Bp * 12 * H
    nbytes = 4 * (x2d.size + sum(int(w.size) for w in flat_w)
                  + int(params["cls_w"].size) + int(params["cls_b"].size)
                  + T * Bp * Lp + 4 * num_layers * Bp * H)

    kernel = _make_fused_kernel(T, Bp, H, num_layers)
    n_in = 3 + 3 * num_layers
    logits_p, h_n_p, c_n_p = pl.pallas_call(
        kernel,
        out_shape=(
            jax.ShapeDtypeStruct((T * Bp, Lp), jnp.float32),
            jax.ShapeDtypeStruct((2 * num_layers, Bp, H), jnp.float32),
            jax.ShapeDtypeStruct((2 * num_layers, Bp, H), jnp.float32),
        ),
        in_specs=[_VMEM] * n_in,
        out_specs=(_VMEM, _VMEM, _VMEM),
        scratch_shapes=[
            pltpu.VMEM((T * Bp, 8 * H), jnp.float32),   # xproj (bwd half time-reversed)
            pltpu.VMEM((T * Bp, 2 * H), jnp.float32),   # layer output (ping)
            pltpu.VMEM((T * Bp, 2 * H), jnp.float32),   # layer output (pong)
        ],
        cost_estimate=pl.CostEstimate(
            flops=flops, transcendentals=transcendentals, bytes_accessed=nbytes),
    )(x2d, *flat_w, params["cls_w"], params["cls_b"])

    logits = logits_p.reshape(T, Bp, Lp)[:, :B, :num_labels]
    logits = jnp.transpose(logits, (1, 0, 2))            # (B, T, L) — tiny tensor
    return logits, (h_n_p[:, :B, :], c_n_p[:, :B, :])


# ----------------------------------------------------------------------------
# Parameters: torch-layout construction + fusion into the kernel layout
# ----------------------------------------------------------------------------
def make_params(key, input_size, hidden_size, num_layers, num_labels):
    """PyTorch-layout LSTM/Linear params (gate order i|f|g|o, uniform(+-1/sqrt(H)))."""
    H = hidden_size
    scale = 1.0 / float(H) ** 0.5
    lstm = []
    for layer in range(num_layers):
        d_in = input_size if layer == 0 else 2 * H
        dirs = []
        for _direction in range(2):
            key, k1, k2, k3, k4 = jax.random.split(key, 5)
            w_ih = jax.random.uniform(k1, (4 * H, d_in), jnp.float32, -scale, scale)
            w_hh = jax.random.uniform(k2, (4 * H, H), jnp.float32, -scale, scale)
            b_ih = jax.random.uniform(k3, (4 * H,), jnp.float32, -scale, scale)
            b_hh = jax.random.uniform(k4, (4 * H,), jnp.float32, -scale, scale)
            dirs.append((w_ih, w_hh, b_ih, b_hh))
        lstm.append(tuple(dirs))
    key, kw, kb = jax.random.split(key, 3)
    cls_scale = 1.0 / float(2 * H) ** 0.5
    cls_w = jax.random.uniform(kw, (num_labels, 2 * H), jnp.float32, -cls_scale, cls_scale)
    cls_b = jax.random.uniform(kb, (num_labels,), jnp.float32, -cls_scale, cls_scale)
    return {"lstm": lstm, "cls_w": cls_w, "cls_b": cls_b}


def _reorder_gates(m, H):
    # last-axis gate order i|f|g|o (torch) -> i|f|o|g (kernel)
    return jnp.concatenate(
        [m[..., 0:H], m[..., H:2 * H], m[..., 3 * H:4 * H], m[..., 2 * H:3 * H]], axis=-1)


def fuse_params(raw, hidden_size, num_labels):
    """Rearrange torch-layout params into the fused kernel layout."""
    H = hidden_size
    lstm_fused = []
    for dirs in raw["lstm"]:
        (wih_f, whh_f, bih_f, bhh_f), (wih_b, whh_b, bih_b, bhh_b) = dirs
        # input->gate: (d_in, 8H), columns [fwd i|f|o|g | bwd i|f|o|g]
        w_ih = jnp.concatenate(
            [_reorder_gates(wih_f.T, H), _reorder_gates(wih_b.T, H)], axis=-1)
        # hidden->gate: block-diagonal (2H, 8H): h_fwd feeds fwd cols, h_bwd feeds bwd cols
        z = jnp.zeros((H, 4 * H), jnp.float32)
        w_hh = jnp.concatenate([
            jnp.concatenate([_reorder_gates(whh_f.T, H), z], axis=-1),
            jnp.concatenate([z, _reorder_gates(whh_b.T, H)], axis=-1)], axis=0)
        b = jnp.concatenate(
            [_reorder_gates((bih_f + bhh_f)[None, :], H),
             _reorder_gates((bih_b + bhh_b)[None, :], H)], axis=-1)      # (1, 8H)
        lstm_fused.append((w_ih, w_hh, b))
    # classifier: (2H, Lp) lane-padded to a 128 multiple (unmasked in-kernel stores)
    Lp = _round_up(max(num_labels, 1), 128)
    cls_w = jnp.zeros((2 * H, Lp), jnp.float32).at[:, :num_labels].set(raw["cls_w"].T)
    cls_b = jnp.zeros((1, Lp), jnp.float32).at[0, :num_labels].set(raw["cls_b"])
    return {"lstm": lstm_fused, "cls_w": cls_w, "cls_b": cls_b}


# ----------------------------------------------------------------------------
# Pure-JAX reference (PyTorch nn.LSTM semantics) for correctness checking
# ----------------------------------------------------------------------------
def _ref_cell(x_t, h, c, w_ih, w_hh, b_ih, b_hh, H):
    gates = (jnp.dot(x_t, w_ih.T, precision=lax.Precision.HIGHEST) + b_ih
             + jnp.dot(h, w_hh.T, precision=lax.Precision.HIGHEST) + b_hh)
    i = jax.nn.sigmoid(gates[:, 0:H])
    f = jax.nn.sigmoid(gates[:, H:2 * H])
    g = jnp.tanh(gates[:, 2 * H:3 * H])
    o = jax.nn.sigmoid(gates[:, 3 * H:4 * H])
    c = f * c + i * g
    return o * jnp.tanh(c), c


def rnn_bilstm_reference(x, raw):
    B, T, _ = x.shape
    H = raw["lstm"][0][0][1].shape[-1]
    layer_in = x
    h_all, c_all = [], []
    for dirs in raw["lstm"]:
        (wif, whf, bif, bhf), (wib, whb, bib, bhb) = dirs
        h_f = c_f = jnp.zeros((B, H), jnp.float32)
        h_b = c_b = jnp.zeros((B, H), jnp.float32)
        outs_f, outs_b = [], [None] * T
        for t in range(T):
            h_f, c_f = _ref_cell(layer_in[:, t], h_f, c_f, wif, whf, bif, bhf, H)
            outs_f.append(h_f)
        for t in range(T - 1, -1, -1):
            h_b, c_b = _ref_cell(layer_in[:, t], h_b, c_b, wib, whb, bib, bhb, H)
            outs_b[t] = h_b
        layer_in = jnp.concatenate(
            [jnp.stack(outs_f, axis=1), jnp.stack(outs_b, axis=1)], axis=-1)
        h_all += [h_f, h_b]
        c_all += [c_f, c_b]
    logits = jnp.dot(layer_in, raw["cls_w"].T,
                     precision=lax.Precision.HIGHEST) + raw["cls_b"]
    return logits, (jnp.stack(h_all), jnp.stack(c_all))


# ----------------------------------------------------------------------------
if __name__ == "__main__":
    B, T = 2, 8
    INPUT_SIZE, HIDDEN_SIZE, NUM_LAYERS, NUM_LABELS = 64, 32, 2, 8

    key = jax.random.PRNGKey(0)
    key, kx = jax.random.split(key)
    x = jax.random.normal(kx, (B, T, INPUT_SIZE), dtype=jnp.float32)

    raw_params = make_params(key, INPUT_SIZE, HIDDEN_SIZE, NUM_LAYERS, NUM_LABELS)
    params = fuse_params(raw_params, HIDDEN_SIZE, NUM_LABELS)

    logits, (h_n, c_n) = rnn_bilstm_forward(x, params, NUM_LABELS)
    jax.block_until_ready((logits, h_n, c_n))

    assert logits.shape == (B, T, NUM_LABELS)
    assert h_n.shape == (NUM_LAYERS * 2, B, HIDDEN_SIZE)
    assert c_n.shape == (NUM_LAYERS * 2, B, HIDDEN_SIZE)
    assert bool(jnp.all(jnp.isfinite(logits)))

    # correctness vs. a pure-JAX PyTorch-semantics reference (loose tolerances:
    # EUP transcendental approximations + MXU pass differences are expected).
    ref_logits, (ref_h, ref_c) = rnn_bilstm_reference(x, raw_params)
    assert float(jnp.max(jnp.abs(logits - ref_logits))) < 5e-2
    assert float(jnp.max(jnp.abs(h_n - ref_h))) < 5e-2
    assert float(jnp.max(jnp.abs(c_n - ref_c))) < 1e-1

    print("KERNEL_OK")
</pallas_src>

<mosaic_0001>
module attributes {stable_mosaic.version = 11 : i64} {
  func.func @kernel(%arg0: memref<64x64xf32, #tpu.memory_space<vmem>>, %arg1: memref<64x256xf32, #tpu.memory_space<vmem>>, %arg2: memref<64x256xf32, #tpu.memory_space<vmem>>, %arg3: memref<1x256xf32, #tpu.memory_space<vmem>>, %arg4: memref<64x256xf32, #tpu.memory_space<vmem>>, %arg5: memref<64x256xf32, #tpu.memory_space<vmem>>, %arg6: memref<1x256xf32, #tpu.memory_space<vmem>>, %arg7: memref<64x128xf32, #tpu.memory_space<vmem>>, %arg8: memref<1x128xf32, #tpu.memory_space<vmem>>, %arg9: memref<64x128xf32, #tpu.memory_space<vmem>>, %arg10: memref<4x8x32xf32, #tpu.memory_space<vmem>>, %arg11: memref<4x8x32xf32, #tpu.memory_space<vmem>>, %arg12: memref<64x256xf32, #tpu.memory_space<vmem>>, %arg13: memref<64x64xf32, #tpu.memory_space<vmem>>, %arg14: memref<64x64xf32, #tpu.memory_space<vmem>>) attributes {dimension_semantics = [], scalar_prefetch = 0 : i64, scratch_operands = 3 : i64, tpu.core_type = #tpu.core_type<tc>} {
    %c0 = arith.constant 0 : index
    %c0_0 = arith.constant 0 : index
    %0 = vector.load %arg0[%c0, %c0_0] : memref<64x64xf32, #tpu.memory_space<vmem>>, vector<64x64xf32>
    %c0_1 = arith.constant 0 : index
    %c0_2 = arith.constant 0 : index
    %1 = vector.load %arg1[%c0_1, %c0_2] : memref<64x256xf32, #tpu.memory_space<vmem>>, vector<64x256xf32>
    %cst = arith.constant dense<0.000000e+00> : vector<64x256xf32>
    %2 = tpu.matmul %0, %1, %cst {dimension_numbers = #tpu.dot_dimension_numbers<[1], [0], [0], [1], [0, 0, 1, 1], [], []>} : vector<64x64xf32>, vector<64x256xf32>, vector<64x256xf32> -> vector<64x256xf32>
    %c0_3 = arith.constant 0 : index
    %c0_4 = arith.constant 0 : index
    %3 = vector.load %arg3[%c0_3, %c0_4] : memref<1x256xf32, #tpu.memory_space<vmem>>, vector<1x256xf32>
    %4 = vector.broadcast %3 : vector<1x256xf32> to vector<64x256xf32>
    %5 = arith.addf %2, %4 : vector<64x256xf32>
    %6 = vector.extract_strided_slice %5 {offsets = [0, 0], sizes = [64, 128], strides = [1, 1]} : vector<64x256xf32> to vector<64x128xf32>
    %c0_5 = arith.constant 0 : index
    %c0_6 = arith.constant 0 : index
    %7 = vector.load %arg12[%c0_5, %c0_6] : memref<64x256xf32, #tpu.memory_space<vmem>>, vector<64x128xf32>
    tpu.vector_store %arg12[%c0_5, %c0_6], %6 {strides = array<i32>} : memref<64x256xf32, #tpu.memory_space<vmem>>, vector<64x128xf32>,
    %8 = vector.extract_strided_slice %5 {offsets = [56, 128], sizes = [8, 128], strides = [1, 1]} : vector<64x256xf32> to vector<8x128xf32>
    %c0_7 = arith.constant 0 : index
    %c128 = arith.constant 128 : index
    %9 = vector.load %arg12[%c0_7, %c128] : memref<64x256xf32, #tpu.memory_space<vmem>>, vector<8x128xf32>
    tpu.vector_store %arg12[%c0_7, %c128], %8 {strides = array<i32>} : memref<64x256xf32, #tpu.memory_space<vmem>>, vector<8x128xf32>,
    %10 = vector.extract_strided_slice %5 {offsets = [48, 128], sizes = [8, 128], strides = [1, 1]} : vector<64x256xf32> to vector<8x128xf32>
    %c8 = arith.constant 8 : index
    %c128_8 = arith.constant 128 : index
    %11 = vector.load %arg12[%c8, %c128_8] : memref<64x256xf32, #tpu.memory_space<vmem>>, vector<8x128xf32>
    tpu.vector_store %arg12[%c8, %c128_8], %10 {strides = array<i32>} : memref<64x256xf32, #tpu.memory_space<vmem>>, vector<8x128xf32>,
    %12 = vector.extract_strided_slice %5 {offsets = [40, 128], sizes = [8, 128], strides = [1, 1]} : vector<64x256xf32> to vector<8x128xf32>
    %c16 = arith.constant 16 : index
    %c128_9 = arith.constant 128 : index
    %13 = vector.load %arg12[%c16, %c128_9] : memref<64x256xf32, #tpu.memory_space<vmem>>, vector<8x128xf32>
    tpu.vector_store %arg12[%c16, %c128_9], %12 {strides = array<i32>} : memref<64x256xf32, #tpu.memory_space<vmem>>, vector<8x128xf32>,
    %14 = vector.extract_strided_slice %5 {offsets = [32, 128], sizes = [8, 128], strides = [1, 1]} : vector<64x256xf32> to vector<8x128xf32>
    %c24 = arith.constant 24 : index
    %c128_10 = arith.constant 128 : index
    %15 = vector.load %arg12[%c24, %c128_10] : memref<64x256xf32, #tpu.memory_space<vmem>>, vector<8x128xf32>
    tpu.vector_store %arg12[%c24, %c128_10], %14 {strides = array<i32>} : memref<64x256xf32, #tpu.memory_space<vmem>>, vector<8x128xf32>,
    %16 = vector.extract_strided_slice %5 {offsets = [24, 128], sizes = [8, 128], strides = [1, 1]} : vector<64x256xf32> to vector<8x128xf32>
    %c32 = arith.constant 32 : index
    %c128_11 = arith.constant 128 : index
    %17 = vector.load %arg12[%c32, %c128_11] : memref<64x256xf32, #tpu.memory_space<vmem>>, vector<8x128xf32>
    tpu.vector_store %arg12[%c32, %c128_11], %16 {strides = array<i32>} : memref<64x256xf32, #tpu.memory_space<vmem>>, vector<8x128xf32>,
    %18 = vector.extract_strided_slice %5 {offsets = [16, 128], sizes = [8, 128], strides = [1, 1]} : vector<64x256xf32> to vector<8x128xf32>
    %c40 = arith.constant 40 : index
    %c128_12 = arith.constant 128 : index
    %19 = vector.load %arg12[%c40, %c128_12] : memref<64x256xf32, #tpu.memory_space<vmem>>, vector<8x128xf32>
    tpu.vector_store %arg12[%c40, %c128_12], %18 {strides = array<i32>} : memref<64x256xf32, #tpu.memory_space<vmem>>, vector<8x128xf32>,
    %20 = vector.extract_strided_slice %5 {offsets = [8, 128], sizes = [8, 128], strides = [1, 1]} : vector<64x256xf32> to vector<8x128xf32>
    %c48 = arith.constant 48 : index
    %c128_13 = arith.constant 128 : index
    %21 = vector.load %arg12[%c48, %c128_13] : memref<64x256xf32, #tpu.memory_space<vmem>>, vector<8x128xf32>
    tpu.vector_store %arg12[%c48, %c128_13], %20 {strides = array<i32>} : memref<64x256xf32, #tpu.memory_space<vmem>>, vector<8x128xf32>,
    %22 = vector.extract_strided_slice %5 {offsets = [0, 128], sizes = [8, 128], strides = [1, 1]} : vector<64x256xf32> to vector<8x128xf32>
    %c56 = arith.constant 56 : index
    %c128_14 = arith.constant 128 : index
    %23 = vector.load %arg12[%c56, %c128_14] : memref<64x256xf32, #tpu.memory_space<vmem>>, vector<8x128xf32>
    tpu.vector_store %arg12[%c56, %c128_14], %22 {strides = array<i32>} : memref<64x256xf32, #tpu.memory_space<vmem>>, vector<8x128xf32>,
    %c0_15 = arith.constant 0 : index
    %c0_16 = arith.constant 0 : index
    %24 = vector.load %arg2[%c0_15, %c0_16] : memref<64x256xf32, #tpu.memory_space<vmem>>, vector<64x256xf32>
    %cst_17 = arith.constant 0.000000e+00 : f32
    %25 = vector.broadcast %cst_17 : f32 to vector<8x32xf32>
    %c0_i32 = arith.constant 0 : i32
    %c7_i32 = arith.constant 7 : i32
    %26 = arith.subi %c7_i32, %c0_i32 : i32
    %c8_i32 = arith.constant 8 : i32
    %27 = arith.muli %c0_i32, %c8_i32 : i32
    %28 = tpu.assume_multiple %27, 8 : i32
    %c8_i32_18 = arith.constant 8 : i32
    %29 = arith.muli %26, %c8_i32_18 : i32
    %30 = tpu.assume_multiple %29, 8 : i32
    %31 = tpu.concatenate %25, %25 in 1 : vector<8x32xf32>, vector<8x32xf32> -> vector<8x64xf32>
    %32 = arith.index_cast %28 : i32 to index
    %c0_19 = arith.constant 0 : index
    %33 = vector.load %arg12[%32, %c0_19] : memref<64x256xf32, #tpu.memory_space<vmem>>, vector<8x256xf32>
    %cst_20 = arith.constant dense<0.000000e+00> : vector<8x256xf32>
    %34 = tpu.matmul %31, %24, %cst_20 {dimension_numbers = #tpu.dot_dimension_numbers<[1], [0], [0], [1], [0, 0, 1, 1], [], []>} : vector<8x64xf32>, vector<64x256xf32>, vector<8x256xf32> -> vector<8x256xf32>
    %35 = arith.addf %33, %34 : vector<8x256xf32>
    %36 = arith.negf %35 : vector<8x256xf32>
    %37 = math.exp %36 : vector<8x256xf32>
    %cst_21 = arith.constant 1.000000e+00 : f32
    %38 = vector.broadcast %cst_21 : f32 to vector<8x256xf32>
    %39 = arith.addf %38, %37 : vector<8x256xf32>
    %40 = arith.divf %38, %39 : vector<8x256xf32>
    %41 = vector.extract_strided_slice %35 {offsets = [0, 96], sizes = [8, 32], strides = [1, 1]} : vector<8x256xf32> to vector<8x32xf32>
    %42 = math.tanh %41 : vector<8x32xf32>
    %43 = vector.extract_strided_slice %35 {offsets = [0, 224], sizes = [8, 32], strides = [1, 1]} : vector<8x256xf32> to vector<8x32xf32>
    %44 = math.tanh %43 : vector<8x32xf32>
    %45 = vector.extract_strided_slice %40 {offsets = [0, 32], sizes = [8, 32], strides = [1, 1]} : vector<8x256xf32> to vector<8x32xf32>
    %46 = arith.mulf %45, %25 : vector<8x32xf32>
    %47 = vector.extract_strided_slice %40 {offsets = [0, 0], sizes = [8, 32], strides = [1, 1]} : vector<8x256xf32> to vector<8x32xf32>
    %48 = arith.mulf %47, %42 : vector<8x32xf32>
    %49 = arith.addf %46, %48 : vector<8x32xf32>
    %50 = vector.extract_strided_slice %40 {offsets = [0, 160], sizes = [8, 32], strides = [1, 1]} : vector<8x256xf32> to vector<8x32xf32>
    %51 = arith.mulf %50, %25 : vector<8x32xf32>
    %52 = vector.extract_strided_slice %40 {offsets = [0, 128], sizes = [8, 32], strides = [1, 1]} : vector<8x256xf32> to vector<8x32xf32>
    %53 = arith.mulf %52, %44 : vector<8x32xf32>
    %54 = arith.addf %51, %53 : vector<8x32xf32>
    %55 = vector.extract_strided_slice %40 {offsets = [0, 64], sizes = [8, 32], strides = [1, 1]} : vector<8x256xf32> to vector<8x32xf32>
    %56 = math.tanh %49 : vector<8x32xf32>
    %57 = arith.mulf %55, %56 : vector<8x32xf32>
    %58 = vector.extract_strided_slice %40 {offsets = [0, 192], sizes = [8, 32], strides = [1, 1]} : vector<8x256xf32> to vector<8x32xf32>
    %59 = math.tanh %54 : vector<8x32xf32>
    %60 = arith.mulf %58, %59 : vector<8x32xf32>
    %61 = arith.index_cast %28 : i32 to index
    %c0_22 = arith.constant 0 : index
    %62 = vector.load %arg13[%61, %c0_22] : memref<64x64xf32, #tpu.memory_space<vmem>>, vector<8x32xf32>
    tpu.vector_store %arg13[%61, %c0_22], %57 {strides = array<i32>} : memref<64x64xf32, #tpu.memory_space<vmem>>, vector<8x32xf32>,
    %63 = arith.index_cast %30 : i32 to index
    %c32_23 = arith.constant 32 : index
    %64 = vector.load %arg13[%63, %c32_23] : memref<64x64xf32, #tpu.memory_space<vmem>>, vector<8x32xf32>
    tpu.vector_store %arg13[%63, %c32_23], %60 {strides = array<i32>} : memref<64x64xf32, #tpu.memory_space<vmem>>, vector<8x32xf32>,
    %c1_i32 = arith.constant 1 : i32
    %c7_i32_24 = arith.constant 7 : i32
    %65 = arith.subi %c7_i32_24, %c1_i32 : i32
    %c8_i32_25 = arith.constant 8 : i32
    %66 = arith.muli %c1_i32, %c8_i32_25 : i32
    %67 = tpu.assume_multiple %66, 8 : i32
    %c8_i32_26 = arith.constant 8 : i32
    %68 = arith.muli %65, %c8_i32_26 : i32
    %69 = tpu.assume_multiple %68, 8 : i32
    %70 = tpu.concatenate %57, %60 in 1 : vector<8x32xf32>, vector<8x32xf32> -> vector<8x64xf32>
    %71 = arith.index_cast %67 : i32 to index
    %c0_27 = arith.constant 0 : index
    %72 = vector.load %arg12[%71, %c0_27] : memref<64x256xf32, #tpu.memory_space<vmem>>, vector<8x256xf32>
    %cst_28 = arith.constant dense<0.000000e+00> : vector<8x256xf32>
    %73 = tpu.matmul %70, %24, %cst_28 {dimension_numbers = #tpu.dot_dimension_numbers<[1], [0], [0], [1], [0, 0, 1, 1], [], []>} : vector<8x64xf32>, vector<64x256xf32>, vector<8x256xf32> -> vector<8x256xf32>
    %74 = arith.addf %72, %73 : vector<8x256xf32>
    %75 = arith.negf %74 : vector<8x256xf32>
    %76 = math.exp %75 : vector<8x256xf32>
    %cst_29 = arith.constant 1.000000e+00 : f32
    %77 = vector.broadcast %cst_29 : f32 to vector<8x256xf32>
    %78 = arith.addf %77, %76 : vector<8x256xf32>
    %79 = arith.divf %77, %78 : vector<8x256xf32>
    %80 = vector.extract_strided_slice %74 {offsets = [0, 96], sizes = [8, 32], strides = [1, 1]} : vector<8x256xf32> to vector<8x32xf32>
    %81 = math.tanh %80 : vector<8x32xf32>
    %82 = vector.extract_strided_slice %74 {offsets = [0, 224], sizes = [8, 32], strides = [1, 1]} : vector<8x256xf32> to vector<8x32xf32>
    %83 = math.tanh %82 : vector<8x32xf32>
    %84 = vector.extract_strided_slice %79 {offsets = [0, 32], sizes = [8, 32], strides = [1, 1]} : vector<8x256xf32> to vector<8x32xf32>
    %85 = arith.mulf %84, %49 : vector<8x32xf32>
    %86 = vector.extract_strided_slice %79 {offsets = [0, 0], sizes = [8, 32], strides = [1, 1]} : vector<8x256xf32> to vector<8x32xf32>
    %87 = arith.mulf %86, %81 : vector<8x32xf32>
    %88 = arith.addf %85, %87 : vector<8x32xf32>
    %89 = vector.extract_strided_slice %79 {offsets = [0, 160], sizes = [8, 32], strides = [1, 1]} : vector<8x256xf32> to vector<8x32xf32>
    %90 = arith.mulf %89, %54 : vector<8x32xf32>
    %91 = vector.extract_strided_slice %79 {offsets = [0, 128], sizes = [8, 32], strides = [1, 1]} : vector<8x256xf32> to vector<8x32xf32>
    %92 = arith.mulf %91, %83 : vector<8x32xf32>
    %93 = arith.addf %90, %92 : vector<8x32xf32>
    %94 = vector.extract_strided_slice %79 {offsets = [0, 64], sizes = [8, 32], strides = [1, 1]} : vector<8x256xf32> to vector<8x32xf32>
    %95 = math.tanh %88 : vector<8x32xf32>
    %96 = arith.mulf %94, %95 : vector<8x32xf32>
    %97 = vector.extract_strided_slice %79 {offsets = [0, 192], sizes = [8, 32], strides = [1, 1]} : vector<8x256xf32> to vector<8x32xf32>
    %98 = math.tanh %93 : vector<8x32xf32>
    %99 = arith.mulf %97, %98 : vector<8x32xf32>
    %100 = arith.index_cast %67 : i32 to index
    %c0_30 = arith.constant 0 : index
    %101 = vector.load %arg13[%100, %c0_30] : memref<64x64xf32, #tpu.memory_space<vmem>>, vector<8x32xf32>
    tpu.vector_store %arg13[%100, %c0_30], %96 {strides = array<i32>} : memref<64x64xf32, #tpu.memory_space<vmem>>, vector<8x32xf32>,
    %102 = arith.index_cast %69 : i32 to index
    %c32_31 = arith.constant 32 : index
    %103 = vector.load %arg13[%102, %c32_31] : memref<64x64xf32, #tpu.memory_space<vmem>>, vector<8x32xf32>
    tpu.vector_store %arg13[%102, %c32_31], %99 {strides = array<i32>} : memref<64x64xf32, #tpu.memory_space<vmem>>, vector<8x32xf32>,
    %c2_i32 = arith.constant 2 : i32
    %c7_i32_32 = arith.constant 7 : i32
    %104 = arith.subi %c7_i32_32, %c2_i32 : i32
    %c8_i32_33 = arith.constant 8 : i32
    %105 = arith.muli %c2_i32, %c8_i32_33 : i32
    %106 = tpu.assume_multiple %105, 8 : i32
    %c8_i32_34 = arith.constant 8 : i32
    %107 = arith.muli %104, %c8_i32_34 : i32
    %108 = tpu.assume_multiple %107, 8 : i32
    %109 = tpu.concatenate %96, %99 in 1 : vector<8x32xf32>, vector<8x32xf32> -> vector<8x64xf32>
    %110 = arith.index_cast %106 : i32 to index
    %c0_35 = arith.constant 0 : index
    %111 = vector.load %arg12[%110, %c0_35] : memref<64x256xf32, #tpu.memory_space<vmem>>, vector<8x256xf32>
    %cst_36 = arith.constant dense<0.000000e+00> : vector<8x256xf32>
    %112 = tpu.matmul %109, %24, %cst_36 {dimension_numbers = #tpu.dot_dimension_numbers<[1], [0], [0], [1], [0, 0, 1, 1], [], []>} : vector<8x64xf32>, vector<64x256xf32>, vector<8x256xf32> -> vector<8x256xf32>
    %113 = arith.addf %111, %112 : vector<8x256xf32>
    %114 = arith.negf %113 : vector<8x256xf32>
    %115 = math.exp %114 : vector<8x256xf32>
    %cst_37 = arith.constant 1.000000e+00 : f32
    %116 = vector.broadcast %cst_37 : f32 to vector<8x256xf32>
    %117 = arith.addf %116, %115 : vector<8x256xf32>
    %118 = arith.divf %116, %117 : vector<8x256xf32>
    %119 = vector.extract_strided_slice %113 {offsets = [0, 96], sizes = [8, 32], strides = [1, 1]} : vector<8x256xf32> to vector<8x32xf32>
    %120 = math.tanh %119 : vector<8x32xf32>
    %121 = vector.extract_strided_slice %113 {offsets = [0, 224], sizes = [8, 32], strides = [1, 1]} : vector<8x256xf32> to vector<8x32xf32>
    %122 = math.tanh %121 : vector<8x32xf32>
    %123 = vector.extract_strided_slice %118 {offsets = [0, 32], sizes = [8, 32], strides = [1, 1]} : vector<8x256xf32> to vector<8x32xf32>
    %124 = arith.mulf %123, %88 : vector<8x32xf32>
    %125 = vector.extract_strided_slice %118 {offsets = [0, 0], sizes = [8, 32], strides = [1, 1]} : vector<8x256xf32> to vector<8x32xf32>
    %126 = arith.mulf %125, %120 : vector<8x32xf32>
    %127 = arith.addf %124, %126 : vector<8x32xf32>
    %128 = vector.extract_strided_slice %118 {offsets = [0, 160], sizes = [8, 32], strides = [1, 1]} : vector<8x256xf32> to vector<8x32xf32>
    %129 = arith.mulf %128, %93 : vector<8x32xf32>
    %130 = vector.extract_strided_slice %118 {offsets = [0, 128], sizes = [8, 32], strides = [1, 1]} : vector<8x256xf32> to vector<8x32xf32>
    %131 = arith.mulf %130, %122 : vector<8x32xf32>
    %132 = arith.addf %129, %131 : vector<8x32xf32>
    %133 = vector.extract_strided_slice %118 {offsets = [0, 64], sizes = [8, 32], strides = [1, 1]} : vector<8x256xf32> to vector<8x32xf32>
    %134 = math.tanh %127 : vector<8x32xf32>
    %135 = arith.mulf %133, %134 : vector<8x32xf32>
    %136 = vector.extract_strided_slice %118 {offsets = [0, 192], sizes = [8, 32], strides = [1, 1]} : vector<8x256xf32> to vector<8x32xf32>
    %137 = math.tanh %132 : vector<8x32xf32>
    %138 = arith.mulf %136, %137 : vector<8x32xf32>
    %139 = arith.index_cast %106 : i32 to index
    %c0_38 = arith.constant 0 : index
    %140 = vector.load %arg13[%139, %c0_38] : memref<64x64xf32, #tpu.memory_space<vmem>>, vector<8x32xf32>
    tpu.vector_store %arg13[%139, %c0_38], %135 {strides = array<i32>} : memref<64x64xf32, #tpu.memory_space<vmem>>, vector<8x32xf32>,
    %141 = arith.index_cast %108 : i32 to index
    %c32_39 = arith.constant 32 : index
    %142 = vector.load %arg13[%141, %c32_39] : memref<64x64xf32, #tpu.memory_space<vmem>>, vector<8x32xf32>
    tpu.vector_store %arg13[%141, %c32_39], %138 {strides = array<i32>} : memref<64x64xf32, #tpu.memory_space<vmem>>, vector<8x32xf32>,
    %c3_i32 = arith.constant 3 : i32
    %c7_i32_40 = arith.constant 7 : i32
    %143 = arith.subi %c7_i32_40, %c3_i32 : i32
    %c8_i32_41 = arith.constant 8 : i32
    %144 = arith.muli %c3_i32, %c8_i32_41 : i32
    %145 = tpu.assume_multiple %144, 8 : i32
    %c8_i32_42 = arith.constant 8 : i32
    %146 = arith.muli %143, %c8_i32_42 : i32
    %147 = tpu.assume_multiple %146, 8 : i32
    %148 = tpu.concatenate %135, %138 in 1 : vector<8x32xf32>, vector<8x32xf32> -> vector<8x64xf32>
    %149 = arith.index_cast %145 : i32 to index
    %c0_43 = arith.constant 0 : index
    %150 = vector.load %arg12[%149, %c0_43] : memref<64x256xf32, #tpu.memory_space<vmem>>, vector<8x256xf32>
    %cst_44 = arith.constant dense<0.000000e+00> : vector<8x256xf32>
    %151 = tpu.matmul %148, %24, %cst_44 {dimension_numbers = #tpu.dot_dimension_numbers<[1], [0], [0], [1], [0, 0, 1, 1], [], []>} : vector<8x64xf32>, vector<64x256xf32>, vector<8x256xf32> -> vector<8x256xf32>
    %152 = arith.addf %150, %151 : vector<8x256xf32>
    %153 = arith.negf %152 : vector<8x256xf32>
    %154 = math.exp %153 : vector<8x256xf32>
    %cst_45 = arith.constant 1.000000e+00 : f32
    %155 = vector.broadcast %cst_45 : f32 to vector<8x256xf32>
    %156 = arith.addf %155, %154 : vector<8x256xf32>
    %157 = arith.divf %155, %156 : vector<8x256xf32>
    %158 = vector.extract_strided_slice %152 {offsets = [0, 96], sizes = [8, 32], strides = [1, 1]} : vector<8x256xf32> to vector<8x32xf32>
    %159 = math.tanh %158 : vector<8x32xf32>
    %160 = vector.extract_strided_slice %152 {offsets = [0, 224], sizes = [8, 32], strides = [1, 1]} : vector<8x256xf32> to vector<8x32xf32>
    %161 = math.tanh %160 : vector<8x32xf32>
    %162 = vector.extract_strided_slice %157 {offsets = [0, 32], sizes = [8, 32], strides = [1, 1]} : vector<8x256xf32> to vector<8x32xf32>
    %163 = arith.mulf %162, %127 : vector<8x32xf32>
    %164 = vector.extract_strided_slice %157 {offsets = [0, 0], sizes = [8, 32], strides = [1, 1]} : vector<8x256xf32> to vector<8x32xf32>
    %165 = arith.mulf %164, %159 : vector<8x32xf32>
    %166 = arith.addf %163, %165 : vector<8x32xf32>
    %167 = vector.extract_strided_slice %157 {offsets = [0, 160], sizes = [8, 32], strides = [1, 1]} : vector<8x256xf32> to vector<8x32xf32>
    %168 = arith.mulf %167, %132 : vector<8x32xf32>
    %169 = vector.extract_strided_slice %157 {offsets = [0, 128], sizes = [8, 32], strides = [1, 1]} : vector<8x256xf32> to vector<8x32xf32>
    %170 = arith.mulf %169, %161 : vector<8x32xf32>
    %171 = arith.addf %168, %170 : vector<8x32xf32>
    %172 = vector.extract_strided_slice %157 {offsets = [0, 64], sizes = [8, 32], strides = [1, 1]} : vector<8x256xf32> to vector<8x32xf32>
    %173 = math.tanh %166 : vector<8x32xf32>
    %174 = arith.mulf %172, %173 : vector<8x32xf32>
    %175 = vector.extract_strided_slice %157 {offsets = [0, 192], sizes = [8, 32], strides = [1, 1]} : vector<8x256xf32> to vector<8x32xf32>
    %176 = math.tanh %171 : vector<8x32xf32>
    %177 = arith.mulf %175, %176 : vector<8x32xf32>
    %178 = arith.index_cast %145 : i32 to index
    %c0_46 = arith.constant 0 : index
    %179 = vector.load %arg13[%178, %c0_46] : memref<64x64xf32, #tpu.memory_space<vmem>>, vector<8x32xf32>
    tpu.vector_store %arg13[%178, %c0_46], %174 {strides = array<i32>} : memref<64x64xf32, #tpu.memory_space<vmem>>, vector<8x32xf32>,
    %180 = arith.index_cast %147 : i32 to index
    %c32_47 = arith.constant 32 : index
    %181 = vector.load %arg13[%180, %c32_47] : memref<64x64xf32, #tpu.memory_space<vmem>>, vector<8x32xf32>
    tpu.vector_store %arg13[%180, %c32_47], %177 {strides = array<i32>} : memref<64x64xf32, #tpu.memory_space<vmem>>, vector<8x32xf32>,
    %c4_i32 = arith.constant 4 : i32
    %c7_i32_48 = arith.constant 7 : i32
    %182 = arith.subi %c7_i32_48, %c4_i32 : i32
    %c8_i32_49 = arith.constant 8 : i32
    %183 = arith.muli %c4_i32, %c8_i32_49 : i32
    %184 = tpu.assume_multiple %183, 8 : i32
    %c8_i32_50 = arith.constant 8 : i32
    %185 = arith.muli %182, %c8_i32_50 : i32
    %186 = tpu.assume_multiple %185, 8 : i32
    %187 = tpu.concatenate %174, %177 in 1 : vector<8x32xf32>, vector<8x32xf32> -> vector<8x64xf32>
    %188 = arith.index_cast %184 : i32 to index
    %c0_51 = arith.constant 0 : index
    %189 = vector.load %arg12[%188, %c0_51] : memref<64x256xf32, #tpu.memory_space<vmem>>, vector<8x256xf32>
    %cst_52 = arith.constant dense<0.000000e+00> : vector<8x256xf32>
    %190 = tpu.matmul %187, %24, %cst_52 {dimension_numbers = #tpu.dot_dimension_numbers<[1], [0], [0], [1], [0, 0, 1, 1], [], []>} : vector<8x64xf32>, vector<64x256xf32>, vector<8x256xf32> -> vector<8x256xf32>
    %191 = arith.addf %189, %190 : vector<8x256xf32>
    %192 = arith.negf %191 : vector<8x256xf32>
    %193 = math.exp %192 : vector<8x256xf32>
    %cst_53 = arith.constant 1.000000e+00 : f32
    %194 = vector.broadcast %cst_53 : f32 to vector<8x256xf32>
    %195 = arith.addf %194, %193 : vector<8x256xf32>
    %196 = arith.divf %194, %195 : vector<8x256xf32>
    %197 = vector.extract_strided_slice %191 {offsets = [0, 96], sizes = [8, 32], strides = [1, 1]} : vector<8x256xf32> to vector<8x32xf32>
    %198 = math.tanh %197 : vector<8x32xf32>
    %199 = vector.extract_strided_slice %191 {offsets = [0, 224], sizes = [8, 32], strides = [1, 1]} : vector<8x256xf32> to vector<8x32xf32>
    %200 = math.tanh %199 : vector<8x32xf32>
    %201 = vector.extract_strided_slice %196 {offsets = [0, 32], sizes = [8, 32], strides = [1, 1]} : vector<8x256xf32> to vector<8x32xf32>
    %202 = arith.mulf %201, %166 : vector<8x32xf32>
    %203 = vector.extract_strided_slice %196 {offsets = [0, 0], sizes = [8, 32], strides = [1, 1]} : vector<8x256xf32> to vector<8x32xf32>
    %204 = arith.mulf %203, %198 : vector<8x32xf32>
    %205 = arith.addf %202, %204 : vector<8x32xf32>
    %206 = vector.extract_strided_slice %196 {offsets = [0, 160], sizes = [8, 32], strides = [1, 1]} : vector<8x256xf32> to vector<8x32xf32>
    %207 = arith.mulf %206, %171 : vector<8x32xf32>
    %208 = vector.extract_strided_slice %196 {offsets = [0, 128], sizes = [8, 32], strides = [1, 1]} : vector<8x256xf32> to vector<8x32xf32>
    %209 = arith.mulf %208, %200 : vector<8x32xf32>
    %210 = arith.addf %207, %209 : vector<8x32xf32>
    %211 = vector.extract_strided_slice %196 {offsets = [0, 64], sizes = [8, 32], strides = [1, 1]} : vector<8x256xf32> to vector<8x32xf32>
    %212 = math.tanh %205 : vector<8x32xf32>
    %213 = arith.mulf %211, %212 : vector<8x32xf32>
    %214 = vector.extract_strided_slice %196 {offsets = [0, 192], sizes = [8, 32], strides = [1, 1]} : vector<8x256xf32> to vector<8x32xf32>
    %215 = math.tanh %210 : vector<8x32xf32>
    %216 = arith.mulf %214, %215 : vector<8x32xf32>
    %217 = arith.index_cast %184 : i32 to index
    %c0_54 = arith.constant 0 : index
    %218 = vector.load %arg13[%217, %c0_54] : memref<64x64xf32, #tpu.memory_space<vmem>>, vector<8x32xf32>
    tpu.vector_store %arg13[%217, %c0_54], %213 {strides = array<i32>} : memref<64x64xf32, #tpu.memory_space<vmem>>, vector<8x32xf32>,
    %219 = arith.index_cast %186 : i32 to index
    %c32_55 = arith.constant 32 : index
    %220 = vector.load %arg13[%219, %c32_55] : memref<64x64xf32, #tpu.memory_space<vmem>>, vector<8x32xf32>
    tpu.vector_store %arg13[%219, %c32_55], %216 {strides = array<i32>} : memref<64x64xf32, #tpu.memory_space<vmem>>, vector<8x32xf32>,
    %c5_i32 = arith.constant 5 : i32
    %c7_i32_56 = arith.constant 7 : i32
    %221 = arith.subi %c7_i32_56, %c5_i32 : i32
    %c8_i32_57 = arith.constant 8 : i32
    %222 = arith.muli %c5_i32, %c8_i32_57 : i32
    %223 = tpu.assume_multiple %222, 8 : i32
    %c8_i32_58 = arith.constant 8 : i32
    %224 = arith.muli %221, %c8_i32_58 : i32
    %225 = tpu.assume_multiple %224, 8 : i32
    %226 = tpu.concatenate %213, %216 in 1 : vector<8x32xf32>, vector<8x32xf32> -> vector<8x64xf32>
    %227 = arith.index_cast %223 : i32 to index
    %c0_59 = arith.constant 0 : index
    %228 = vector.load %arg12[%227, %c0_59] : memref<64x256xf32, #tpu.memory_space<vmem>>, vector<8x256xf32>
    %cst_60 = arith.constant dense<0.000000e+00> : vector<8x256xf32>
    %229 = tpu.matmul %226, %24, %cst_60 {dimension_numbers = #tpu.dot_dimension_numbers<[1], [0], [0], [1], [0, 0, 1, 1], [], []>} : vector<8x64xf32>, vector<64x256xf32>, vector<8x256xf32> -> vector<8x256xf32>
    %230 = arith.addf %228, %229 : vector<8x256xf32>
    %231 = arith.negf %230 : vector<8x256xf32>
    %232 = math.exp %231 : vector<8x256xf32>
    %cst_61 = arith.constant 1.000000e+00 : f32
    %233 = vector.broadcast %cst_61 : f32 to vector<8x256xf32>
    %234 = arith.addf %233, %232 : vector<8x256xf32>
    %235 = arith.divf %233, %234 : vector<8x256xf32>
    %236 = vector.extract_strided_slice %230 {offsets = [0, 96], sizes = [8, 32], strides = [1, 1]} : vector<8x256xf32> to vector<8x32xf32>
    %237 = math.tanh %236 : vector<8x32xf32>
    %238 = vector.extract_strided_slice %230 {offsets = [0, 224], sizes = [8, 32], strides = [1, 1]} : vector<8x256xf32> to vector<8x32xf32>
    %239 = math.tanh %238 : vector<8x32xf32>
    %240 = vector.extract_strided_slice %235 {offsets = [0, 32], sizes = [8, 32], strides = [1, 1]} : vector<8x256xf32> to vector<8x32xf32>
    %241 = arith.mulf %240, %205 : vector<8x32xf32>
    %242 = vector.extract_strided_slice %235 {offsets = [0, 0], sizes = [8, 32], strides = [1, 1]} : vector<8x256xf32> to vector<8x32xf32>
    %243 = arith.mulf %242, %237 : vector<8x32xf32>
    %244 = arith.addf %241, %243 : vector<8x32xf32>
    %245 = vector.extract_strided_slice %235 {offsets = [0, 160], sizes = [8, 32], strides = [1, 1]} : vector<8x256xf32> to vector<8x32xf32>
    %246 = arith.mulf %245, %210 : vector<8x32xf32>
    %247 = vector.extract_strided_slice %235 {offsets = [0, 128], sizes = [8, 32], strides = [1, 1]} : vector<8x256xf32> to vector<8x32xf32>
    %248 = arith.mulf %247, %239 : vector<8x32xf32>
    %249 = arith.addf %246, %248 : vector<8x32xf32>
    %250 = vector.extract_strided_slice %235 {offsets = [0, 64], sizes = [8, 32], strides = [1, 1]} : vector<8x256xf32> to vector<8x32xf32>
    %251 = math.tanh %244 : vector<8x32xf32>
    %252 = arith.mulf %250, %251 : vector<8x32xf32>
    %253 = vector.extract_strided_slice %235 {offsets = [0, 192], sizes = [8, 32], strides = [1, 1]} : vector<8x256xf32> to vector<8x32xf32>
    %254 = math.tanh %249 : vector<8x32xf32>
    %255 = arith.mulf %253, %254 : vector<8x32xf32>
    %256 = arith.index_cast %223 : i32 to index
    %c0_62 = arith.constant 0 : index
    %257 = vector.load %arg13[%256, %c0_62] : memref<64x64xf32, #tpu.memory_space<vmem>>, vector<8x32xf32>
    tpu.vector_store %arg13[%256, %c0_62], %252 {strides = array<i32>} : memref<64x64xf32, #tpu.memory_space<vmem>>, vector<8x32xf32>,
    %258 = arith.index_cast %225 : i32 to index
    %c32_63 = arith.constant 32 : index
    %259 = vector.load %arg13[%258, %c32_63] : memref<64x64xf32, #tpu.memory_space<vmem>>, vector<8x32xf32>
    tpu.vector_store %arg13[%258, %c32_63], %255 {strides = array<i32>} : memref<64x64xf32, #tpu.memory_space<vmem>>, vector<8x32xf32>,
    %c6_i32 = arith.constant 6 : i32
    %c7_i32_64 = arith.constant 7 : i32
    %260 = arith.subi %c7_i32_64, %c6_i32 : i32
    %c8_i32_65 = arith.constant 8 : i32
    %261 = arith.muli %c6_i32, %c8_i32_65 : i32
    %262 = tpu.assume_multiple %261, 8 : i32
    %c8_i32_66 = arith.constant 8 : i32
    %263 = arith.muli %260, %c8_i32_66 : i32
    %264 = tpu.assume_multiple %263, 8 : i32
    %265 = tpu.concatenate %252, %255 in 1 : vector<8x32xf32>, vector<8x32xf32> -> vector<8x64xf32>
    %266 = arith.index_cast %262 : i32 to index
    %c0_67 = arith.constant 0 : index
    %267 = vector.load %arg12[%266, %c0_67] : memref<64x256xf32, #tpu.memory_space<vmem>>, vector<8x256xf32>
    %cst_68 = arith.constant dense<0.000000e+00> : vector<8x256xf32>
    %268 = tpu.matmul %265, %24, %cst_68 {dimension_numbers = #tpu.dot_dimension_numbers<[1], [0], [0], [1], [0, 0, 1, 1], [], []>} : vector<8x64xf32>, vector<64x256xf32>, vector<8x256xf32> -> vector<8x256xf32>
    %269 = arith.addf %267, %268 : vector<8x256xf32>
    %270 = arith.negf %269 : vector<8x256xf32>
    %271 = math.exp %270 : vector<8x256xf32>
    %cst_69 = arith.constant 1.000000e+00 : f32
    %272 = vector.broadcast %cst_69 : f32 to vector<8x256xf32>
    %273 = arith.addf %272, %271 : vector<8x256xf32>
    %274 = arith.divf %272, %273 : vector<8x256xf32>
    %275 = vector.extract_strided_slice %269 {offsets = [0, 96], sizes = [8, 32], strides = [1, 1]} : vector<8x256xf32> to vector<8x32xf32>
    %276 = math.tanh %275 : vector<8x32xf32>
    %277 = vector.extract_strided_slice %269 {offsets = [0, 224], sizes = [8, 32], strides = [1, 1]} : vector<8x256xf32> to vector<8x32xf32>
    %278 = math.tanh %277 : vector<8x32xf32>
    %279 = vector.extract_strided_slice %274 {offsets = [0, 32], sizes = [8, 32], strides = [1, 1]} : vector<8x256xf32> to vector<8x32xf32>
    %280 = arith.mulf %279, %244 : vector<8x32xf32>
    %281 = vector.extract_strided_slice %274 {offsets = [0, 0], sizes = [8, 32], strides = [1, 1]} : vector<8x256xf32> to vector<8x32xf32>
    %282 = arith.mulf %281, %276 : vector<8x32xf32>
    %283 = arith.addf %280, %282 : vector<8x32xf32>
    %284 = vector.extract_strided_slice %274 {offsets = [0, 160], sizes = [8, 32], strides = [1, 1]} : vector<8x256xf32> to vector<8x32xf32>
    %285 = arith.mulf %284, %249 : vector<8x32xf32>
    %286 = vector.extract_strided_slice %274 {offsets = [0, 128], sizes = [8, 32], strides = [1, 1]} : vector<8x256xf32> to vector<8x32xf32>
    %287 = arith.mulf %286, %278 : vector<8x32xf32>
    %288 = arith.addf %285, %287 : vector<8x32xf32>
    %289 = vector.extract_strided_slice %274 {offsets = [0, 64], sizes = [8, 32], strides = [1, 1]} : vector<8x256xf32> to vector<8x32xf32>
    %290 = math.tanh %283 : vector<8x32xf32>
    %291 = arith.mulf %289, %290 : vector<8x32xf32>
    %292 = vector.extract_strided_slice %274 {offsets = [0, 192], sizes = [8, 32], strides = [1, 1]} : vector<8x256xf32> to vector<8x32xf32>
    %293 = math.tanh %288 : vector<8x32xf32>
    %294 = arith.mulf %292, %293 : vector<8x32xf32>
    %295 = arith.index_cast %262 : i32 to index
    %c0_70 = arith.constant 0 : index
    %296 = vector.load %arg13[%295, %c0_70] : memref<64x64xf32, #tpu.memory_space<vmem>>, vector<8x32xf32>
    tpu.vector_store %arg13[%295, %c0_70], %291 {strides = array<i32>} : memref<64x64xf32, #tpu.memory_space<vmem>>, vector<8x32xf32>,
    %297 = arith.index_cast %264 : i32 to index
    %c32_71 = arith.constant 32 : index
    %298 = vector.load %arg13[%297, %c32_71] : memref<64x64xf32, #tpu.memory_space<vmem>>, vector<8x32xf32>
    tpu.vector_store %arg13[%297, %c32_71], %294 {strides = array<i32>} : memref<64x64xf32, #tpu.memory_space<vmem>>, vector<8x32xf32>,
    %c7_i32_72 = arith.constant 7 : i32
    %c7_i32_73 = arith.constant 7 : i32
    %299 = arith.subi %c7_i32_73, %c7_i32_72 : i32
    %c8_i32_74 = arith.constant 8 : i32
    %300 = arith.muli %c7_i32_72, %c8_i32_74 : i32
    %301 = tpu.assume_multiple %300, 8 : i32
    %c8_i32_75 = arith.constant 8 : i32
    %302 = arith.muli %299, %c8_i32_75 : i32
    %303 = tpu.assume_multiple %302, 8 : i32
    %304 = tpu.concatenate %291, %294 in 1 : vector<8x32xf32>, vector<8x32xf32> -> vector<8x64xf32>
    %305 = arith.index_cast %301 : i32 to index
    %c0_76 = arith.constant 0 : index
    %306 = vector.load %arg12[%305, %c0_76] : memref<64x256xf32, #tpu.memory_space<vmem>>, vector<8x256xf32>
    %cst_77 = arith.constant dense<0.000000e+00> : vector<8x256xf32>
    %307 = tpu.matmul %304, %24, %cst_77 {dimension_numbers = #tpu.dot_dimension_numbers<[1], [0], [0], [1], [0, 0, 1, 1], [], []>} : vector<8x64xf32>, vector<64x256xf32>, vector<8x256xf32> -> vector<8x256xf32>
    %308 = arith.addf %306, %307 : vector<8x256xf32>
    %309 = arith.negf %308 : vector<8x256xf32>
    %310 = math.exp %309 : vector<8x256xf32>
    %cst_78 = arith.constant 1.000000e+00 : f32
    %311 = vector.broadcast %cst_78 : f32 to vector<8x256xf32>
    %312 = arith.addf %311, %310 : vector<8x256xf32>
    %313 = arith.divf %311, %312 : vector<8x256xf32>
    %314 = vector.extract_strided_slice %308 {offsets = [0, 96], sizes = [8, 32], strides = [1, 1]} : vector<8x256xf32> to vector<8x32xf32>
    %315 = math.tanh %314 : vector<8x32xf32>
    %316 = vector.extract_strided_slice %308 {offsets = [0, 224], sizes = [8, 32], strides = [1, 1]} : vector<8x256xf32> to vector<8x32xf32>
    %317 = math.tanh %316 : vector<8x32xf32>
    %318 = vector.extract_strided_slice %313 {offsets = [0, 32], sizes = [8, 32], strides = [1, 1]} : vector<8x256xf32> to vector<8x32xf32>
    %319 = arith.mulf %318, %283 : vector<8x32xf32>
    %320 = vector.extract_strided_slice %313 {offsets = [0, 0], sizes = [8, 32], strides = [1, 1]} : vector<8x256xf32> to vector<8x32xf32>
    %321 = arith.mulf %320, %315 : vector<8x32xf32>
    %322 = arith.addf %319, %321 : vector<8x32xf32>
    %323 = vector.extract_strided_slice %313 {offsets = [0, 160], sizes = [8, 32], strides = [1, 1]} : vector<8x256xf32> to vector<8x32xf32>
    %324 = arith.mulf %323, %288 : vector<8x32xf32>
    %325 = vector.extract_strided_slice %313 {offsets = [0, 128], sizes = [8, 32], strides = [1, 1]} : vector<8x256xf32> to vector<8x32xf32>
    %326 = arith.mulf %325, %317 : vector<8x32xf32>
    %327 = arith.addf %324, %326 : vector<8x32xf32>
    %328 = vector.extract_strided_slice %313 {offsets = [0, 64], sizes = [8, 32], strides = [1, 1]} : vector<8x256xf32> to vector<8x32xf32>
    %329 = math.tanh %322 : vector<8x32xf32>
    %330 = arith.mulf %328, %329 : vector<8x32xf32>
    %331 = vector.extract_strided_slice %313 {offsets = [0, 192], sizes = [8, 32], strides = [1, 1]} : vector<8x256xf32> to vector<8x32xf32>
    %332 = math.tanh %327 : vector<8x32xf32>
    %333 = arith.mulf %331, %332 : vector<8x32xf32>
    %334 = arith.index_cast %301 : i32 to index
    %c0_79 = arith.constant 0 : index
    %335 = vector.load %arg13[%334, %c0_79] : memref<64x64xf32, #tpu.memory_space<vmem>>, vector<8x32xf32>
    tpu.vector_store %arg13[%334, %c0_79], %330 {strides = array<i32>} : memref<64x64xf32, #tpu.memory_space<vmem>>, vector<8x32xf32>,
    %336 = arith.index_cast %303 : i32 to index
    %c32_80 = arith.constant 32 : index
    %337 = vector.load %arg13[%336, %c32_80] : memref<64x64xf32, #tpu.memory_space<vmem>>, vector<8x32xf32>
    tpu.vector_store %arg13[%336, %c32_80], %333 {strides = array<i32>} : memref<64x64xf32, #tpu.memory_space<vmem>>, vector<8x32xf32>,
    %c8_i32_81 = arith.constant 8 : i32
    %c0_82 = arith.constant 0 : index
    %c0_83 = arith.constant 0 : index
    %c0_84 = arith.constant 0 : index
    %338 = vector.load %arg10[%c0_82, %c0_83, %c0_84] : memref<4x8x32xf32, #tpu.memory_space<vmem>>, vector<1x8x32xf32>
    %339 = vector.shape_cast %338 : vector<1x8x32xf32> to vector<8x32xf32>
    %340 = vector.shape_cast %330 : vector<8x32xf32> to vector<1x8x32xf32>
    tpu.vector_store %arg10[%c0_82, %c0_83, %c0_84], %340 {strides = array<i32>} : memref<4x8x32xf32, #tpu.memory_space<vmem>>, vector<1x8x32xf32>,
    %c1 = arith.constant 1 : index
    %c0_85 = arith.constant 0 : index
    %c0_86 = arith.constant 0 : index
    %341 = vector.load %arg10[%c1, %c0_85, %c0_86] : memref<4x8x32xf32, #tpu.memory_space<vmem>>, vector<1x8x32xf32>
    %342 = vector.shape_cast %341 : vector<1x8x32xf32> to vector<8x32xf32>
    %343 = vector.shape_cast %333 : vector<8x32xf32> to vector<1x8x32xf32>
    tpu.vector_store %arg10[%c1, %c0_85, %c0_86], %343 {strides = array<i32>} : memref<4x8x32xf32, #tpu.memory_space<vmem>>, vector<1x8x32xf32>,
    %c0_87 = arith.constant 0 : index
    %c0_88 = arith.constant 0 : index
    %c0_89 = arith.constant 0 : index
    %344 = vector.load %arg11[%c0_87, %c0_88, %c0_89] : memref<4x8x32xf32, #tpu.memory_space<vmem>>, vector<1x8x32xf32>
    %345 = vector.shape_cast %344 : vector<1x8x32xf32> to vector<8x32xf32>
    %346 = vector.shape_cast %322 : vector<8x32xf32> to vector<1x8x32xf32>
    tpu.vector_store %arg11[%c0_87, %c0_88, %c0_89], %346 {strides = array<i32>} : memref<4x8x32xf32, #tpu.memory_space<vmem>>, vector<1x8x32xf32>,
    %c1_90 = arith.constant 1 : index
    %c0_91 = arith.constant 0 : index
    %c0_92 = arith.constant 0 : index
    %347 = vector.load %arg11[%c1_90, %c0_91, %c0_92] : memref<4x8x32xf32, #tpu.memory_space<vmem>>, vector<1x8x32xf32>
    %348 = vector.shape_cast %347 : vector<1x8x32xf32> to vector<8x32xf32>
    %349 = vector.shape_cast %327 : vector<8x32xf32> to vector<1x8x32xf32>
    tpu.vector_store %arg11[%c1_90, %c0_91, %c0_92], %349 {strides = array<i32>} : memref<4x8x32xf32, #tpu.memory_space<vmem>>, vector<1x8x32xf32>,
    %c0_93 = arith.constant 0 : index
    %c0_94 = arith.constant 0 : index
    %350 = vector.load %arg13[%c0_93, %c0_94] : memref<64x64xf32, #tpu.memory_space<vmem>>, vector<64x64xf32>
    %c0_95 = arith.constant 0 : index
    %c0_96 = arith.constant 0 : index
    %351 = vector.load %arg4[%c0_95, %c0_96] : memref<64x256xf32, #tpu.memory_space<vmem>>, vector<64x256xf32>
    %cst_97 = arith.constant dense<0.000000e+00> : vector<64x256xf32>
    %352 = tpu.matmul %350, %351, %cst_97 {dimension_numbers = #tpu.dot_dimension_numbers<[1], [0], [0], [1], [0, 0, 1, 1], [], []>} : vector<64x64xf32>, vector<64x256xf32>, vector<64x256xf32> -> vector<64x256xf32>
    %c0_98 = arith.constant 0 : index
    %c0_99 = arith.constant 0 : index
    %353 = vector.load %arg6[%c0_98, %c0_99] : memref<1x256xf32, #tpu.memory_space<vmem>>, vector<1x256xf32>
    %354 = vector.broadcast %353 : vector<1x256xf32> to vector<64x256xf32>
    %355 = arith.addf %352, %354 : vector<64x256xf32>
    %356 = vector.extract_strided_slice %355 {offsets = [0, 0], sizes = [64, 128], strides = [1, 1]} : vector<64x256xf32> to vector<64x128xf32>
    %c0_100 = arith.constant 0 : index
    %c0_101 = arith.constant 0 : index
    %357 = vector.load %arg12[%c0_100, %c0_101] : memref<64x256xf32, #tpu.memory_space<vmem>>, vector<64x128xf32>
    tpu.vector_store %arg12[%c0_100, %c0_101], %356 {strides = array<i32>} : memref<64x256xf32, #tpu.memory_space<vmem>>, vector<64x128xf32>,
    %358 = vector.extract_strided_slice %355 {offsets = [56, 128], sizes = [8, 128], strides = [1, 1]} : vector<64x256xf32> to vector<8x128xf32>
    %c0_102 = arith.constant 0 : index
    %c128_103 = arith.constant 128 : index
    %359 = vector.load %arg12[%c0_102, %c128_103] : memref<64x256xf32, #tpu.memory_space<vmem>>, vector<8x128xf32>
    tpu.vector_store %arg12[%c0_102, %c128_103], %358 {strides = array<i32>} : memref<64x256xf32, #tpu.memory_space<vmem>>, vector<8x128xf32>,
    %360 = vector.extract_strided_slice %355 {offsets = [48, 128], sizes = [8, 128], strides = [1, 1]} : vector<64x256xf32> to vector<8x128xf32>
    %c8_104 = arith.constant 8 : index
    %c128_105 = arith.constant 128 : index
    %361 = vector.load %arg12[%c8_104, %c128_105] : memref<64x256xf32, #tpu.memory_space<vmem>>, vector<8x128xf32>
    tpu.vector_store %arg12[%c8_104, %c128_105], %360 {strides = array<i32>} : memref<64x256xf32, #tpu.memory_space<vmem>>, vector<8x128xf32>,
    %362 = vector.extract_strided_slice %355 {offsets = [40, 128], sizes = [8, 128], strides = [1, 1]} : vector<64x256xf32> to vector<8x128xf32>
    %c16_106 = arith.constant 16 : index
    %c128_107 = arith.constant 128 : index
    %363 = vector.load %arg12[%c16_106, %c128_107] : memref<64x256xf32, #tpu.memory_space<vmem>>, vector<8x128xf32>
    tpu.vector_store %arg12[%c16_106, %c128_107], %362 {strides = array<i32>} : memref<64x256xf32, #tpu.memory_space<vmem>>, vector<8x128xf32>,
    %364 = vector.extract_strided_slice %355 {offsets = [32, 128], sizes = [8, 128], strides = [1, 1]} : vector<64x256xf32> to vector<8x128xf32>
    %c24_108 = arith.constant 24 : index
    %c128_109 = arith.constant 128 : index
    %365 = vector.load %arg12[%c24_108, %c128_109] : memref<64x256xf32, #tpu.memory_space<vmem>>, vector<8x128xf32>
    tpu.vector_store %arg12[%c24_108, %c128_109], %364 {strides = array<i32>} : memref<64x256xf32, #tpu.memory_space<vmem>>, vector<8x128xf32>,
    %366 = vector.extract_strided_slice %355 {offsets = [24, 128], sizes = [8, 128], strides = [1, 1]} : vector<64x256xf32> to vector<8x128xf32>
    %c32_110 = arith.constant 32 : index
    %c128_111 = arith.constant 128 : index
    %367 = vector.load %arg12[%c32_110, %c128_111] : memref<64x256xf32, #tpu.memory_space<vmem>>, vector<8x128xf32>
    tpu.vector_store %arg12[%c32_110, %c128_111], %366 {strides = array<i32>} : memref<64x256xf32, #tpu.memory_space<vmem>>, vector<8x128xf32>,
    %368 = vector.extract_strided_slice %355 {offsets = [16, 128], sizes = [8, 128], strides = [1, 1]} : vector<64x256xf32> to vector<8x128xf32>
    %c40_112 = arith.constant 40 : index
    %c128_113 = arith.constant 128 : index
    %369 = vector.load %arg12[%c40_112, %c128_113] : memref<64x256xf32, #tpu.memory_space<vmem>>, vector<8x128xf32>
    tpu.vector_store %arg12[%c40_112, %c128_113], %368 {strides = array<i32>} : memref<64x256xf32, #tpu.memory_space<vmem>>, vector<8x128xf32>,
    %370 = vector.extract_strided_slice %355 {offsets = [8, 128], sizes = [8, 128], strides = [1, 1]} : vector<64x256xf32> to vector<8x128xf32>
    %c48_114 = arith.constant 48 : index
    %c128_115 = arith.constant 128 : index
    %371 = vector.load %arg12[%c48_114, %c128_115] : memref<64x256xf32, #tpu.memory_space<vmem>>, vector<8x128xf32>
    tpu.vector_store %arg12[%c48_114, %c128_115], %370 {strides = array<i32>} : memref<64x256xf32, #tpu.memory_space<vmem>>, vector<8x128xf32>,
    %372 = vector.extract_strided_slice %355 {offsets = [0, 128], sizes = [8, 128], strides = [1, 1]} : vector<64x256xf32> to vector<8x128xf32>
    %c56_116 = arith.constant 56 : index
    %c128_117 = arith.constant 128 : index
    %373 = vector.load %arg12[%c56_116, %c128_117] : memref<64x256xf32, #tpu.memory_space<vmem>>, vector<8x128xf32>
    tpu.vector_store %arg12[%c56_116, %c128_117], %372 {strides = array<i32>} : memref<64x256xf32, #tpu.memory_space<vmem>>, vector<8x128xf32>,
    %c0_118 = arith.constant 0 : index
    %c0_119 = arith.constant 0 : index
    %374 = vector.load %arg5[%c0_118, %c0_119] : memref<64x256xf32, #tpu.memory_space<vmem>>, vector<64x256xf32>
    %cst_120 = arith.constant 0.000000e+00 : f32
    %375 = vector.broadcast %cst_120 : f32 to vector<8x32xf32>
    %c0_i32_121 = arith.constant 0 : i32
    %c7_i32_122 = arith.constant 7 : i32
    %376 = arith.subi %c7_i32_122, %c0_i32_121 : i32
    %c8_i32_123 = arith.constant 8 : i32
    %377 = arith.muli %c0_i32_121, %c8_i32_123 : i32
    %378 = tpu.assume_multiple %377, 8 : i32
    %c8_i32_124 = arith.constant 8 : i32
    %379 = arith.muli %376, %c8_i32_124 : i32
    %380 = tpu.assume_multiple %379, 8 : i32
    %381 = tpu.concatenate %375, %375 in 1 : vector<8x32xf32>, vector<8x32xf32> -> vector<8x64xf32>
    %382 = arith.index_cast %378 : i32 to index
    %c0_125 = arith.constant 0 : index
    %383 = vector.load %arg12[%382, %c0_125] : memref<64x256xf32, #tpu.memory_space<vmem>>, vector<8x256xf32>
    %cst_126 = arith.constant dense<0.000000e+00> : vector<8x256xf32>
    %384 = tpu.matmul %381, %374, %cst_126 {dimension_numbers = #tpu.dot_dimension_numbers<[1], [0], [0], [1], [0, 0, 1, 1], [], []>} : vector<8x64xf32>, vector<64x256xf32>, vector<8x256xf32> -> vector<8x256xf32>
    %385 = arith.addf %383, %384 : vector<8x256xf32>
    %386 = arith.negf %385 : vector<8x256xf32>
    %387 = math.exp %386 : vector<8x256xf32>
    %cst_127 = arith.constant 1.000000e+00 : f32
    %388 = vector.broadcast %cst_127 : f32 to vector<8x256xf32>
    %389 = arith.addf %388, %387 : vector<8x256xf32>
    %390 = arith.divf %388, %389 : vector<8x256xf32>
    %391 = vector.extract_strided_slice %385 {offsets = [0, 96], sizes = [8, 32], strides = [1, 1]} : vector<8x256xf32> to vector<8x32xf32>
    %392 = math.tanh %391 : vector<8x32xf32>
    %393 = vector.extract_strided_slice %385 {offsets = [0, 224], sizes = [8, 32], strides = [1, 1]} : vector<8x256xf32> to vector<8x32xf32>
    %394 = math.tanh %393 : vector<8x32xf32>
    %395 = vector.extract_strided_slice %390 {offsets = [0, 32], sizes = [8, 32], strides = [1, 1]} : vector<8x256xf32> to vector<8x32xf32>
    %396 = arith.mulf %395, %375 : vector<8x32xf32>
    %397 = vector.extract_strided_slice %390 {offsets = [0, 0], sizes = [8, 32], strides = [1, 1]} : vector<8x256xf32> to vector<8x32xf32>
    %398 = arith.mulf %397, %392 : vector<8x32xf32>
    %399 = arith.addf %396, %398 : vector<8x32xf32>
    %400 = vector.extract_strided_slice %390 {offsets = [0, 160], sizes = [8, 32], strides = [1, 1]} : vector<8x256xf32> to vector<8x32xf32>
    %401 = arith.mulf %400, %375 : vector<8x32xf32>
    %402 = vector.extract_strided_slice %390 {offsets = [0, 128], sizes = [8, 32], strides = [1, 1]} : vector<8x256xf32> to vector<8x32xf32>
    %403 = arith.mulf %402, %394 : vector<8x32xf32>
    %404 = arith.addf %401, %403 : vector<8x32xf32>
    %405 = vector.extract_strided_slice %390 {offsets = [0, 64], sizes = [8, 32], strides = [1, 1]} : vector<8x256xf32> to vector<8x32xf32>
    %406 = math.tanh %399 : vector<8x32xf32>
    %407 = arith.mulf %405, %406 : vector<8x32xf32>
    %408 = vector.extract_strided_slice %390 {offsets = [0, 192], sizes = [8, 32], strides = [1, 1]} : vector<8x256xf32> to vector<8x32xf32>
    %409 = math.tanh %404 : vector<8x32xf32>
    %410 = arith.mulf %408, %409 : vector<8x32xf32>
    %411 = arith.index_cast %378 : i32 to index
    %c0_128 = arith.constant 0 : index
    %412 = vector.load %arg14[%411, %c0_128] : memref<64x64xf32, #tpu.memory_space<vmem>>, vector<8x32xf32>
    tpu.vector_store %arg14[%411, %c0_128], %407 {strides = array<i32>} : memref<64x64xf32, #tpu.memory_space<vmem>>, vector<8x32xf32>,
    %413 = arith.index_cast %380 : i32 to index
    %c32_129 = arith.constant 32 : index
    %414 = vector.load %arg14[%413, %c32_129] : memref<64x64xf32, #tpu.memory_space<vmem>>, vector<8x32xf32>
    tpu.vector_store %arg14[%413, %c32_129], %410 {strides = array<i32>} : memref<64x64xf32, #tpu.memory_space<vmem>>, vector<8x32xf32>,
    %c1_i32_130 = arith.constant 1 : i32
    %c7_i32_131 = arith.constant 7 : i32
    %415 = arith.subi %c7_i32_131, %c1_i32_130 : i32
    %c8_i32_132 = arith.constant 8 : i32
    %416 = arith.muli %c1_i32_130, %c8_i32_132 : i32
    %417 = tpu.assume_multiple %416, 8 : i32
    %c8_i32_133 = arith.constant 8 : i32
    %418 = arith.muli %415, %c8_i32_133 : i32
    %419 = tpu.assume_multiple %418, 8 : i32
    %420 = tpu.concatenate %407, %410 in 1 : vector<8x32xf32>, vector<8x32xf32> -> vector<8x64xf32>
    %421 = arith.index_cast %417 : i32 to index
    %c0_134 = arith.constant 0 : index
    %422 = vector.load %arg12[%421, %c0_134] : memref<64x256xf32, #tpu.memory_space<vmem>>, vector<8x256xf32>
    %cst_135 = arith.constant dense<0.000000e+00> : vector<8x256xf32>
    %423 = tpu.matmul %420, %374, %cst_135 {dimension_numbers = #tpu.dot_dimension_numbers<[1], [0], [0], [1], [0, 0, 1, 1], [], []>} : vector<8x64xf32>, vector<64x256xf32>, vector<8x256xf32> -> vector<8x256xf32>
    %424 = arith.addf %422, %423 : vector<8x256xf32>
    %425 = arith.negf %424 : vector<8x256xf32>
    %426 = math.exp %425 : vector<8x256xf32>
    %cst_136 = arith.constant 1.000000e+00 : f32
    %427 = vector.broadcast %cst_136 : f32 to vector<8x256xf32>
    %428 = arith.addf %427, %426 : vector<8x256xf32>
    %429 = arith.divf %427, %428 : vector<8x256xf32>
    %430 = vector.extract_strided_slice %424 {offsets = [0, 96], sizes = [8, 32], strides = [1, 1]} : vector<8x256xf32> to vector<8x32xf32>
    %431 = math.tanh %430 : vector<8x32xf32>
    %432 = vector.extract_strided_slice %424 {offsets = [0, 224], sizes = [8, 32], strides = [1, 1]} : vector<8x256xf32> to vector<8x32xf32>
    %433 = math.tanh %432 : vector<8x32xf32>
    %434 = vector.extract_strided_slice %429 {offsets = [0, 32], sizes = [8, 32], strides = [1, 1]} : vector<8x256xf32> to vector<8x32xf32>
    %435 = arith.mulf %434, %399 : vector<8x32xf32>
    %436 = vector.extract_strided_slice %429 {offsets = [0, 0], sizes = [8, 32], strides = [1, 1]} : vector<8x256xf32> to vector<8x32xf32>
    %437 = arith.mulf %436, %431 : vector<8x32xf32>
    %438 = arith.addf %435, %437 : vector<8x32xf32>
    %439 = vector.extract_strided_slice %429 {offsets = [0, 160], sizes = [8, 32], strides = [1, 1]} : vector<8x256xf32> to vector<8x32xf32>
    %440 = arith.mulf %439, %404 : vector<8x32xf32>
    %441 = vector.extract_strided_slice %429 {offsets = [0, 128], sizes = [8, 32], strides = [1, 1]} : vector<8x256xf32> to vector<8x32xf32>
    %442 = arith.mulf %441, %433 : vector<8x32xf32>
    %443 = arith.addf %440, %442 : vector<8x32xf32>
    %444 = vector.extract_strided_slice %429 {offsets = [0, 64], sizes = [8, 32], strides = [1, 1]} : vector<8x256xf32> to vector<8x32xf32>
    %445 = math.tanh %438 : vector<8x32xf32>
    %446 = arith.mulf %444, %445 : vector<8x32xf32>
    %447 = vector.extract_strided_slice %429 {offsets = [0, 192], sizes = [8, 32], strides = [1, 1]} : vector<8x256xf32> to vector<8x32xf32>
    %448 = math.tanh %443 : vector<8x32xf32>
    %449 = arith.mulf %447, %448 : vector<8x32xf32>
    %450 = arith.index_cast %417 : i32 to index
    %c0_137 = arith.constant 0 : index
    %451 = vector.load %arg14[%450, %c0_137] : memref<64x64xf32, #tpu.memory_space<vmem>>, vector<8x32xf32>
    tpu.vector_store %arg14[%450, %c0_137], %446 {strides = array<i32>} : memref<64x64xf32, #tpu.memory_space<vmem>>, vector<8x32xf32>,
    %452 = arith.index_cast %419 : i32 to index
    %c32_138 = arith.constant 32 : index
    %453 = vector.load %arg14[%452, %c32_138] : memref<64x64xf32, #tpu.memory_space<vmem>>, vector<8x32xf32>
    tpu.vector_store %arg14[%452, %c32_138], %449 {strides = array<i32>} : memref<64x64xf32, #tpu.memory_space<vmem>>, vector<8x32xf32>,
    %c2_i32_139 = arith.constant 2 : i32
    %c7_i32_140 = arith.constant 7 : i32
    %454 = arith.subi %c7_i32_140, %c2_i32_139 : i32
    %c8_i32_141 = arith.constant 8 : i32
    %455 = arith.muli %c2_i32_139, %c8_i32_141 : i32
    %456 = tpu.assume_multiple %455, 8 : i32
    %c8_i32_142 = arith.constant 8 : i32
    %457 = arith.muli %454, %c8_i32_142 : i32
    %458 = tpu.assume_multiple %457, 8 : i32
    %459 = tpu.concatenate %446, %449 in 1 : vector<8x32xf32>, vector<8x32xf32> -> vector<8x64xf32>
    %460 = arith.index_cast %456 : i32 to index
    %c0_143 = arith.constant 0 : index
    %461 = vector.load %arg12[%460, %c0_143] : memref<64x256xf32, #tpu.memory_space<vmem>>, vector<8x256xf32>
    %cst_144 = arith.constant dense<0.000000e+00> : vector<8x256xf32>
    %462 = tpu.matmul %459, %374, %cst_144 {dimension_numbers = #tpu.dot_dimension_numbers<[1], [0], [0], [1], [0, 0, 1, 1], [], []>} : vector<8x64xf32>, vector<64x256xf32>, vector<8x256xf32> -> vector<8x256xf32>
    %463 = arith.addf %461, %462 : vector<8x256xf32>
    %464 = arith.negf %463 : vector<8x256xf32>
    %465 = math.exp %464 : vector<8x256xf32>
    %cst_145 = arith.constant 1.000000e+00 : f32
    %466 = vector.broadcast %cst_145 : f32 to vector<8x256xf32>
    %467 = arith.addf %466, %465 : vector<8x256xf32>
    %468 = arith.divf %466, %467 : vector<8x256xf32>
    %469 = vector.extract_strided_slice %463 {offsets = [0, 96], sizes = [8, 32], strides = [1, 1]} : vector<8x256xf32> to vector<8x32xf32>
    %470 = math.tanh %469 : vector<8x32xf32>
    %471 = vector.extract_strided_slice %463 {offsets = [0, 224], sizes = [8, 32], strides = [1, 1]} : vector<8x256xf32> to vector<8x32xf32>
    %472 = math.tanh %471 : vector<8x32xf32>
    %473 = vector.extract_strided_slice %468 {offsets = [0, 32], sizes = [8, 32], strides = [1, 1]} : vector<8x256xf32> to vector<8x32xf32>
    %474 = arith.mulf %473, %438 : vector<8x32xf32>
    %475 = vector.extract_strided_slice %468 {offsets = [0, 0], sizes = [8, 32], strides = [1, 1]} : vector<8x256xf32> to vector<8x32xf32>
    %476 = arith.mulf %475, %470 : vector<8x32xf32>
    %477 = arith.addf %474, %476 : vector<8x32xf32>
    %478 = vector.extract_strided_slice %468 {offsets = [0, 160], sizes = [8, 32], strides = [1, 1]} : vector<8x256xf32> to vector<8x32xf32>
    %479 = arith.mulf %478, %443 : vector<8x32xf32>
    %480 = vector.extract_strided_slice %468 {offsets = [0, 128], sizes = [8, 32], strides = [1, 1]} : vector<8x256xf32> to vector<8x32xf32>
    %481 = arith.mulf %480, %472 : vector<8x32xf32>
    %482 = arith.addf %479, %481 : vector<8x32xf32>
    %483 = vector.extract_strided_slice %468 {offsets = [0, 64], sizes = [8, 32], strides = [1, 1]} : vector<8x256xf32> to vector<8x32xf32>
    %484 = math.tanh %477 : vector<8x32xf32>
    %485 = arith.mulf %483, %484 : vector<8x32xf32>
    %486 = vector.extract_strided_slice %468 {offsets = [0, 192], sizes = [8, 32], strides = [1, 1]} : vector<8x256xf32> to vector<8x32xf32>
    %487 = math.tanh %482 : vector<8x32xf32>
    %488 = arith.mulf %486, %487 : vector<8x32xf32>
    %489 = arith.index_cast %456 : i32 to index
    %c0_146 = arith.constant 0 : index
    %490 = vector.load %arg14[%489, %c0_146] : memref<64x64xf32, #tpu.memory_space<vmem>>, vector<8x32xf32>
    tpu.vector_store %arg14[%489, %c0_146], %485 {strides = array<i32>} : memref<64x64xf32, #tpu.memory_space<vmem>>, vector<8x32xf32>,
    %491 = arith.index_cast %458 : i32 to index
    %c32_147 = arith.constant 32 : index
    %492 = vector.load %arg14[%491, %c32_147] : memref<64x64xf32, #tpu.memory_space<vmem>>, vector<8x32xf32>
    tpu.vector_store %arg14[%491, %c32_147], %488 {strides = array<i32>} : memref<64x64xf32, #tpu.memory_space<vmem>>, vector<8x32xf32>,
    %c3_i32_148 = arith.constant 3 : i32
    %c7_i32_149 = arith.constant 7 : i32
    %493 = arith.subi %c7_i32_149, %c3_i32_148 : i32
    %c8_i32_150 = arith.constant 8 : i32
    %494 = arith.muli %c3_i32_148, %c8_i32_150 : i32
    %495 = tpu.assume_multiple %494, 8 : i32
    %c8_i32_151 = arith.constant 8 : i32
    %496 = arith.muli %493, %c8_i32_151 : i32
    %497 = tpu.assume_multiple %496, 8 : i32
    %498 = tpu.concatenate %485, %488 in 1 : vector<8x32xf32>, vector<8x32xf32> -> vector<8x64xf32>
    %499 = arith.index_cast %495 : i32 to index
    %c0_152 = arith.constant 0 : index
    %500 = vector.load %arg12[%499, %c0_152] : memref<64x256xf32, #tpu.memory_space<vmem>>, vector<8x256xf32>
    %cst_153 = arith.constant dense<0.000000e+00> : vector<8x256xf32>
    %501 = tpu.matmul %498, %374, %cst_153 {dimension_numbers = #tpu.dot_dimension_numbers<[1], [0], [0], [1], [0, 0, 1, 1], [], []>} : vector<8x64xf32>, vector<64x256xf32>, vector<8x256xf32> -> vector<8x256xf32>
    %502 = arith.addf %500, %501 : vector<8x256xf32>
    %503 = arith.negf %502 : vector<8x256xf32>
    %504 = math.exp %503 : vector<8x256xf32>
    %cst_154 = arith.constant 1.000000e+00 : f32
    %505 = vector.broadcast %cst_154 : f32 to vector<8x256xf32>
    %506 = arith.addf %505, %504 : vector<8x256xf32>
    %507 = arith.divf %505, %506 : vector<8x256xf32>
    %508 = vector.extract_strided_slice %502 {offsets = [0, 96], sizes = [8, 32], strides = [1, 1]} : vector<8x256xf32> to vector<8x32xf32>
    %509 = math.tanh %508 : vector<8x32xf32>
    %510 = vector.extract_strided_slice %502 {offsets = [0, 224], sizes = [8, 32], strides = [1, 1]} : vector<8x256xf32> to vector<8x32xf32>
    %511 = math.tanh %510 : vector<8x32xf32>
    %512 = vector.extract_strided_slice %507 {offsets = [0, 32], sizes = [8, 32], strides = [1, 1]} : vector<8x256xf32> to vector<8x32xf32>
    %513 = arith.mulf %512, %477 : vector<8x32xf32>
    %514 = vector.extract_strided_slice %507 {offsets = [0, 0], sizes = [8, 32], strides = [1, 1]} : vector<8x256xf32> to vector<8x32xf32>
    %515 = arith.mulf %514, %509 : vector<8x32xf32>
    %516 = arith.addf %513, %515 : vector<8x32xf32>
    %517 = vector.extract_strided_slice %507 {offsets = [0, 160], sizes = [8, 32], strides = [1, 1]} : vector<8x256xf32> to vector<8x32xf32>
    %518 = arith.mulf %517, %482 : vector<8x32xf32>
    %519 = vector.extract_strided_slice %507 {offsets = [0, 128], sizes = [8, 32], strides = [1, 1]} : vector<8x256xf32> to vector<8x32xf32>
    %520 = arith.mulf %519, %511 : vector<8x32xf32>
    %521 = arith.addf %518, %520 : vector<8x32xf32>
    %522 = vector.extract_strided_slice %507 {offsets = [0, 64], sizes = [8, 32], strides = [1, 1]} : vector<8x256xf32> to vector<8x32xf32>
    %523 = math.tanh %516 : vector<8x32xf32>
    %524 = arith.mulf %522, %523 : vector<8x32xf32>
    %525 = vector.extract_strided_slice %507 {offsets = [0, 192], sizes = [8, 32], strides = [1, 1]} : vector<8x256xf32> to vector<8x32xf32>
    %526 = math.tanh %521 : vector<8x32xf32>
    %527 = arith.mulf %525, %526 : vector<8x32xf32>
    %528 = arith.index_cast %495 : i32 to index
    %c0_155 = arith.constant 0 : index
    %529 = vector.load %arg14[%528, %c0_155] : memref<64x64xf32, #tpu.memory_space<vmem>>, vector<8x32xf32>
    tpu.vector_store %arg14[%528, %c0_155], %524 {strides = array<i32>} : memref<64x64xf32, #tpu.memory_space<vmem>>, vector<8x32xf32>,
    %530 = arith.index_cast %497 : i32 to index
    %c32_156 = arith.constant 32 : index
    %531 = vector.load %arg14[%530, %c32_156] : memref<64x64xf32, #tpu.memory_space<vmem>>, vector<8x32xf32>
    tpu.vector_store %arg14[%530, %c32_156], %527 {strides = array<i32>} : memref<64x64xf32, #tpu.memory_space<vmem>>, vector<8x32xf32>,
    %c4_i32_157 = arith.constant 4 : i32
    %c7_i32_158 = arith.constant 7 : i32
    %532 = arith.subi %c7_i32_158, %c4_i32_157 : i32
    %c8_i32_159 = arith.constant 8 : i32
    %533 = arith.muli %c4_i32_157, %c8_i32_159 : i32
    %534 = tpu.assume_multiple %533, 8 : i32
    %c8_i32_160 = arith.constant 8 : i32
    %535 = arith.muli %532, %c8_i32_160 : i32
    %536 = tpu.assume_multiple %535, 8 : i32
    %537 = tpu.concatenate %524, %527 in 1 : vector<8x32xf32>, vector<8x32xf32> -> vector<8x64xf32>
    %538 = arith.index_cast %534 : i32 to index
    %c0_161 = arith.constant 0 : index
    %539 = vector.load %arg12[%538, %c0_161] : memref<64x256xf32, #tpu.memory_space<vmem>>, vector<8x256xf32>
    %cst_162 = arith.constant dense<0.000000e+00> : vector<8x256xf32>
    %540 = tpu.matmul %537, %374, %cst_162 {dimension_numbers = #tpu.dot_dimension_numbers<[1], [0], [0], [1], [0, 0, 1, 1], [], []>} : vector<8x64xf32>, vector<64x256xf32>, vector<8x256xf32> -> vector<8x256xf32>
    %541 = arith.addf %539, %540 : vector<8x256xf32>
    %542 = arith.negf %541 : vector<8x256xf32>
    %543 = math.exp %542 : vector<8x256xf32>
    %cst_163 = arith.constant 1.000000e+00 : f32
    %544 = vector.broadcast %cst_163 : f32 to vector<8x256xf32>
    %545 = arith.addf %544, %543 : vector<8x256xf32>
    %546 = arith.divf %544, %545 : vector<8x256xf32>
    %547 = vector.extract_strided_slice %541 {offsets = [0, 96], sizes = [8, 32], strides = [1, 1]} : vector<8x256xf32> to vector<8x32xf32>
    %548 = math.tanh %547 : vector<8x32xf32>
    %549 = vector.extract_strided_slice %541 {offsets = [0, 224], sizes = [8, 32], strides = [1, 1]} : vector<8x256xf32> to vector<8x32xf32>
    %550 = math.tanh %549 : vector<8x32xf32>
    %551 = vector.extract_strided_slice %546 {offsets = [0, 32], sizes = [8, 32], strides = [1, 1]} : vector<8x256xf32> to vector<8x32xf32>
    %552 = arith.mulf %551, %516 : vector<8x32xf32>
    %553 = vector.extract_strided_slice %546 {offsets = [0, 0], sizes = [8, 32], strides = [1, 1]} : vector<8x256xf32> to vector<8x32xf32>
    %554 = arith.mulf %553, %548 : vector<8x32xf32>
    %555 = arith.addf %552, %554 : vector<8x32xf32>
    %556 = vector.extract_strided_slice %546 {offsets = [0, 160], sizes = [8, 32], strides = [1, 1]} : vector<8x256xf32> to vector<8x32xf32>
    %557 = arith.mulf %556, %521 : vector<8x32xf32>
    %558 = vector.extract_strided_slice %546 {offsets = [0, 128], sizes = [8, 32], strides = [1, 1]} : vector<8x256xf32> to vector<8x32xf32>
    %559 = arith.mulf %558, %550 : vector<8x32xf32>
    %560 = arith.addf %557, %559 : vector<8x32xf32>
    %561 = vector.extract_strided_slice %546 {offsets = [0, 64], sizes = [8, 32], strides = [1, 1]} : vector<8x256xf32> to vector<8x32xf32>
    %562 = math.tanh %555 : vector<8x32xf32>
    %563 = arith.mulf %561, %562 : vector<8x32xf32>
    %564 = vector.extract_strided_slice %546 {offsets = [0, 192], sizes = [8, 32], strides = [1, 1]} : vector<8x256xf32> to vector<8x32xf32>
    %565 = math.tanh %560 : vector<8x32xf32>
    %566 = arith.mulf %564, %565 : vector<8x32xf32>
    %567 = arith.index_cast %534 : i32 to index
    %c0_164 = arith.constant 0 : index
    %568 = vector.load %arg14[%567, %c0_164] : memref<64x64xf32, #tpu.memory_space<vmem>>, vector<8x32xf32>
    tpu.vector_store %arg14[%567, %c0_164], %563 {strides = array<i32>} : memref<64x64xf32, #tpu.memory_space<vmem>>, vector<8x32xf32>,
    %569 = arith.index_cast %536 : i32 to index
    %c32_165 = arith.constant 32 : index
    %570 = vector.load %arg14[%569, %c32_165] : memref<64x64xf32, #tpu.memory_space<vmem>>, vector<8x32xf32>
    tpu.vector_store %arg14[%569, %c32_165], %566 {strides = array<i32>} : memref<64x64xf32, #tpu.memory_space<vmem>>, vector<8x32xf32>,
    %c5_i32_166 = arith.constant 5 : i32
    %c7_i32_167 = arith.constant 7 : i32
    %571 = arith.subi %c7_i32_167, %c5_i32_166 : i32
    %c8_i32_168 = arith.constant 8 : i32
    %572 = arith.muli %c5_i32_166, %c8_i32_168 : i32
    %573 = tpu.assume_multiple %572, 8 : i32
    %c8_i32_169 = arith.constant 8 : i32
    %574 = arith.muli %571, %c8_i32_169 : i32
    %575 = tpu.assume_multiple %574, 8 : i32
    %576 = tpu.concatenate %563, %566 in 1 : vector<8x32xf32>, vector<8x32xf32> -> vector<8x64xf32>
    %577 = arith.index_cast %573 : i32 to index
    %c0_170 = arith.constant 0 : index
    %578 = vector.load %arg12[%577, %c0_170] : memref<64x256xf32, #tpu.memory_space<vmem>>, vector<8x256xf32>
    %cst_171 = arith.constant dense<0.000000e+00> : vector<8x256xf32>
    %579 = tpu.matmul %576, %374, %cst_171 {dimension_numbers = #tpu.dot_dimension_numbers<[1], [0], [0], [1], [0, 0, 1, 1], [], []>} : vector<8x64xf32>, vector<64x256xf32>, vector<8x256xf32> -> vector<8x256xf32>
    %580 = arith.addf %578, %579 : vector<8x256xf32>
    %581 = arith.negf %580 : vector<8x256xf32>
    %582 = math.exp %581 : vector<8x256xf32>
    %cst_172 = arith.constant 1.000000e+00 : f32
    %583 = vector.broadcast %cst_172 : f32 to vector<8x256xf32>
    %584 = arith.addf %583, %582 : vector<8x256xf32>
    %585 = arith.divf %583, %584 : vector<8x256xf32>
    %586 = vector.extract_strided_slice %580 {offsets = [0, 96], sizes = [8, 32], strides = [1, 1]} : vector<8x256xf32> to vector<8x32xf32>
    %587 = math.tanh %586 : vector<8x32xf32>
    %588 = vector.extract_strided_slice %580 {offsets = [0, 224], sizes = [8, 32], strides = [1, 1]} : vector<8x256xf32> to vector<8x32xf32>
    %589 = math.tanh %588 : vector<8x32xf32>
    %590 = vector.extract_strided_slice %585 {offsets = [0, 32], sizes = [8, 32], strides = [1, 1]} : vector<8x256xf32> to vector<8x32xf32>
    %591 = arith.mulf %590, %555 : vector<8x32xf32>
    %592 = vector.extract_strided_slice %585 {offsets = [0, 0], sizes = [8, 32], strides = [1, 1]} : vector<8x256xf32> to vector<8x32xf32>
    %593 = arith.mulf %592, %587 : vector<8x32xf32>
    %594 = arith.addf %591, %593 : vector<8x32xf32>
    %595 = vector.extract_strided_slice %585 {offsets = [0, 160], sizes = [8, 32], strides = [1, 1]} : vector<8x256xf32> to vector<8x32xf32>
    %596 = arith.mulf %595, %560 : vector<8x32xf32>
    %597 = vector.extract_strided_slice %585 {offsets = [0, 128], sizes = [8, 32], strides = [1, 1]} : vector<8x256xf32> to vector<8x32xf32>
    %598 = arith.mulf %597, %589 : vector<8x32xf32>
    %599 = arith.addf %596, %598 : vector<8x32xf32>
    %600 = vector.extract_strided_slice %585 {offsets = [0, 64], sizes = [8, 32], strides = [1, 1]} : vector<8x256xf32> to vector<8x32xf32>
    %601 = math.tanh %594 : vector<8x32xf32>
    %602 = arith.mulf %600, %601 : vector<8x32xf32>
    %603 = vector.extract_strided_slice %585 {offsets = [0, 192], sizes = [8, 32], strides = [1, 1]} : vector<8x256xf32> to vector<8x32xf32>
    %604 = math.tanh %599 : vector<8x32xf32>
    %605 = arith.mulf %603, %604 : vector<8x32xf32>
    %606 = arith.index_cast %573 : i32 to index
    %c0_173 = arith.constant 0 : index
    %607 = vector.load %arg14[%606, %c0_173] : memref<64x64xf32, #tpu.memory_space<vmem>>, vector<8x32xf32>
    tpu.vector_store %arg14[%606, %c0_173], %602 {strides = array<i32>} : memref<64x64xf32, #tpu.memory_space<vmem>>, vector<8x32xf32>,
    %608 = arith.index_cast %575 : i32 to index
    %c32_174 = arith.constant 32 : index
    %609 = vector.load %arg14[%608, %c32_174] : memref<64x64xf32, #tpu.memory_space<vmem>>, vector<8x32xf32>
    tpu.vector_store %arg14[%608, %c32_174], %605 {strides = array<i32>} : memref<64x64xf32, #tpu.memory_space<vmem>>, vector<8x32xf32>,
    %c6_i32_175 = arith.constant 6 : i32
    %c7_i32_176 = arith.constant 7 : i32
    %610 = arith.subi %c7_i32_176, %c6_i32_175 : i32
    %c8_i32_177 = arith.constant 8 : i32
    %611 = arith.muli %c6_i32_175, %c8_i32_177 : i32
    %612 = tpu.assume_multiple %611, 8 : i32
    %c8_i32_178 = arith.constant 8 : i32
    %613 = arith.muli %610, %c8_i32_178 : i32
    %614 = tpu.assume_multiple %613, 8 : i32
    %615 = tpu.concatenate %602, %605 in 1 : vector<8x32xf32>, vector<8x32xf32> -> vector<8x64xf32>
    %616 = arith.index_cast %612 : i32 to index
    %c0_179 = arith.constant 0 : index
    %617 = vector.load %arg12[%616, %c0_179] : memref<64x256xf32, #tpu.memory_space<vmem>>, vector<8x256xf32>
    %cst_180 = arith.constant dense<0.000000e+00> : vector<8x256xf32>
    %618 = tpu.matmul %615, %374, %cst_180 {dimension_numbers = #tpu.dot_dimension_numbers<[1], [0], [0], [1], [0, 0, 1, 1], [], []>} : vector<8x64xf32>, vector<64x256xf32>, vector<8x256xf32> -> vector<8x256xf32>
    %619 = arith.addf %617, %618 : vector<8x256xf32>
    %620 = arith.negf %619 : vector<8x256xf32>
    %621 = math.exp %620 : vector<8x256xf32>
    %cst_181 = arith.constant 1.000000e+00 : f32
    %622 = vector.broadcast %cst_181 : f32 to vector<8x256xf32>
    %623 = arith.addf %622, %621 : vector<8x256xf32>
    %624 = arith.divf %622, %623 : vector<8x256xf32>
    %625 = vector.extract_strided_slice %619 {offsets = [0, 96], sizes = [8, 32], strides = [1, 1]} : vector<8x256xf32> to vector<8x32xf32>
    %626 = math.tanh %625 : vector<8x32xf32>
    %627 = vector.extract_strided_slice %619 {offsets = [0, 224], sizes = [8, 32], strides = [1, 1]} : vector<8x256xf32> to vector<8x32xf32>
    %628 = math.tanh %627 : vector<8x32xf32>
    %629 = vector.extract_strided_slice %624 {offsets = [0, 32], sizes = [8, 32], strides = [1, 1]} : vector<8x256xf32> to vector<8x32xf32>
    %630 = arith.mulf %629, %594 : vector<8x32xf32>
    %631 = vector.extract_strided_slice %624 {offsets = [0, 0], sizes = [8, 32], strides = [1, 1]} : vector<8x256xf32> to vector<8x32xf32>
    %632 = arith.mulf %631, %626 : vector<8x32xf32>
    %633 = arith.addf %630, %632 : vector<8x32xf32>
    %634 = vector.extract_strided_slice %624 {offsets = [0, 160], sizes = [8, 32], strides = [1, 1]} : vector<8x256xf32> to vector<8x32xf32>
    %635 = arith.mulf %634, %599 : vector<8x32xf32>
    %636 = vector.extract_strided_slice %624 {offsets = [0, 128], sizes = [8, 32], strides = [1, 1]} : vector<8x256xf32> to vector<8x32xf32>
    %637 = arith.mulf %636, %628 : vector<8x32xf32>
    %638 = arith.addf %635, %637 : vector<8x32xf32>
    %639 = vector.extract_strided_slice %624 {offsets = [0, 64], sizes = [8, 32], strides = [1, 1]} : vector<8x256xf32> to vector<8x32xf32>
    %640 = math.tanh %633 : vector<8x32xf32>
    %641 = arith.mulf %639, %640 : vector<8x32xf32>
    %642 = vector.extract_strided_slice %624 {offsets = [0, 192], sizes = [8, 32], strides = [1, 1]} : vector<8x256xf32> to vector<8x32xf32>
    %643 = math.tanh %638 : vector<8x32xf32>
    %644 = arith.mulf %642, %643 : vector<8x32xf32>
    %645 = arith.index_cast %612 : i32 to index
    %c0_182 = arith.constant 0 : index
    %646 = vector.load %arg14[%645, %c0_182] : memref<64x64xf32, #tpu.memory_space<vmem>>, vector<8x32xf32>
    tpu.vector_store %arg14[%645, %c0_182], %641 {strides = array<i32>} : memref<64x64xf32, #tpu.memory_space<vmem>>, vector<8x32xf32>,
    %647 = arith.index_cast %614 : i32 to index
    %c32_183 = arith.constant 32 : index
    %648 = vector.load %arg14[%647, %c32_183] : memref<64x64xf32, #tpu.memory_space<vmem>>, vector<8x32xf32>
    tpu.vector_store %arg14[%647, %c32_183], %644 {strides = array<i32>} : memref<64x64xf32, #tpu.memory_space<vmem>>, vector<8x32xf32>,
    %c7_i32_184 = arith.constant 7 : i32
    %c7_i32_185 = arith.constant 7 : i32
    %649 = arith.subi %c7_i32_185, %c7_i32_184 : i32
    %c8_i32_186 = arith.constant 8 : i32
    %650 = arith.muli %c7_i32_184, %c8_i32_186 : i32
    %651 = tpu.assume_multiple %650, 8 : i32
    %c8_i32_187 = arith.constant 8 : i32
    %652 = arith.muli %649, %c8_i32_187 : i32
    %653 = tpu.assume_multiple %652, 8 : i32
    %654 = tpu.concatenate %641, %644 in 1 : vector<8x32xf32>, vector<8x32xf32> -> vector<8x64xf32>
    %655 = arith.index_cast %651 : i32 to index
    %c0_188 = arith.constant 0 : index
    %656 = vector.load %arg12[%655, %c0_188] : memref<64x256xf32, #tpu.memory_space<vmem>>, vector<8x256xf32>
    %cst_189 = arith.constant dense<0.000000e+00> : vector<8x256xf32>
    %657 = tpu.matmul %654, %374, %cst_189 {dimension_numbers = #tpu.dot_dimension_numbers<[1], [0], [0], [1], [0, 0, 1, 1], [], []>} : vector<8x64xf32>, vector<64x256xf32>, vector<8x256xf32> -> vector<8x256xf32>
    %658 = arith.addf %656, %657 : vector<8x256xf32>
    %659 = arith.negf %658 : vector<8x256xf32>
    %660 = math.exp %659 : vector<8x256xf32>
    %cst_190 = arith.constant 1.000000e+00 : f32
    %661 = vector.broadcast %cst_190 : f32 to vector<8x256xf32>
    %662 = arith.addf %661, %660 : vector<8x256xf32>
    %663 = arith.divf %661, %662 : vector<8x256xf32>
    %664 = vector.extract_strided_slice %658 {offsets = [0, 96], sizes = [8, 32], strides = [1, 1]} : vector<8x256xf32> to vector<8x32xf32>
    %665 = math.tanh %664 : vector<8x32xf32>
    %666 = vector.extract_strided_slice %658 {offsets = [0, 224], sizes = [8, 32], strides = [1, 1]} : vector<8x256xf32> to vector<8x32xf32>
    %667 = math.tanh %666 : vector<8x32xf32>
    %668 = vector.extract_strided_slice %663 {offsets = [0, 32], sizes = [8, 32], strides = [1, 1]} : vector<8x256xf32> to vector<8x32xf32>
    %669 = arith.mulf %668, %633 : vector<8x32xf32>
    %670 = vector.extract_strided_slice %663 {offsets = [0, 0], sizes = [8, 32], strides = [1, 1]} : vector<8x256xf32> to vector<8x32xf32>
    %671 = arith.mulf %670, %665 : vector<8x32xf32>
    %672 = arith.addf %669, %671 : vector<8x32xf32>
    %673 = vector.extract_strided_slice %663 {offsets = [0, 160], sizes = [8, 32], strides = [1, 1]} : vector<8x256xf32> to vector<8x32xf32>
    %674 = arith.mulf %673, %638 : vector<8x32xf32>
    %675 = vector.extract_strided_slice %663 {offsets = [0, 128], sizes = [8, 32], strides = [1, 1]} : vector<8x256xf32> to vector<8x32xf32>
    %676 = arith.mulf %675, %667 : vector<8x32xf32>
    %677 = arith.addf %674, %676 : vector<8x32xf32>
    %678 = vector.extract_strided_slice %663 {offsets = [0, 64], sizes = [8, 32], strides = [1, 1]} : vector<8x256xf32> to vector<8x32xf32>
    %679 = math.tanh %672 : vector<8x32xf32>
    %680 = arith.mulf %678, %679 : vector<8x32xf32>
    %681 = vector.extract_strided_slice %663 {offsets = [0, 192], sizes = [8, 32], strides = [1, 1]} : vector<8x256xf32> to vector<8x32xf32>
    %682 = math.tanh %677 : vector<8x32xf32>
    %683 = arith.mulf %681, %682 : vector<8x32xf32>
    %684 = arith.index_cast %651 : i32 to index
    %c0_191 = arith.constant 0 : index
    %685 = vector.load %arg14[%684, %c0_191] : memref<64x64xf32, #tpu.memory_space<vmem>>, vector<8x32xf32>
    tpu.vector_store %arg14[%684, %c0_191], %680 {strides = array<i32>} : memref<64x64xf32, #tpu.memory_space<vmem>>, vector<8x32xf32>,
    %686 = arith.index_cast %653 : i32 to index
    %c32_192 = arith.constant 32 : index
    %687 = vector.load %arg14[%686, %c32_192] : memref<64x64xf32, #tpu.memory_space<vmem>>, vector<8x32xf32>
    tpu.vector_store %arg14[%686, %c32_192], %683 {strides = array<i32>} : memref<64x64xf32, #tpu.memory_space<vmem>>, vector<8x32xf32>,
    %c8_i32_193 = arith.constant 8 : i32
    %c2 = arith.constant 2 : index
    %c0_194 = arith.constant 0 : index
    %c0_195 = arith.constant 0 : index
    %688 = vector.load %arg10[%c2, %c0_194, %c0_195] : memref<4x8x32xf32, #tpu.memory_space<vmem>>, vector<1x8x32xf32>
    %689 = vector.shape_cast %688 : vector<1x8x32xf32> to vector<8x32xf32>
    %690 = vector.shape_cast %680 : vector<8x32xf32> to vector<1x8x32xf32>
    tpu.vector_store %arg10[%c2, %c0_194, %c0_195], %690 {strides = array<i32>} : memref<4x8x32xf32, #tpu.memory_space<vmem>>, vector<1x8x32xf32>,
    %c3 = arith.constant 3 : index
    %c0_196 = arith.constant 0 : index
    %c0_197 = arith.constant 0 : index
    %691 = vector.load %arg10[%c3, %c0_196, %c0_197] : memref<4x8x32xf32, #tpu.memory_space<vmem>>, vector<1x8x32xf32>
    %692 = vector.shape_cast %691 : vector<1x8x32xf32> to vector<8x32xf32>
    %693 = vector.shape_cast %683 : vector<8x32xf32> to vector<1x8x32xf32>
    tpu.vector_store %arg10[%c3, %c0_196, %c0_197], %693 {strides = array<i32>} : memref<4x8x32xf32, #tpu.memory_space<vmem>>, vector<1x8x32xf32>,
    %c2_198 = arith.constant 2 : index
    %c0_199 = arith.constant 0 : index
    %c0_200 = arith.constant 0 : index
    %694 = vector.load %arg11[%c2_198, %c0_199, %c0_200] : memref<4x8x32xf32, #tpu.memory_space<vmem>>, vector<1x8x32xf32>
    %695 = vector.shape_cast %694 : vector<1x8x32xf32> to vector<8x32xf32>
    %696 = vector.shape_cast %672 : vector<8x32xf32> to vector<1x8x32xf32>
    tpu.vector_store %arg11[%c2_198, %c0_199, %c0_200], %696 {strides = array<i32>} : memref<4x8x32xf32, #tpu.memory_space<vmem>>, vector<1x8x32xf32>,
    %c3_201 = arith.constant 3 : index
    %c0_202 = arith.constant 0 : index
    %c0_203 = arith.constant 0 : index
    %697 = vector.load %arg11[%c3_201, %c0_202, %c0_203] : memref<4x8x32xf32, #tpu.memory_space<vmem>>, vector<1x8x32xf32>
    %698 = vector.shape_cast %697 : vector<1x8x32xf32> to vector<8x32xf32>
    %699 = vector.shape_cast %677 : vector<8x32xf32> to vector<1x8x32xf32>
    tpu.vector_store %arg11[%c3_201, %c0_202, %c0_203], %699 {strides = array<i32>} : memref<4x8x32xf32, #tpu.memory_space<vmem>>, vector<1x8x32xf32>,
    %c0_204 = arith.constant 0 : index
    %c0_205 = arith.constant 0 : index
    %700 = vector.load %arg14[%c0_204, %c0_205] : memref<64x64xf32, #tpu.memory_space<vmem>>, vector<64x64xf32>
    %c0_206 = arith.constant 0 : index
    %c0_207 = arith.constant 0 : index
    %701 = vector.load %arg7[%c0_206, %c0_207] : memref<64x128xf32, #tpu.memory_space<vmem>>, vector<64x128xf32>
    %cst_208 = arith.constant dense<0.000000e+00> : vector<64x128xf32>
    %702 = tpu.matmul %700, %701, %cst_208 {dimension_numbers = #tpu.dot_dimension_numbers<[1], [0], [0], [1], [0, 0, 1, 1], [], []>} : vector<64x64xf32>, vector<64x128xf32>, vector<64x128xf32> -> vector<64x128xf32>
    %c0_209 = arith.constant 0 : index
    %c0_210 = arith.constant 0 : index
    %703 = vector.load %arg8[%c0_209, %c0_210] : memref<1x128xf32, #tpu.memory_space<vmem>>, vector<1x128xf32>
    %704 = vector.broadcast %703 : vector<1x128xf32> to vector<64x128xf32>
    %705 = arith.addf %702, %704 : vector<64x128xf32>
    %c0_211 = arith.constant 0 : index
    %c0_212 = arith.constant 0 : index
    %706 = vector.load %arg9[%c0_211, %c0_212] : memref<64x128xf32, #tpu.memory_space<vmem>>, vector<64x128xf32>
    tpu.vector_store %arg9[%c0_211, %c0_212], %705 {strides = array<i32>} : memref<64x128xf32, #tpu.memory_space<vmem>>, vector<64x128xf32>,
    return
  }
}

</mosaic_0001>

<llo_original>
// kernel: rnn_bilstm_forward.1
$region0: #{rnn_bilstm_forward.1}
  #allocation0 [shape = 'u32[]', space=smem, size = 0x4, offset = 0x4, fixed_abs, tag = 'smem constant byte address 0x4 - core index']
  #allocation1 [shape = 'u32[72,128]{1,0:T(1,128)}', space=vmem, size = 0x9000, scoped, tag = 'internal scratch']
  #allocation2 [shape = 'f32[64,256]{1,0:T(8,128)}', space=vmem, size = 0x10000, scoped, tag = 'scratch operand']
  #allocation3 [shape = 'f32[64,64]{1,0:T(8,128)}', space=vmem, size = 0x8000, scoped, tag = 'scratch operand']
  #allocation4 [shape = 'f32[64,64]{1,0:T(8,128)}', space=vmem, size = 0x8000, scoped, tag = 'scratch operand']
  %s0 = inlined_call_operand.vmem [shape: f32[64,64], index: 0, kind: input, shape index: {}]
  %s1 = inlined_call_operand.hbm [shape: f32[64,256], index: 1, kind: input, shape index: {}]
  %s2 = inlined_call_operand.hbm [shape: f32[64,256], index: 2, kind: input, shape index: {}]
  %s3 = inlined_call_operand.vmem [shape: f32[1,256], index: 3, kind: input, shape index: {}]
  %s4 = inlined_call_operand.hbm [shape: f32[64,256], index: 4, kind: input, shape index: {}]
  %s5 = inlined_call_operand.hbm [shape: f32[64,256], index: 5, kind: input, shape index: {}]
  %s6 = inlined_call_operand.vmem [shape: f32[1,256], index: 6, kind: input, shape index: {}]
  %s7 = inlined_call_operand.vmem [shape: f32[64,128], index: 7, kind: input, shape index: {}]
  %s8 = inlined_call_operand.vmem [shape: f32[1,128], index: 8, kind: input, shape index: {}]
  %s9 = inlined_call_operand.vmem [shape: f32[64,128], index: 9, kind: output, shape index: {0}]
  %s10 = inlined_call_operand.vmem [shape: f32[4,8,32], index: 10, kind: output, shape index: {1}]
  %s11 = inlined_call_operand.vmem [shape: f32[4,8,32], index: 11, kind: output, shape index: {2}]
  %12 = xla_tuple %s9, %s10, %s11
  %s13 = sld [smem:[#allocation0]]
  $region78: #{rnn_bilstm_forward.1} parent=0
    _
  %s15 = ssub.s32 1, %s13
  %s16 = scalar_select 0, %s15, %s13
  $region1: #{rnn_bilstm_forward.1} parent=0
    #allocation5 [shape = 'u8[65536]{0}', space=vmem, size = 0x10000, scoped, tag = 'input window, operand 1, single buffered']
    #allocation6 [shape = 's32[1]{0}', space=sflag, size = 0x4, scoped, tag = 'scoped memory for rnn_bilstm_forward.1']
    #allocation7 [shape = 'u8[65536]{0}', space=vmem, size = 0x10000, scoped, tag = 'input window, operand 2, single buffered']
    #allocation8 [shape = 's32[1]{0}', space=sflag, size = 0x4, scoped, tag = 'scoped memory for rnn_bilstm_forward.1']
    #allocation9 [shape = 'u8[65536]{0}', space=vmem, size = 0x10000, scoped, tag = 'input window, operand 4, single buffered']
    #allocation10 [shape = 'u8[65536]{0}', space=vmem, size = 0x10000, scoped, tag = 'input window, operand 5, single buffered']
    #allocation11 [shape = 's32[1]{0}', space=sflag, size = 0x4, scoped, tag = 'scoped memory for rnn_bilstm_forward.1']
    %17 = vsyncpa [#allocation6], 0
    %18 = vsyncpa [#allocation8], 0
    %19 = vsyncpa [#allocation11], 0
    // Predicated region
    $region2: #{rnn_bilstm_forward.1} parent=1 // pred_check
      _
    $region3: #{rnn_bilstm_forward.1} parent=1 // pred_check_branch
      %21 = sbr.rel (0) target = $region5
    $region4: #{rnn_bilstm_forward.1} parent=1 // pred_region
      _
    $region5: #{rnn_bilstm_forward.1} parent=1 // pred_fallthru
      _
    // Predicated region
    $region6: #{rnn_bilstm_forward.1} parent=1 // pred_check
      _
    $region7: #{rnn_bilstm_forward.1} parent=1 // pred_check_branch
      %23 = sbr.rel (0) target = $region9
    $region8: #{rnn_bilstm_forward.1} parent=1 // pred_region
      %25 = vsyncadd [#allocation6], 0
      %s26 = sshll.u32 %s1, 4
      %s27 = int_to_ptr.hbm [resolvable:$true] %s26
      %s28 = sshll.u32 [#allocation5], 4
      %s29 = int_to_ptr.vmem [resolvable:$true] %s28
      %34 = dma.hbm_to_vmem [thread:$0]  %s27, 2048, %s29, [#allocation6], 256, 256, 16
    $region9: #{rnn_bilstm_forward.1} parent=1 // pred_fallthru
      _
    // Predicated region
    $region10: #{rnn_bilstm_forward.1} parent=1 // pred_check
      _
    $region11: #{rnn_bilstm_forward.1} parent=1 // pred_check_branch
      %36 = sbr.rel (0) target = $region13
    $region12: #{rnn_bilstm_forward.1} parent=1 // pred_region
      %38 = vsyncadd [#allocation8], 0
      %s39 = sshll.u32 %s2, 4
      %s40 = int_to_ptr.hbm [resolvable:$true] %s39
      %s41 = sshll.u32 [#allocation7], 4
      %s42 = int_to_ptr.vmem [resolvable:$true] %s41
      %47 = dma.hbm_to_vmem [thread:$0]  %s40, 2048, %s42, [#allocation8], 256, 256, 16
    $region13: #{rnn_bilstm_forward.1} parent=1 // pred_fallthru
      _
    // Predicated region
    $region14: #{rnn_bilstm_forward.1} parent=1 // pred_check
      _
    $region15: #{rnn_bilstm_forward.1} parent=1 // pred_check_branch
      %49 = sbr.rel (0) target = $region17
    $region16: #{rnn_bilstm_forward.1} parent=1 // pred_region
      _
    $region17: #{rnn_bilstm_forward.1} parent=1 // pred_fallthru
      _
    // Predicated region
    $region18: #{rnn_bilstm_forward.1} parent=1 // pred_check
      _
    $region19: #{rnn_bilstm_forward.1} parent=1 // pred_check_branch
      %51 = sbr.rel (0) target = $region21
    $region20: #{rnn_bilstm_forward.1} parent=1 // pred_region
      %53 = vsyncadd [#allocation8], 0
      %s54 = sshll.u32 %s4, 4
      %s55 = int_to_ptr.hbm [resolvable:$true] %s54
      %s56 = sshll.u32 [#allocation9], 4
      %s57 = int_to_ptr.vmem [resolvable:$true] %s56
      %62 = dma.hbm_to_vmem [thread:$0]  %s55, 2048, %s57, [#allocation8], 256, 256, 16
    $region21: #{rnn_bilstm_forward.1} parent=1 // pred_fallthru
      _
    // Predicated region
    $region22: #{rnn_bilstm_forward.1} parent=1 // pred_check
      _
    $region23: #{rnn_bilstm_forward.1} parent=1 // pred_check_branch
      %64 = sbr.rel (0) target = $region25
    $region24: #{rnn_bilstm_forward.1} parent=1 // pred_region
      %66 = vsyncadd [#allocation11], 0
      %s67 = sshll.u32 %s5, 4
      %s68 = int_to_ptr.hbm [resolvable:$true] %s67
      %s69 = sshll.u32 [#allocation10], 4
      %s70 = int_to_ptr.vmem [resolvable:$true] %s69
      %75 = dma.hbm_to_vmem [thread:$0]  %s68, 2048, %s70, [#allocation11], 256, 256, 16
    $region25: #{rnn_bilstm_forward.1} parent=1 // pred_fallthru
      _
    // Predicated region
    $region26: #{rnn_bilstm_forward.1} parent=1 // pred_check
      _
    $region27: #{rnn_bilstm_forward.1} parent=1 // pred_check_branch
      %77 = sbr.rel (0) target = $region29
    $region28: #{rnn_bilstm_forward.1} parent=1 // pred_region
      _
    $region29: #{rnn_bilstm_forward.1} parent=1 // pred_fallthru
      _
    // Predicated region
    $region30: #{rnn_bilstm_forward.1} parent=1 // pred_check
      _
    $region31: #{rnn_bilstm_forward.1} parent=1 // pred_check_branch
      %79 = sbr.rel (0) target = $region33
    $region32: #{rnn_bilstm_forward.1} parent=1 // pred_region
      _
    $region33: #{rnn_bilstm_forward.1} parent=1 // pred_fallthru
      _
    // Predicated region
    $region34: #{rnn_bilstm_forward.1} parent=1 // pred_check
      _
    $region35: #{rnn_bilstm_forward.1} parent=1 // pred_check_branch
      %81 = sbr.rel (0) target = $region37
    $region36: #{rnn_bilstm_forward.1} parent=1 // pred_region
      _
    $region37: #{rnn_bilstm_forward.1} parent=1 // pred_fallthru
      _
    // Predicated region
    $region38: #{rnn_bilstm_forward.1} parent=1 // pred_check
      _
    $region39: #{rnn_bilstm_forward.1} parent=1 // pred_check_branch
      %83 = sbr.rel (0) target = $region41
    $region40: #{rnn_bilstm_forward.1} parent=1 // pred_region
      %85 = dma.done [#allocation6], 2048
    $region41: #{rnn_bilstm_forward.1} parent=1 // pred_fallthru
      _
    // Predicated region
    $region42: #{rnn_bilstm_forward.1} parent=1 // pred_check
      _
    $region43: #{rnn_bilstm_forward.1} parent=1 // pred_check_branch
      %87 = sbr.rel (0) target = $region45
    $region44: #{rnn_bilstm_forward.1} parent=1 // pred_region
      %89 = dma.done [#allocation8], 2048
    $region45: #{rnn_bilstm_forward.1} parent=1 // pred_fallthru
      _
    // Predicated region
    $region46: #{rnn_bilstm_forward.1} parent=1 // pred_check
      _
    $region47: #{rnn_bilstm_forward.1} parent=1 // pred_check_branch
      %91 = sbr.rel (0) target = $region49
    $region48: #{rnn_bilstm_forward.1} parent=1 // pred_region
      %93 = dma.done [#allocation8], 2048
    $region49: #{rnn_bilstm_forward.1} parent=1 // pred_fallthru
      _
    // Predicated region
    $region50: #{rnn_bilstm_forward.1} parent=1 // pred_check
      _
    $region51: #{rnn_bilstm_forward.1} parent=1 // pred_check_branch
      %95 = sbr.rel (0) target = $region53
    $region52: #{rnn_bilstm_forward.1} parent=1 // pred_region
      %97 = dma.done [#allocation11], 2048
    $region53: #{rnn_bilstm_forward.1} parent=1 // pred_fallthru
      _
    %v98 = vld [vmem:[%s0] sm:$0xff]
    %v99 = vld [vmem:[%s0 + $0x8] sm:$0xff]
    %v100 = vld [vmem:[%s0 + $0x10] sm:$0xff]
    %v101 = vld [vmem:[%s0 + $0x18] sm:$0xff]
    %v102 = vld [vmem:[%s0 + $0x20] sm:$0xff]
    %v103 = vld [vmem:[%s0 + $0x28] sm:$0xff]
    %v104 = vld [vmem:[%s0 + $0x30] sm:$0xff]
    %v105 = vld [vmem:[%s0 + $0x38] sm:$0xff]
    %v106 = vld [vmem:[#allocation5] sm:$0xff]
    %v107 = vld [vmem:[#allocation5 + $0x8] sm:$0xff]
    %v108 = vld [vmem:[#allocation5 + $0x10] sm:$0xff]
    %v109 = vld [vmem:[#allocation5 + $0x18] sm:$0xff]
    %v110 = vld [vmem:[#allocation5 + $0x20] sm:$0xff]
    %v111 = vld [vmem:[#allocation5 + $0x28] sm:$0xff]
    %v112 = vld [vmem:[#allocation5 + $0x30] sm:$0xff]
    %v113 = vld [vmem:[#allocation5 + $0x38] sm:$0xff]
    %v114 = vld [vmem:[#allocation5 + $0x40] sm:$0xff]
    %v115 = vld [vmem:[#allocation5 + $0x48] sm:$0xff]
    %v116 = vld [vmem:[#allocation5 + $0x50] sm:$0xff]
    %v117 = vld [vmem:[#allocation5 + $0x58] sm:$0xff]
    %v118 = vld [vmem:[#allocation5 + $0x60] sm:$0xff]
    %v119 = vld [vmem:[#allocation5 + $0x68] sm:$0xff]
    %v120 = vld [vmem:[#allocation5 + $0x70] sm:$0xff]
    %v121 = vld [vmem:[#allocation5 + $0x78] sm:$0xff]
    %v122 = vld [vmem:[%s3] sm:$0x3]
    %v124 = vperm.slane %v122, 0
    %v125 = vperm.slane %v122, 1
    %vm128 = vcmask 523264
    %v130 = vsel %vm128, %v98, 0
    %v133 = vsel %vm128, %v99, 0
    %v136 = vsel %vm128, %v100, 0
    %v139 = vsel %vm128, %v101, 0
    %v142 = vsel %vm128, %v102, 0
    %v145 = vsel %vm128, %v103, 0
    %v148 = vsel %vm128, %v104, 0
    %v151 = vsel %vm128, %v105, 0
    %153 = vmatpush.msra.mxu0 0.0
    %154 = vmatpush.msra.mxu0 0.0
    %155 = vmatpush.msra.mxu0 0.0
    %156 = vmatpush.msra.mxu0 0.0
    %157 = vmatpush.msra.mxu0 0.0
    %158 = vmatpush.msra.mxu0 0.0
    %159 = vmatpush.msra.mxu0 0.0
    %160 = vmatpush.msra.mxu0 0.0
    %161 = vmatpush.msra.mxu0 %v120
    %162 = vmatpush.msra.mxu0 %v118
    %163 = vmatpush.msra.mxu0 %v116
    %164 = vmatpush.msra.mxu0 %v114
    %165 = vmatpush.msra.mxu0 %v112
    %166 = vmatpush.msra.mxu0 %v110
    %167 = vmatpush.msra.mxu0 %v108
    %168 = vmatpush.msra.mxu0 %v106
    %169 = vmatmul.f32.gmra.mxu0 %v130
    %v170 = vpop.f32.mrf.mxu0
    %v171 = vadd.f32 %v124, %v170
    %172 = vmatmul.f32.gmra.mxu0 %v133
    %v173 = vpop.f32.mrf.mxu0
    %v174 = vadd.f32 %v124, %v173
    %175 = vmatmul.f32.gmra.mxu0 %v136
    %v176 = vpop.f32.mrf.mxu0
    %v177 = vadd.f32 %v124, %v176
    %178 = vmatmul.f32.gmra.mxu0 %v139
    %v179 = vpop.f32.mrf.mxu0
    %v180 = vadd.f32 %v124, %v179
    %181 = vmatmul.f32.gmra.mxu0 %v142
    %v182 = vpop.f32.mrf.mxu0
    %v183 = vadd.f32 %v124, %v182
    %184 = vmatmul.f32.gmra.mxu0 %v145
    %v185 = vpop.f32.mrf.mxu0
    %v186 = vadd.f32 %v124, %v185
    %187 = vmatmul.f32.gmra.mxu0 %v148
    %v188 = vpop.f32.mrf.mxu0
    %v189 = vadd.f32 %v124, %v188
    %190 = vmatmul.f32.gmra.mxu0 %v151
    %v191 = vpop.f32.mrf.mxu0
    %v192 = vadd.f32 %v124, %v191
    %193 = vdwg.mxu0
    %194 = vmatpush.msra.mxu0 0.0
    %195 = vmatpush.msra.mxu0 0.0
    %196 = vmatpush.msra.mxu0 0.0
    %197 = vmatpush.msra.mxu0 0.0
    %198 = vmatpush.msra.mxu0 0.0
    %199 = vmatpush.msra.mxu0 0.0
    %200 = vmatpush.msra.mxu0 0.0
    %201 = vmatpush.msra.mxu0 0.0
    %202 = vmatpush.msra.mxu0 %v121
    %203 = vmatpush.msra.mxu0 %v119
    %204 = vmatpush.msra.mxu0 %v117
    %205 = vmatpush.msra.mxu0 %v115
    %206 = vmatpush.msra.mxu0 %v113
    %207 = vmatpush.msra.mxu0 %v111
    %208 = vmatpush.msra.mxu0 %v109
    %209 = vmatpush.msra.mxu0 %v107
    %210 = vmatmul.f32.gmra.mxu0 %v130
    %v211 = vpop.f32.mrf.mxu0
    %v212 = vadd.f32 %v125, %v211
    %213 = vmatmul.f32.gmra.mxu0 %v133
    %v214 = vpop.f32.mrf.mxu0
    %v215 = vadd.f32 %v125, %v214
    %216 = vmatmul.f32.gmra.mxu0 %v136
    %v217 = vpop.f32.mrf.mxu0
    %v218 = vadd.f32 %v125, %v217
    %219 = vmatmul.f32.gmra.mxu0 %v139
    %v220 = vpop.f32.mrf.mxu0
    %v221 = vadd.f32 %v125, %v220
    %222 = vmatmul.f32.gmra.mxu0 %v142
    %v223 = vpop.f32.mrf.mxu0
    %v224 = vadd.f32 %v125, %v223
    %225 = vmatmul.f32.gmra.mxu0 %v145
    %v226 = vpop.f32.mrf.mxu0
    %v227 = vadd.f32 %v125, %v226
    %228 = vmatmul.f32.gmra.mxu0 %v148
    %v229 = vpop.f32.mrf.mxu0
    %v230 = vadd.f32 %v125, %v229
    %231 = vmatmul.f32.gmra.mxu0 %v151
    %v232 = vpop.f32.mrf.mxu0
    %v233 = vadd.f32 %v125, %v232
    %234 = vdwg.mxu0
    %235 = vst [vmem:[#allocation2] sm:$0xff] %v171
    %236 = vst [vmem:[#allocation2 + $0x10] sm:$0xff] %v174
    %237 = vst [vmem:[#allocation2 + $0x20] sm:$0xff] %v177
    %238 = vst [vmem:[#allocation2 + $0x30] sm:$0xff] %v180
    %239 = vst [vmem:[#allocation2 + $0x40] sm:$0xff] %v183
    %240 = vst [vmem:[#allocation2 + $0x50] sm:$0xff] %v186
    %241 = vst [vmem:[#allocation2 + $0x60] sm:$0xff] %v189
    %242 = vst [vmem:[#allocation2 + $0x70] sm:$0xff] %v192
    %243 = vst [vmem:[#allocation2 + $0x8] sm:$0xff] %v233
    %244 = vst [vmem:[#allocation2 + $0x18] sm:$0xff] %v230
    %245 = vst [vmem:[#allocation2 + $0x28] sm:$0xff] %v227
    %246 = vst [vmem:[#allocation2 + $0x38] sm:$0xff] %v224
    %247 = vst [vmem:[#allocation2 + $0x48] sm:$0xff] %v221
    %248 = vst [vmem:[#allocation2 + $0x58] sm:$0xff] %v218
    %249 = vst [vmem:[#allocation2 + $0x68] sm:$0xff] %v215
    %250 = vst [vmem:[#allocation2 + $0x78] sm:$0xff] %v212
    %v251 = vld [vmem:[#allocation7] sm:$0xff]
    %v252 = vld [vmem:[#allocation7 + $0x8] sm:$0xff]
    %v253 = vld [vmem:[#allocation7 + $0x10] sm:$0xff]
    %v254 = vld [vmem:[#allocation7 + $0x18] sm:$0xff]
    %v255 = vld [vmem:[#allocation7 + $0x20] sm:$0xff]
    %v256 = vld [vmem:[#allocation7 + $0x28] sm:$0xff]
    %v257 = vld [vmem:[#allocation7 + $0x30] sm:$0xff]
    %v258 = vld [vmem:[#allocation7 + $0x38] sm:$0xff]
    %v259 = vld [vmem:[#allocation7 + $0x40] sm:$0xff]
    %v260 = vld [vmem:[#allocation7 + $0x48] sm:$0xff]
    %v261 = vld [vmem:[#allocation7 + $0x50] sm:$0xff]
    %v262 = vld [vmem:[#allocation7 + $0x58] sm:$0xff]
    %v263 = vld [vmem:[#allocation7 + $0x60] sm:$0xff]
    %v264 = vld [vmem:[#allocation7 + $0x68] sm:$0xff]
    %v265 = vld [vmem:[#allocation7 + $0x70] sm:$0xff]
    %v266 = vld [vmem:[#allocation7 + $0x78] sm:$0xff]
    %s267 = smul.u32 0, 2
    %s268 = smul.addr %s267, 8
    %s269 = scalar_lea.vmem [#allocation2], %s268
    %v270 = vld [vmem:[%s269] sm:$0xff]
    %v271 = vld [vmem:[%s269 + $0x8] sm:$0xff]
    %v273 = vsel %vm128, 0.0, 0
    %275 = vmatpush.msra.mxu0 0.0
    %276 = vmatpush.msra.mxu0 0.0
    %277 = vmatpush.msra.mxu0 0.0
    %278 = vmatpush.msra.mxu0 0.0
    %279 = vmatpush.msra.mxu0 0.0
    %280 = vmatpush.msra.mxu0 0.0
    %281 = vmatpush.msra.mxu0 0.0
    %282 = vmatpush.msra.mxu0 0.0
    %283 = vmatpush.msra.mxu0 %v265
    %284 = vmatpush.msra.mxu0 %v263
    %285 = vmatpush.msra.mxu0 %v261
    %286 = vmatpush.msra.mxu0 %v259
    %287 = vmatpush.msra.mxu0 %v257
    %288 = vmatpush.msra.mxu0 %v255
    %289 = vmatpush.msra.mxu0 %v253
    %290 = vmatpush.msra.mxu0 %v251
    %291 = vmatmul.f32.gmra.mxu0 %v273
    %v292 = vpop.f32.mrf.mxu0
    %v293 = vadd.f32 0.0, %v292
    %294 = vdwg.mxu0
    %295 = vmatpush.msra.mxu0 0.0
    %296 = vmatpush.msra.mxu0 0.0
    %297 = vmatpush.msra.mxu0 0.0
    %298 = vmatpush.msra.mxu0 0.0
    %299 = vmatpush.msra.mxu0 0.0
    %300 = vmatpush.msra.mxu0 0.0
    %301 = vmatpush.msra.mxu0 0.0
    %302 = vmatpush.msra.mxu0 0.0
    %303 = vmatpush.msra.mxu0 %v266
    %304 = vmatpush.msra.mxu0 %v264
    %305 = vmatpush.msra.mxu0 %v262
    %306 = vmatpush.msra.mxu0 %v260
    %307 = vmatpush.msra.mxu0 %v258
    %308 = vmatpush.msra.mxu0 %v256
    %309 = vmatpush.msra.mxu0 %v254
    %310 = vmatpush.msra.mxu0 %v252
    %311 = vmatmul.f32.gmra.mxu0 %v273
    %v312 = vpop.f32.mrf.mxu0
    %v313 = vadd.f32 0.0, %v312
    %314 = vdwg.mxu0
    %v315 = vadd.f32 %v270, %v293
    %v316 = vadd.f32 %v271, %v313
    %v317 = vxor.u32 %v315, 2147483648
    %v318 = vxor.u32 %v316, 2147483648
    %v319 = vmul.f32 %v317, 1.442695
    %v320 = vpow.pop %v319
    %v321 = vmul.f32 %v318, 1.442695
    %v322 = vpow.pop %v321
    %v323 = vadd.f32 %v320, 1.0
    %v324 = vadd.f32 %v322, 1.0
    %v325 = vrcp.pop %v323
    %v326 = vmul.f32 %v323, %v325
    %v327 = vsub.f32 1.0, %v326
    %v328 = vmul.f32 %v325, %v327
    %v329 = vadd.f32 %v325, %v328
    %vm330 = vweird.f32 %v323
    %vm331 = vweird.f32 %v325
    %vm332 = vmor %vm330, %vm331
    %v333 = vsel %vm332, %v325, %v329
    %v334 = vand.u32 2147483647, %v323
    %vm335 = vcmp.eq.f32.partialorder %v334, 8.507059e+37
    %v336 = vand.u32 %v323, 2147483648
    %v337 = vor.u32 1.1754944e-38, %v336
    %v338 = vsel %vm335, %v337, %v333
    %v339 = vmul.f32 1.0, %v338
    %v340 = vrcp.pop %v324
    %v341 = vmul.f32 %v324, %v340
    %v342 = vsub.f32 1.0, %v341
    %v343 = vmul.f32 %v340, %v342
    %v344 = vadd.f32 %v340, %v343
    %vm345 = vweird.f32 %v324
    %vm346 = vweird.f32 %v340
    %vm347 = vmor %vm345, %vm346
    %v348 = vsel %vm347, %v340, %v344
    %v349 = vand.u32 2147483647, %v324
    %vm350 = vcmp.eq.f32.partialorder %v349, 8.507059e+37
    %v351 = vand.u32 %v324, 2147483648
    %v352 = vor.u32 1.1754944e-38, %v351
    %v353 = vsel %vm350, %v352, %v348
    %v354 = vmul.f32 1.0, %v353
    %v355 = vtanh.pop %v315
    %v356 = vtanh.pop %v316
    %v357 = vmul.f32 %v339, 0.0
    %359 = vrot.lane.b32.xlu0 %v355, 32
    %v360 = vpop.permute.xlu0 %359
    %v362 = vmul.f32 %v339, %v360
    %364 = vrot.lane.b32.xlu0 %v362, 32
    %v365 = vpop.permute.xlu0 %364
    %v367 = vadd.f32 %v357, %v365
    %v368 = vmul.f32 %v354, 0.0
    %370 = vrot.lane.b32.xlu0 %v356, 32
    %v371 = vpop.permute.xlu0 %370
    %v373 = vmul.f32 %v354, %v371
    %375 = vrot.lane.b32.xlu0 %v373, 32
    %v376 = vpop.permute.xlu0 %375
    %v378 = vadd.f32 %v368, %v376
    %v379 = vtanh.pop %v367
    %381 = vrot.lane.b32.xlu0 %v379, 32
    %v382 = vpop.permute.xlu0 %381
    %v384 = vmul.f32 %v339, %v382
    %v385 = vtanh.pop %v378
    %387 = vrot.lane.b32.xlu0 %v385, 32
    %v388 = vpop.permute.xlu0 %387
    %v390 = vmul.f32 %v354, %v388
    %392 = vrot.lane.b32.xlu0 %v384, 64
    %v393 = vpop.permute.xlu0 %392
    %vm395 = vcmask 261120
    %396 = vst.msk [vmem:[#allocation3] sm:$0xff] %vm395, %v393
    %398 = vrot.lane.b32.xlu0 %v390, 96
    %v399 = vpop.permute.xlu0 %398
    %s401 = scalar_lea.vmem [#allocation3], 56
    %vm402 = vcmask 523520
    %403 = vst.msk [vmem:[%s401] sm:$0xff] %vm402, %v399
    %v404 = vsel %vm395, %v393, %v399
    %s405 = smul.u32 1, 2
    %s406 = smul.addr %s405, 8
    %s407 = scalar_lea.vmem [#allocation2], %s406
    %v408 = vld [vmem:[%s407] sm:$0xff]
    %v409 = vld [vmem:[%s407 + $0x8] sm:$0xff]
    %v411 = vsel %vm128, %v404, 0
    %413 = vmatpush.msra.mxu0 0.0
    %414 = vmatpush.msra.mxu0 0.0
    %415 = vmatpush.msra.mxu0 0.0
    %416 = vmatpush.msra.mxu0 0.0
    %417 = vmatpush.msra.mxu0 0.0
    %418 = vmatpush.msra.mxu0 0.0
    %419 = vmatpush.msra.mxu0 0.0
    %420 = vmatpush.msra.mxu0 0.0
    %421 = vmatpush.msra.mxu0 %v265
    %422 = vmatpush.msra.mxu0 %v263
    %423 = vmatpush.msra.mxu0 %v261
    %424 = vmatpush.msra.mxu0 %v259
    %425 = vmatpush.msra.mxu0 %v257
    %426 = vmatpush.msra.mxu0 %v255
    %427 = vmatpush.msra.mxu0 %v253
    %428 = vmatpush.msra.mxu0 %v251
    %429 = vmatmul.f32.gmra.mxu0 %v411
    %v430 = vpop.f32.mrf.mxu0
    %v431 = vadd.f32 0.0, %v430
    %432 = vdwg.mxu0
    %433 = vmatpush.msra.mxu0 0.0
    %434 = vmatpush.msra.mxu0 0.0
    %435 = vmatpush.msra.mxu0 0.0
    %436 = vmatpush.msra.mxu0 0.0
    %437 = vmatpush.msra.mxu0 0.0
    %438 = vmatpush.msra.mxu0 0.0
    %439 = vmatpush.msra.mxu0 0.0
    %440 = vmatpush.msra.mxu0 0.0
    %441 = vmatpush.msra.mxu0 %v266
    %442 = vmatpush.msra.mxu0 %v264
    %443 = vmatpush.msra.mxu0 %v262
    %444 = vmatpush.msra.mxu0 %v260
    %445 = vmatpush.msra.mxu0 %v258
    %446 = vmatpush.msra.mxu0 %v256
    %447 = vmatpush.msra.mxu0 %v254
    %448 = vmatpush.msra.mxu0 %v252
    %449 = vmatmul.f32.gmra.mxu0 %v411
    %v450 = vpop.f32.mrf.mxu0
    %v451 = vadd.f32 0.0, %v450
    %452 = vdwg.mxu0
    %v453 = vadd.f32 %v408, %v431
    %v454 = vadd.f32 %v409, %v451
    %v455 = vxor.u32 %v453, 2147483648
    %v456 = vxor.u32 %v454, 2147483648
    %v457 = vmul.f32 %v455, 1.442695
    %v458 = vpow.pop %v457
    %v459 = vmul.f32 %v456, 1.442695
    %v460 = vpow.pop %v459
    %v461 = vadd.f32 %v458, 1.0
    %v462 = vadd.f32 %v460, 1.0
    %v463 = vrcp.pop %v461
    %v464 = vmul.f32 %v461, %v463
    %v465 = vsub.f32 1.0, %v464
    %v466 = vmul.f32 %v463, %v465
    %v467 = vadd.f32 %v463, %v466
    %vm468 = vweird.f32 %v461
    %vm469 = vweird.f32 %v463
    %vm470 = vmor %vm468, %vm469
    %v471 = vsel %vm470, %v463, %v467
    %v472 = vand.u32 2147483647, %v461
    %vm473 = vcmp.eq.f32.partialorder %v472, 8.507059e+37
    %v474 = vand.u32 %v461, 2147483648
    %v475 = vor.u32 1.1754944e-38, %v474
    %v476 = vsel %vm473, %v475, %v471
    %v477 = vmul.f32 1.0, %v476
    %v478 = vrcp.pop %v462
    %v479 = vmul.f32 %v462, %v478
    %v480 = vsub.f32 1.0, %v479
    %v481 = vmul.f32 %v478, %v480
    %v482 = vadd.f32 %v478, %v481
    %vm483 = vweird.f32 %v462
    %vm484 = vweird.f32 %v478
    %vm485 = vmor %vm483, %vm484
    %v486 = vsel %vm485, %v478, %v482
    %v487 = vand.u32 2147483647, %v462
    %vm488 = vcmp.eq.f32.partialorder %v487, 8.507059e+37
    %v489 = vand.u32 %v462, 2147483648
    %v490 = vor.u32 1.1754944e-38, %v489
    %v491 = vsel %vm488, %v490, %v486
    %v492 = vmul.f32 1.0, %v491
    %v493 = vtanh.pop %v453
    %v494 = vtanh.pop %v454
    %v495 = vmul.f32 %v477, %v367
    %497 = vrot.lane.b32.xlu0 %v493, 32
    %v498 = vpop.permute.xlu0 %497
    %v500 = vmul.f32 %v477, %v498
    %502 = vrot.lane.b32.xlu0 %v500, 32
    %v503 = vpop.permute.xlu0 %502
    %v505 = vadd.f32 %v495, %v503
    %v506 = vmul.f32 %v492, %v378
    %508 = vrot.lane.b32.xlu0 %v494, 32
    %v509 = vpop.permute.xlu0 %508
    %v511 = vmul.f32 %v492, %v509
    %513 = vrot.lane.b32.xlu0 %v511, 32
    %v514 = vpop.permute.xlu0 %513
    %v516 = vadd.f32 %v506, %v514
    %v517 = vtanh.pop %v505
    %519 = vrot.lane.b32.xlu0 %v517, 32
    %v520 = vpop.permute.xlu0 %519
    %v522 = vmul.f32 %v477, %v520
    %v523 = vtanh.pop %v516
    %525 = vrot.lane.b32.xlu0 %v523, 32
    %v526 = vpop.permute.xlu0 %525
    %v528 = vmul.f32 %v492, %v526
    %530 = vrot.lane.b32.xlu0 %v522, 64
    %v531 = vpop.permute.xlu0 %530
    %s533 = scalar_lea.vmem [#allocation3], 8
    %534 = vst.msk [vmem:[%s533] sm:$0xff] %vm395, %v531
    %536 = vrot.lane.b32.xlu0 %v528, 96
    %v537 = vpop.permute.xlu0 %536
    %s539 = scalar_lea.vmem [#allocation3], 48
    %540 = vst.msk [vmem:[%s539] sm:$0xff] %vm402, %v537
    %v541 = vsel %vm395, %v531, %v537
    %s542 = smul.u32 2, 2
    %s543 = smul.addr %s542, 8
    %s544 = scalar_lea.vmem [#allocation2], %s543
    %v545 = vld [vmem:[%s544] sm:$0xff]
    %v546 = vld [vmem:[%s544 + $0x8] sm:$0xff]
    %v548 = vsel %vm128, %v541, 0
    %550 = vmatpush.msra.mxu0 0.0
    %551 = vmatpush.msra.mxu0 0.0
    %552 = vmatpush.msra.mxu0 0.0
    %553 = vmatpush.msra.mxu0 0.0
    %554 = vmatpush.msra.mxu0 0.0
    %555 = vmatpush.msra.mxu0 0.0
    %556 = vmatpush.msra.mxu0 0.0
    %557 = vmatpush.msra.mxu0 0.0
    %558 = vmatpush.msra.mxu0 %v265
    %559 = vmatpush.msra.mxu0 %v263
    %560 = vmatpush.msra.mxu0 %v261
    %561 = vmatpush.msra.mxu0 %v259
    %562 = vmatpush.msra.mxu0 %v257
    %563 = vmatpush.msra.mxu0 %v255
    %564 = vmatpush.msra.mxu0 %v253
    %565 = vmatpush.msra.mxu0 %v251
    %566 = vmatmul.f32.gmra.mxu0 %v548
    %v567 = vpop.f32.mrf.mxu0
    %v568 = vadd.f32 0.0, %v567
    %569 = vdwg.mxu0
    %570 = vmatpush.msra.mxu0 0.0
    %571 = vmatpush.msra.mxu0 0.0
    %572 = vmatpush.msra.mxu0 0.0
    %573 = vmatpush.msra.mxu0 0.0
    %574 = vmatpush.msra.mxu0 0.0
    %575 = vmatpush.msra.mxu0 0.0
    %576 = vmatpush.msra.mxu0 0.0
    %577 = vmatpush.msra.mxu0 0.0
    %578 = vmatpush.msra.mxu0 %v266
    %579 = vmatpush.msra.mxu0 %v264
    %580 = vmatpush.msra.mxu0 %v262
    %581 = vmatpush.msra.mxu0 %v260
    %582 = vmatpush.msra.mxu0 %v258
    %583 = vmatpush.msra.mxu0 %v256
    %584 = vmatpush.msra.mxu0 %v254
    %585 = vmatpush.msra.mxu0 %v252
    %586 = vmatmul.f32.gmra.mxu0 %v548
    %v587 = vpop.f32.mrf.mxu0
    %v588 = vadd.f32 0.0, %v587
    %589 = vdwg.mxu0
    %v590 = vadd.f32 %v545, %v568
    %v591 = vadd.f32 %v546, %v588
    %v592 = vxor.u32 %v590, 2147483648
    %v593 = vxor.u32 %v591, 2147483648
    %v594 = vmul.f32 %v592, 1.442695
    %v595 = vpow.pop %v594
    %v596 = vmul.f32 %v593, 1.442695
    %v597 = vpow.pop %v596
    %v598 = vadd.f32 %v595, 1.0
    %v599 = vadd.f32 %v597, 1.0
    %v600 = vrcp.pop %v598
    %v601 = vmul.f32 %v598, %v600
    %v602 = vsub.f32 1.0, %v601
    %v603 = vmul.f32 %v600, %v602
    %v604 = vadd.f32 %v600, %v603
    %vm605 = vweird.f32 %v598
    %vm606 = vweird.f32 %v600
    %vm607 = vmor %vm605, %vm606
    %v608 = vsel %vm607, %v600, %v604
    %v609 = vand.u32 2147483647, %v598
    %vm610 = vcmp.eq.f32.partialorder %v609, 8.507059e+37
    %v611 = vand.u32 %v598, 2147483648
    %v612 = vor.u32 1.1754944e-38, %v611
    %v613 = vsel %vm610, %v612, %v608
    %v614 = vmul.f32 1.0, %v613
    %v615 = vrcp.pop %v599
    %v616 = vmul.f32 %v599, %v615
    %v617 = vsub.f32 1.0, %v616
    %v618 = vmul.f32 %v615, %v617
    %v619 = vadd.f32 %v615, %v618
    %vm620 = vweird.f32 %v599
    %vm621 = vweird.f32 %v615
    %vm622 = vmor %vm620, %vm621
    %v623 = vsel %vm622, %v615, %v619
    %v624 = vand.u32 2147483647, %v599
    %vm625 = vcmp.eq.f32.partialorder %v624, 8.507059e+37
    %v626 = vand.u32 %v599, 2147483648
    %v627 = vor.u32 1.1754944e-38, %v626
    %v628 = vsel %vm625, %v627, %v623
    %v629 = vmul.f32 1.0, %v628
    %v630 = vtanh.pop %v590
    %v631 = vtanh.pop %v591
    %v632 = vmul.f32 %v614, %v505
    %634 = vrot.lane.b32.xlu0 %v630, 32
    %v635 = vpop.permute.xlu0 %634
    %v637 = vmul.f32 %v614, %v635
    %639 = vrot.lane.b32.xlu0 %v637, 32
    %v640 = vpop.permute.xlu0 %639
    %v642 = vadd.f32 %v632, %v640
    %v643 = vmul.f32 %v629, %v516
    %645 = vrot.lane.b32.xlu0 %v631, 32
    %v646 = vpop.permute.xlu0 %645
    %v648 = vmul.f32 %v629, %v646
    %650 = vrot.lane.b32.xlu0 %v648, 32
    %v651 = vpop.permute.xlu0 %650
    %v653 = vadd.f32 %v643, %v651
    %v654 = vtanh.pop %v642
    %656 = vrot.lane.b32.xlu0 %v654, 32
    %v657 = vpop.permute.xlu0 %656
    %v659 = vmul.f32 %v614, %v657
    %v660 = vtanh.pop %v653
    %662 = vrot.lane.b32.xlu0 %v660, 32
    %v663 = vpop.permute.xlu0 %662
    %v665 = vmul.f32 %v629, %v663
    %667 = vrot.lane.b32.xlu0 %v659, 64
    %v668 = vpop.permute.xlu0 %667
    %s670 = scalar_lea.vmem [#allocation3], 16
    %671 = vst.msk [vmem:[%s670] sm:$0xff] %vm395, %v668
    %673 = vrot.lane.b32.xlu0 %v665, 96
    %v674 = vpop.permute.xlu0 %673
    %s676 = scalar_lea.vmem [#allocation3], 40
    %677 = vst.msk [vmem:[%s676] sm:$0xff] %vm402, %v674
    %v678 = vsel %vm395, %v668, %v674
    %s679 = smul.u32 3, 2
    %s680 = smul.addr %s679, 8
    %s681 = scalar_lea.vmem [#allocation2], %s680
    %v682 = vld [vmem:[%s681] sm:$0xff]
    %v683 = vld [vmem:[%s681 + $0x8] sm:$0xff]
    %v685 = vsel %vm128, %v678, 0
    %687 = vmatpush.msra.mxu0 0.0
    %688 = vmatpush.msra.mxu0 0.0
    %689 = vmatpush.msra.mxu0 0.0
    %690 = vmatpush.msra.mxu0 0.0
    %691 = vmatpush.msra.mxu0 0.0
    %692 = vmatpush.msra.mxu0 0.0
    %693 = vmatpush.msra.mxu0 0.0
    %694 = vmatpush.msra.mxu0 0.0
    %695 = vmatpush.msra.mxu0 %v265
    %696 = vmatpush.msra.mxu0 %v263
    %697 = vmatpush.msra.mxu0 %v261
    %698 = vmatpush.msra.mxu0 %v259
    %699 = vmatpush.msra.mxu0 %v257
    %700 = vmatpush.msra.mxu0 %v255
    %701 = vmatpush.msra.mxu0 %v253
    %702 = vmatpush.msra.mxu0 %v251
    %703 = vmatmul.f32.gmra.mxu0 %v685
    %v704 = vpop.f32.mrf.mxu0
    %v705 = vadd.f32 0.0, %v704
    %706 = vdwg.mxu0
    %707 = vmatpush.msra.mxu0 0.0
    %708 = vmatpush.msra.mxu0 0.0
    %709 = vmatpush.msra.mxu0 0.0
    %710 = vmatpush.msra.mxu0 0.0
    %711 = vmatpush.msra.mxu0 0.0
    %712 = vmatpush.msra.mxu0 0.0
    %713 = vmatpush.msra.mxu0 0.0
    %714 = vmatpush.msra.mxu0 0.0
    %715 = vmatpush.msra.mxu0 %v266
    %716 = vmatpush.msra.mxu0 %v264
    %717 = vmatpush.msra.mxu0 %v262
    %718 = vmatpush.msra.mxu0 %v260
    %719 = vmatpush.msra.mxu0 %v258
    %720 = vmatpush.msra.mxu0 %v256
    %721 = vmatpush.msra.mxu0 %v254
    %722 = vmatpush.msra.mxu0 %v252
    %723 = vmatmul.f32.gmra.mxu0 %v685
    %v724 = vpop.f32.mrf.mxu0
    %v725 = vadd.f32 0.0, %v724
    %726 = vdwg.mxu0
    %v727 = vadd.f32 %v682, %v705
    %v728 = vadd.f32 %v683, %v725
    %v729 = vxor.u32 %v727, 2147483648
    %v730 = vxor.u32 %v728, 2147483648
    %v731 = vmul.f32 %v729, 1.442695
    %v732 = vpow.pop %v731
    %v733 = vmul.f32 %v730, 1.442695
    %v734 = vpow.pop %v733
    %v735 = vadd.f32 %v732, 1.0
    %v736 = vadd.f32 %v734, 1.0
    %v737 = vrcp.pop %v735
    %v738 = vmul.f32 %v735, %v737
    %v739 = vsub.f32 1.0, %v738
    %v740 = vmul.f32 %v737, %v739
    %v741 = vadd.f32 %v737, %v740
    %vm742 = vweird.f32 %v735
    %vm743 = vweird.f32 %v737
    %vm744 = vmor %vm742, %vm743
    %v745 = vsel %vm744, %v737, %v741
    %v746 = vand.u32 2147483647, %v735
    %vm747 = vcmp.eq.f32.partialorder %v746, 8.507059e+37
    %v748 = vand.u32 %v735, 2147483648
    %v749 = vor.u32 1.1754944e-38, %v748
    %v750 = vsel %vm747, %v749, %v745
    %v751 = vmul.f32 1.0, %v750
    %v752 = vrcp.pop %v736
    %v753 = vmul.f32 %v736, %v752
    %v754 = vsub.f32 1.0, %v753
    %v755 = vmul.f32 %v752, %v754
    %v756 = vadd.f32 %v752, %v755
    %vm757 = vweird.f32 %v736
    %vm758 = vweird.f32 %v752
    %vm759 = vmor %vm757, %vm758
    %v760 = vsel %vm759, %v752, %v756
    %v761 = vand.u32 2147483647, %v736
    %vm762 = vcmp.eq.f32.partialorder %v761, 8.507059e+37
    %v763 = vand.u32 %v736, 2147483648
    %v764 = vor.u32 1.1754944e-38, %v763
    %v765 = vsel %vm762, %v764, %v760
    %v766 = vmul.f32 1.0, %v765
    %v767 = vtanh.pop %v727
    %v768 = vtanh.pop %v728
    %v769 = vmul.f32 %v751, %v642
    %771 = vrot.lane.b32.xlu0 %v767, 32
    %v772 = vpop.permute.xlu0 %771
    %v774 = vmul.f32 %v751, %v772
    %776 = vrot.lane.b32.xlu0 %v774, 32
    %v777 = vpop.permute.xlu0 %776
    %v779 = vadd.f32 %v769, %v777
    %v780 = vmul.f32 %v766, %v653
    %782 = vrot.lane.b32.xlu0 %v768, 32
    %v783 = vpop.permute.xlu0 %782
    %v785 = vmul.f32 %v766, %v783
    %787 = vrot.lane.b32.xlu0 %v785, 32
    %v788 = vpop.permute.xlu0 %787
    %v790 = vadd.f32 %v780, %v788
    %v791 = vtanh.pop %v779
    %793 = vrot.lane.b32.xlu0 %v791, 32
    %v794 = vpop.permute.xlu0 %793
    %v796 = vmul.f32 %v751, %v794
    %v797 = vtanh.pop %v790
    %799 = vrot.lane.b32.xlu0 %v797, 32
    %v800 = vpop.permute.xlu0 %799
    %v802 = vmul.f32 %v766, %v800
    %804 = vrot.lane.b32.xlu0 %v796, 64
    %v805 = vpop.permute.xlu0 %804
    %s807 = scalar_lea.vmem [#allocation3], 24
    %808 = vst.msk [vmem:[%s807] sm:$0xff] %vm395, %v805
    %810 = vrot.lane.b32.xlu0 %v802, 96
    %v811 = vpop.permute.xlu0 %810
    %s813 = scalar_lea.vmem [#allocation3], 32
    %814 = vst.msk [vmem:[%s813] sm:$0xff] %vm402, %v811
    %v815 = vsel %vm395, %v805, %v811
    %s816 = smul.u32 4, 2
    %s817 = smul.addr %s816, 8
    %s818 = scalar_lea.vmem [#allocation2], %s817
    %v819 = vld [vmem:[%s818] sm:$0xff]
    %v820 = vld [vmem:[%s818 + $0x8] sm:$0xff]
    %v822 = vsel %vm128, %v815, 0
    %824 = vmatpush.msra.mxu0 0.0
    %825 = vmatpush.msra.mxu0 0.0
    %826 = vmatpush.msra.mxu0 0.0
    %827 = vmatpush.msra.mxu0 0.0
    %828 = vmatpush.msra.mxu0 0.0
    %829 = vmatpush.msra.mxu0 0.0
    %830 = vmatpush.msra.mxu0 0.0
    %831 = vmatpush.msra.mxu0 0.0
    %832 = vmatpush.msra.mxu0 %v265
    %833 = vmatpush.msra.mxu0 %v263
    %834 = vmatpush.msra.mxu0 %v261
    %835 = vmatpush.msra.mxu0 %v259
    %836 = vmatpush.msra.mxu0 %v257
    %837 = vmatpush.msra.mxu0 %v255
    %838 = vmatpush.msra.mxu0 %v253
    %839 = vmatpush.msra.mxu0 %v251
    %840 = vmatmul.f32.gmra.mxu0 %v822
    %v841 = vpop.f32.mrf.mxu0
    %v842 = vadd.f32 0.0, %v841
    %843 = vdwg.mxu0
    %844 = vmatpush.msra.mxu0 0.0
    %845 = vmatpush.msra.mxu0 0.0
    %846 = vmatpush.msra.mxu0 0.0
    %847 = vmatpush.msra.mxu0 0.0
    %848 = vmatpush.msra.mxu0 0.0
    %849 = vmatpush.msra.mxu0 0.0
    %850 = vmatpush.msra.mxu0 0.0
    %851 = vmatpush.msra.mxu0 0.0
    %852 = vmatpush.msra.mxu0 %v266
    %853 = vmatpush.msra.mxu0 %v264
    %854 = vmatpush.msra.mxu0 %v262
    %855 = vmatpush.msra.mxu0 %v260
    %856 = vmatpush.msra.mxu0 %v258
    %857 = vmatpush.msra.mxu0 %v256
    %858 = vmatpush.msra.mxu0 %v254
    %859 = vmatpush.msra.mxu0 %v252
    %860 = vmatmul.f32.gmra.mxu0 %v822
    %v861 = vpop.f32.mrf.mxu0
    %v862 = vadd.f32 0.0, %v861
    %863 = vdwg.mxu0
    %v864 = vadd.f32 %v819, %v842
    %v865 = vadd.f32 %v820, %v862
    %v866 = vxor.u32 %v864, 2147483648
    %v867 = vxor.u32 %v865, 2147483648
    %v868 = vmul.f32 %v866, 1.442695
    %v869 = vpow.pop %v868
    %v870 = vmul.f32 %v867, 1.442695
    %v871 = vpow.pop %v870
    %v872 = vadd.f32 %v869, 1.0
    %v873 = vadd.f32 %v871, 1.0
    %v874 = vrcp.pop %v872
    %v875 = vmul.f32 %v872, %v874
    %v876 = vsub.f32 1.0, %v875
    %v877 = vmul.f32 %v874, %v876
    %v878 = vadd.f32 %v874, %v877
    %vm879 = vweird.f32 %v872
    %vm880 = vweird.f32 %v874
    %vm881 = vmor %vm879, %vm880
    %v882 = vsel %vm881, %v874, %v878
    %v883 = vand.u32 2147483647, %v872
    %vm884 = vcmp.eq.f32.partialorder %v883, 8.507059e+37
    %v885 = vand.u32 %v872, 2147483648
    %v886 = vor.u32 1.1754944e-38, %v885
    %v887 = vsel %vm884, %v886, %v882
    %v888 = vmul.f32 1.0, %v887
    %v889 = vrcp.pop %v873
    %v890 = vmul.f32 %v873, %v889
    %v891 = vsub.f32 1.0, %v890
    %v892 = vmul.f32 %v889, %v891
    %v893 = vadd.f32 %v889, %v892
    %vm894 = vweird.f32 %v873
    %vm895 = vweird.f32 %v889
    %vm896 = vmor %vm894, %vm895
    %v897 = vsel %vm896, %v889, %v893
    %v898 = vand.u32 2147483647, %v873
    %vm899 = vcmp.eq.f32.partialorder %v898, 8.507059e+37
    %v900 = vand.u32 %v873, 2147483648
    %v901 = vor.u32 1.1754944e-38, %v900
    %v902 = vsel %vm899, %v901, %v897
    %v903 = vmul.f32 1.0, %v902
    %v904 = vtanh.pop %v864
    %v905 = vtanh.pop %v865
    %v906 = vmul.f32 %v888, %v779
    %908 = vrot.lane.b32.xlu0 %v904, 32
    %v909 = vpop.permute.xlu0 %908
    %v911 = vmul.f32 %v888, %v909
    %913 = vrot.lane.b32.xlu0 %v911, 32
    %v914 = vpop.permute.xlu0 %913
    %v916 = vadd.f32 %v906, %v914
    %v917 = vmul.f32 %v903, %v790
    %919 = vrot.lane.b32.xlu0 %v905, 32
    %v920 = vpop.permute.xlu0 %919
    %v922 = vmul.f32 %v903, %v920
    %924 = vrot.lane.b32.xlu0 %v922, 32
    %v925 = vpop.permute.xlu0 %924
    %v927 = vadd.f32 %v917, %v925
    %v928 = vtanh.pop %v916
    %930 = vrot.lane.b32.xlu0 %v928, 32
    %v931 = vpop.permute.xlu0 %930
    %v933 = vmul.f32 %v888, %v931
    %v934 = vtanh.pop %v927
    %936 = vrot.lane.b32.xlu0 %v934, 32
    %v937 = vpop.permute.xlu0 %936
    %v939 = vmul.f32 %v903, %v937
    %941 = vrot.lane.b32.xlu0 %v933, 64
    %v942 = vpop.permute.xlu0 %941
    %944 = vst.msk [vmem:[%s813] sm:$0xff] %vm395, %v942
    %946 = vrot.lane.b32.xlu0 %v939, 96
    %v947 = vpop.permute.xlu0 %946
    %949 = vst.msk [vmem:[%s807] sm:$0xff] %vm402, %v947
    %v950 = vsel %vm395, %v942, %v947
    %s951 = smul.u32 5, 2
    %s952 = smul.addr %s951, 8
    %s953 = scalar_lea.vmem [#allocation2], %s952
    %v954 = vld [vmem:[%s953] sm:$0xff]
    %v955 = vld [vmem:[%s953 + $0x8] sm:$0xff]
    %v957 = vsel %vm128, %v950, 0
    %959 = vmatpush.msra.mxu0 0.0
    %960 = vmatpush.msra.mxu0 0.0
    %961 = vmatpush.msra.mxu0 0.0
    %962 = vmatpush.msra.mxu0 0.0
    %963 = vmatpush.msra.mxu0 0.0
    %964 = vmatpush.msra.mxu0 0.0
    %965 = vmatpush.msra.mxu0 0.0
    %966 = vmatpush.msra.mxu0 0.0
    %967 = vmatpush.msra.mxu0 %v265
    %968 = vmatpush.msra.mxu0 %v263
    %969 = vmatpush.msra.mxu0 %v261
    %970 = vmatpush.msra.mxu0 %v259
    %971 = vmatpush.msra.mxu0 %v257
    %972 = vmatpush.msra.mxu0 %v255
    %973 = vmatpush.msra.mxu0 %v253
    %974 = vmatpush.msra.mxu0 %v251
    %975 = vmatmul.f32.gmra.mxu0 %v957
    %v976 = vpop.f32.mrf.mxu0
    %v977 = vadd.f32 0.0, %v976
    %978 = vdwg.mxu0
    %979 = vmatpush.msra.mxu0 0.0
    %980 = vmatpush.msra.mxu0 0.0
    %981 = vmatpush.msra.mxu0 0.0
    %982 = vmatpush.msra.mxu0 0.0
    %983 = vmatpush.msra.mxu0 0.0
    %984 = vmatpush.msra.mxu0 0.0
    %985 = vmatpush.msra.mxu0 0.0
    %986 = vmatpush.msra.mxu0 0.0
    %987 = vmatpush.msra.mxu0 %v266
    %988 = vmatpush.msra.mxu0 %v264
    %989 = vmatpush.msra.mxu0 %v262
    %990 = vmatpush.msra.mxu0 %v260
    %991 = vmatpush.msra.mxu0 %v258
    %992 = vmatpush.msra.mxu0 %v256
    %993 = vmatpush.msra.mxu0 %v254
    %994 = vmatpush.msra.mxu0 %v252
    %995 = vmatmul.f32.gmra.mxu0 %v957
    %v996 = vpop.f32.mrf.mxu0
    %v997 = vadd.f32 0.0, %v996
    %998 = vdwg.mxu0
    %v999 = vadd.f32 %v954, %v977
    %v1000 = vadd.f32 %v955, %v997
    %v1001 = vxor.u32 %v999, 2147483648
    %v1002 = vxor.u32 %v1000, 2147483648
    %v1003 = vmul.f32 %v1001, 1.442695
    %v1004 = vpow.pop %v1003
    %v1005 = vmul.f32 %v1002, 1.442695
    %v1006 = vpow.pop %v1005
    %v1007 = vadd.f32 %v1004, 1.0
    %v1008 = vadd.f32 %v1006, 1.0
    %v1009 = vrcp.pop %v1007
    %v1010 = vmul.f32 %v1007, %v1009
    %v1011 = vsub.f32 1.0, %v1010
    %v1012 = vmul.f32 %v1009, %v1011
    %v1013 = vadd.f32 %v1009, %v1012
    %vm1014 = vweird.f32 %v1007
    %vm1015 = vweird.f32 %v1009
    %vm1016 = vmor %vm1014, %vm1015
    %v1017 = vsel %vm1016, %v1009, %v1013
    %v1018 = vand.u32 2147483647, %v1007
    %vm1019 = vcmp.eq.f32.partialorder %v1018, 8.507059e+37
    %v1020 = vand.u32 %v1007, 2147483648
    %v1021 = vor.u32 1.1754944e-38, %v1020
    %v1022 = vsel %vm1019, %v1021, %v1017
    %v1023 = vmul.f32 1.0, %v1022
    %v1024 = vrcp.pop %v1008
    %v1025 = vmul.f32 %v1008, %v1024
    %v1026 = vsub.f32 1.0, %v1025
    %v1027 = vmul.f32 %v1024, %v1026
    %v1028 = vadd.f32 %v1024, %v1027
    %vm1029 = vweird.f32 %v1008
    %vm1030 = vweird.f32 %v1024
    %vm1031 = vmor %vm1029, %vm1030
    %v1032 = vsel %vm1031, %v1024, %v1028
    %v1033 = vand.u32 2147483647, %v1008
    %vm1034 = vcmp.eq.f32.partialorder %v1033, 8.507059e+37
    %v1035 = vand.u32 %v1008, 2147483648
    %v1036 = vor.u32 1.1754944e-38, %v1035
    %v1037 = vsel %vm1034, %v1036, %v1032
    %v1038 = vmul.f32 1.0, %v1037
    %v1039 = vtanh.pop %v999
    %v1040 = vtanh.pop %v1000
    %v1041 = vmul.f32 %v1023, %v916
    %1043 = vrot.lane.b32.xlu0 %v1039, 32
    %v1044 = vpop.permute.xlu0 %1043
    %v1046 = vmul.f32 %v1023, %v1044
    %1048 = vrot.lane.b32.xlu0 %v1046, 32
    %v1049 = vpop.permute.xlu0 %1048
    %v1051 = vadd.f32 %v1041, %v1049
    %v1052 = vmul.f32 %v1038, %v927
    %1054 = vrot.lane.b32.xlu0 %v1040, 32
    %v1055 = vpop.permute.xlu0 %1054
    %v1057 = vmul.f32 %v1038, %v1055
    %1059 = vrot.lane.b32.xlu0 %v1057, 32
    %v1060 = vpop.permute.xlu0 %1059
    %v1062 = vadd.f32 %v1052, %v1060
    %v1063 = vtanh.pop %v1051
    %1065 = vrot.lane.b32.xlu0 %v1063, 32
    %v1066 = vpop.permute.xlu0 %1065
    %v1068 = vmul.f32 %v1023, %v1066
    %v1069 = vtanh.pop %v1062
    %1071 = vrot.lane.b32.xlu0 %v1069, 32
    %v1072 = vpop.permute.xlu0 %1071
    %v1074 = vmul.f32 %v1038, %v1072
    %1076 = vrot.lane.b32.xlu0 %v1068, 64
    %v1077 = vpop.permute.xlu0 %1076
    %1079 = vst.msk [vmem:[%s676] sm:$0xff] %vm395, %v1077
    %1081 = vrot.lane.b32.xlu0 %v1074, 96
    %v1082 = vpop.permute.xlu0 %1081
    %1084 = vst.msk [vmem:[%s670] sm:$0xff] %vm402, %v1082
    %v1085 = vsel %vm395, %v1077, %v1082
    %s1086 = smul.u32 6, 2
    %s1087 = smul.addr %s1086, 8
    %s1088 = scalar_lea.vmem [#allocation2], %s1087
    %v1089 = vld [vmem:[%s1088] sm:$0xff]
    %v1090 = vld [vmem:[%s1088 + $0x8] sm:$0xff]
    %v1092 = vsel %vm128, %v1085, 0
    %1094 = vmatpush.msra.mxu0 0.0
    %1095 = vmatpush.msra.mxu0 0.0
    %1096 = vmatpush.msra.mxu0 0.0
    %1097 = vmatpush.msra.mxu0 0.0
    %1098 = vmatpush.msra.mxu0 0.0
    %1099 = vmatpush.msra.mxu0 0.0
    %1100 = vmatpush.msra.mxu0 0.0
    %1101 = vmatpush.msra.mxu0 0.0
    %1102 = vmatpush.msra.mxu0 %v265
    %1103 = vmatpush.msra.mxu0 %v263
    %1104 = vmatpush.msra.mxu0 %v261
    %1105 = vmatpush.msra.mxu0 %v259
    %1106 = vmatpush.msra.mxu0 %v257
    %1107 = vmatpush.msra.mxu0 %v255
    %1108 = vmatpush.msra.mxu0 %v253
    %1109 = vmatpush.msra.mxu0 %v251
    %1110 = vmatmul.f32.gmra.mxu0 %v1092
    %v1111 = vpop.f32.mrf.mxu0
    %v1112 = vadd.f32 0.0, %v1111
    %1113 = vdwg.mxu0
    %1114 = vmatpush.msra.mxu0 0.0
    %1115 = vmatpush.msra.mxu0 0.0
    %1116 = vmatpush.msra.mxu0 0.0
    %1117 = vmatpush.msra.mxu0 0.0
    %1118 = vmatpush.msra.mxu0 0.0
    %1119 = vmatpush.msra.mxu0 0.0
    %1120 = vmatpush.msra.mxu0 0.0
    %1121 = vmatpush.msra.mxu0 0.0
    %1122 = vmatpush.msra.mxu0 %v266
    %1123 = vmatpush.msra.mxu0 %v264
    %1124 = vmatpush.msra.mxu0 %v262
    %1125 = vmatpush.msra.mxu0 %v260
    %1126 = vmatpush.msra.mxu0 %v258
    %1127 = vmatpush.msra.mxu0 %v256
    %1128 = vmatpush.msra.mxu0 %v254
    %1129 = vmatpush.msra.mxu0 %v252
    %1130 = vmatmul.f32.gmra.mxu0 %v1092
    %v1131 = vpop.f32.mrf.mxu0
    %v1132 = vadd.f32 0.0, %v1131
    %1133 = vdwg.mxu0
    %v1134 = vadd.f32 %v1089, %v1112
    %v1135 = vadd.f32 %v1090, %v1132
    %v1136 = vxor.u32 %v1134, 2147483648
    %v1137 = vxor.u32 %v1135, 2147483648
    %v1138 = vmul.f32 %v1136, 1.442695
    %v1139 = vpow.pop %v1138
    %v1140 = vmul.f32 %v1137, 1.442695
    %v1141 = vpow.pop %v1140
    %v1142 = vadd.f32 %v1139, 1.0
    %v1143 = vadd.f32 %v1141, 1.0
    %v1144 = vrcp.pop %v1142
    %v1145 = vmul.f32 %v1142, %v1144
    %v1146 = vsub.f32 1.0, %v1145
    %v1147 = vmul.f32 %v1144, %v1146
    %v1148 = vadd.f32 %v1144, %v1147
    %vm1149 = vweird.f32 %v1142
    %vm1150 = vweird.f32 %v1144
    %vm1151 = vmor %vm1149, %vm1150
    %v1152 = vsel %vm1151, %v1144, %v1148
    %v1153 = vand.u32 2147483647, %v1142
    %vm1154 = vcmp.eq.f32.partialorder %v1153, 8.507059e+37
    %v1155 = vand.u32 %v1142, 2147483648
    %v1156 = vor.u32 1.1754944e-38, %v1155
    %v1157 = vsel %vm1154, %v1156, %v1152
    %v1158 = vmul.f32 1.0, %v1157
    %v1159 = vrcp.pop %v1143
    %v1160 = vmul.f32 %v1143, %v1159
    %v1161 = vsub.f32 1.0, %v1160
    %v1162 = vmul.f32 %v1159, %v1161
    %v1163 = vadd.f32 %v1159, %v1162
    %vm1164 = vweird.f32 %v1143
    %vm1165 = vweird.f32 %v1159
    %vm1166 = vmor %vm1164, %vm1165
    %v1167 = vsel %vm1166, %v1159, %v1163
    %v1168 = vand.u32 2147483647, %v1143
    %vm1169 = vcmp.eq.f32.partialorder %v1168, 8.507059e+37
    %v1170 = vand.u32 %v1143, 2147483648
    %v1171 = vor.u32 1.1754944e-38, %v1170
    %v1172 = vsel %vm1169, %v1171, %v1167
    %v1173 = vmul.f32 1.0, %v1172
    %v1174 = vtanh.pop %v1134
    %v1175 = vtanh.pop %v1135
    %v1176 = vmul.f32 %v1158, %v1051
    %1178 = vrot.lane.b32.xlu0 %v1174, 32
    %v1179 = vpop.permute.xlu0 %1178
    %v1181 = vmul.f32 %v1158, %v1179
    %1183 = vrot.lane.b32.xlu0 %v1181, 32
    %v1184 = vpop.permute.xlu0 %1183
    %v1186 = vadd.f32 %v1176, %v1184
    %v1187 = vmul.f32 %v1173, %v1062
    %1189 = vrot.lane.b32.xlu0 %v1175, 32
    %v1190 = vpop.permute.xlu0 %1189
    %v1192 = vmul.f32 %v1173, %v1190
    %1194 = vrot.lane.b32.xlu0 %v1192, 32
    %v1195 = vpop.permute.xlu0 %1194
    %v1197 = vadd.f32 %v1187, %v1195
    %v1198 = vtanh.pop %v1186
    %1200 = vrot.lane.b32.xlu0 %v1198, 32
    %v1201 = vpop.permute.xlu0 %1200
    %v1203 = vmul.f32 %v1158, %v1201
    %v1204 = vtanh.pop %v1197
    %1206 = vrot.lane.b32.xlu0 %v1204, 32
    %v1207 = vpop.permute.xlu0 %1206
    %v1209 = vmul.f32 %v1173, %v1207
    %1211 = vrot.lane.b32.xlu0 %v1203, 64
    %v1212 = vpop.permute.xlu0 %1211
    %1214 = vst.msk [vmem:[%s539] sm:$0xff] %vm395, %v1212
    %1216 = vrot.lane.b32.xlu0 %v1209, 96
    %v1217 = vpop.permute.xlu0 %1216
    %1219 = vst.msk [vmem:[%s533] sm:$0xff] %vm402, %v1217
    %v1220 = vsel %vm395, %v1212, %v1217
    %s1221 = smul.u32 7, 2
    %s1222 = smul.addr %s1221, 8
    %s1223 = scalar_lea.vmem [#allocation2], %s1222
    %v1224 = vld [vmem:[%s1223] sm:$0xff]
    %v1225 = vld [vmem:[%s1223 + $0x8] sm:$0xff]
    %v1227 = vsel %vm128, %v1220, 0
    %1229 = vmatpush.msra.mxu0 0.0
    %1230 = vmatpush.msra.mxu0 0.0
    %1231 = vmatpush.msra.mxu0 0.0
    %1232 = vmatpush.msra.mxu0 0.0
    %1233 = vmatpush.msra.mxu0 0.0
    %1234 = vmatpush.msra.mxu0 0.0
    %1235 = vmatpush.msra.mxu0 0.0
    %1236 = vmatpush.msra.mxu0 0.0
    %1237 = vmatpush.msra.mxu0 %v265
    %1238 = vmatpush.msra.mxu0 %v263
    %1239 = vmatpush.msra.mxu0 %v261
    %1240 = vmatpush.msra.mxu0 %v259
    %1241 = vmatpush.msra.mxu0 %v257
    %1242 = vmatpush.msra.mxu0 %v255
    %1243 = vmatpush.msra.mxu0 %v253
    %1244 = vmatpush.msra.mxu0 %v251
    %1245 = vmatmul.f32.gmra.mxu0 %v1227
    %v1246 = vpop.f32.mrf.mxu0
    %v1247 = vadd.f32 0.0, %v1246
    %1248 = vdwg.mxu0
    %1249 = vmatpush.msra.mxu0 0.0
    %1250 = vmatpush.msra.mxu0 0.0
    %1251 = vmatpush.msra.mxu0 0.0
    %1252 = vmatpush.msra.mxu0 0.0
    %1253 = vmatpush.msra.mxu0 0.0
    %1254 = vmatpush.msra.mxu0 0.0
    %1255 = vmatpush.msra.mxu0 0.0
    %1256 = vmatpush.msra.mxu0 0.0
    %1257 = vmatpush.msra.mxu0 %v266
    %1258 = vmatpush.msra.mxu0 %v264
    %1259 = vmatpush.msra.mxu0 %v262
    %1260 = vmatpush.msra.mxu0 %v260
    %1261 = vmatpush.msra.mxu0 %v258
    %1262 = vmatpush.msra.mxu0 %v256
    %1263 = vmatpush.msra.mxu0 %v254
    %1264 = vmatpush.msra.mxu0 %v252
    %1265 = vmatmul.f32.gmra.mxu0 %v1227
    %v1266 = vpop.f32.mrf.mxu0
    %v1267 = vadd.f32 0.0, %v1266
    %1268 = vdwg.mxu0
    %v1269 = vadd.f32 %v1224, %v1247
    %v1270 = vadd.f32 %v1225, %v1267
    %v1271 = vxor.u32 %v1269, 2147483648
    %v1272 = vxor.u32 %v1270, 2147483648
    %v1273 = vmul.f32 %v1271, 1.442695
    %v1274 = vpow.pop %v1273
    %v1275 = vmul.f32 %v1272, 1.442695
    %v1276 = vpow.pop %v1275
    %v1277 = vadd.f32 %v1274, 1.0
    %v1278 = vadd.f32 %v1276, 1.0
    %v1279 = vrcp.pop %v1277
    %v1280 = vmul.f32 %v1277, %v1279
    %v1281 = vsub.f32 1.0, %v1280
    %v1282 = vmul.f32 %v1279, %v1281
    %v1283 = vadd.f32 %v1279, %v1282
    %vm1284 = vweird.f32 %v1277
    %vm1285 = vweird.f32 %v1279
    %vm1286 = vmor %vm1284, %vm1285
    %v1287 = vsel %vm1286, %v1279, %v1283
    %v1288 = vand.u32 2147483647, %v1277
    %vm1289 = vcmp.eq.f32.partialorder %v1288, 8.507059e+37
    %v1290 = vand.u32 %v1277, 2147483648
    %v1291 = vor.u32 1.1754944e-38, %v1290
    %v1292 = vsel %vm1289, %v1291, %v1287
    %v1293 = vmul.f32 1.0, %v1292
    %v1294 = vrcp.pop %v1278
    %v1295 = vmul.f32 %v1278, %v1294
    %v1296 = vsub.f32 1.0, %v1295
    %v1297 = vmul.f32 %v1294, %v1296
    %v1298 = vadd.f32 %v1294, %v1297
    %vm1299 = vweird.f32 %v1278
    %vm1300 = vweird.f32 %v1294
    %vm1301 = vmor %vm1299, %vm1300
    %v1302 = vsel %vm1301, %v1294, %v1298
    %v1303 = vand.u32 2147483647, %v1278
    %vm1304 = vcmp.eq.f32.partialorder %v1303, 8.507059e+37
    %v1305 = vand.u32 %v1278, 2147483648
    %v1306 = vor.u32 1.1754944e-38, %v1305
    %v1307 = vsel %vm1304, %v1306, %v1302
    %v1308 = vmul.f32 1.0, %v1307
    %v1309 = vtanh.pop %v1269
    %v1310 = vtanh.pop %v1270
    %v1311 = vmul.f32 %v1293, %v1186
    %1313 = vrot.lane.b32.xlu0 %v1309, 32
    %v1314 = vpop.permute.xlu0 %1313
    %v1316 = vmul.f32 %v1293, %v1314
    %1318 = vrot.lane.b32.xlu0 %v1316, 32
    %v1319 = vpop.permute.xlu0 %1318
    %v1321 = vadd.f32 %v1311, %v1319
    %v1322 = vmul.f32 %v1308, %v1197
    %1324 = vrot.lane.b32.xlu0 %v1310, 32
    %v1325 = vpop.permute.xlu0 %1324
    %v1327 = vmul.f32 %v1308, %v1325
    %1329 = vrot.lane.b32.xlu0 %v1327, 32
    %v1330 = vpop.permute.xlu0 %1329
    %v1332 = vadd.f32 %v1322, %v1330
    %v1333 = vtanh.pop %v1321
    %1335 = vrot.lane.b32.xlu0 %v1333, 32
    %v1336 = vpop.permute.xlu0 %1335
    %v1338 = vmul.f32 %v1293, %v1336
    %v1339 = vtanh.pop %v1332
    %1341 = vrot.lane.b32.xlu0 %v1339, 32
    %v1342 = vpop.permute.xlu0 %1341
    %v1344 = vmul.f32 %v1308, %v1342
    %1346 = vrot.lane.b32.xlu0 %v1338, 64
    %v1347 = vpop.permute.xlu0 %1346
    %1349 = vst.msk [vmem:[%s401] sm:$0xff] %vm395, %v1347
    %1351 = vrot.lane.b32.xlu0 %v1344, 96
    %v1352 = vpop.permute.xlu0 %1351
    %1354 = vst.msk [vmem:[#allocation3] sm:$0xff] %vm402, %v1352
    %1355 = vst.msk [vmem:[%s10] sm:$0xff] %vm395, %v1347
    %1356 = vrot.lane.b32.xlu0 %v1344, 64
    %v1357 = vpop.permute.xlu0 %1356
    %s1359 = scalar_lea.vmem %s10, 8
    %1360 = vst.msk [vmem:[%s1359] sm:$0xff] %vm395, %v1357
    %1362 = vrot.lane.b32.xlu0 %v1321, 96
    %v1363 = vpop.permute.xlu0 %1362
    %1365 = vst.msk [vmem:[%s11] sm:$0xff] %vm395, %v1363
    %1367 = vrot.lane.b32.xlu0 %v1332, 96
    %v1368 = vpop.permute.xlu0 %1367
    %s1370 = scalar_lea.vmem %s11, 8
    %1371 = vst.msk [vmem:[%s1370] sm:$0xff] %vm395, %v1368
    %v1372 = vld [vmem:[#allocation3] sm:$0xff]
    %v1373 = vld [vmem:[#allocation3 + $0x8] sm:$0xff]
    %v1374 = vld [vmem:[#allocation3 + $0x10] sm:$0xff]
    %v1375 = vld [vmem:[#allocation3 + $0x18] sm:$0xff]
    %v1376 = vld [vmem:[#allocation3 + $0x20] sm:$0xff]
    %v1377 = vld [vmem:[#allocation3 + $0x28] sm:$0xff]
    %v1378 = vld [vmem:[#allocation3 + $0x30] sm:$0xff]
    %v1379 = vld [vmem:[#allocation3 + $0x38] sm:$0xff]
    %v1380 = vld [vmem:[#allocation9] sm:$0xff]
    %v1381 = vld [vmem:[#allocation9 + $0x8] sm:$0xff]
    %v1382 = vld [vmem:[#allocation9 + $0x10] sm:$0xff]
    %v1383 = vld [vmem:[#allocation9 + $0x18] sm:$0xff]
    %v1384 = vld [vmem:[#allocation9 + $0x20] sm:$0xff]
    %v1385 = vld [vmem:[#allocation9 + $0x28] sm:$0xff]
    %v1386 = vld [vmem:[#allocation9 + $0x30] sm:$0xff]
    %v1387 = vld [vmem:[#allocation9 + $0x38] sm:$0xff]
    %v1388 = vld [vmem:[#allocation9 + $0x40] sm:$0xff]
    %v1389 = vld [vmem:[#allocation9 + $0x48] sm:$0xff]
    %v1390 = vld [vmem:[#allocation9 + $0x50] sm:$0xff]
    %v1391 = vld [vmem:[#allocation9 + $0x58] sm:$0xff]
    %v1392 = vld [vmem:[#allocation9 + $0x60] sm:$0xff]
    %v1393 = vld [vmem:[#allocation9 + $0x68] sm:$0xff]
    %v1394 = vld [vmem:[#allocation9 + $0x70] sm:$0xff]
    %v1395 = vld [vmem:[#allocation9 + $0x78] sm:$0xff]
    %v1396 = vld [vmem:[%s6] sm:$0x3]
    %v1398 = vperm.slane %v1396, 0
    %v1399 = vperm.slane %v1396, 1
    %v1403 = vsel %vm128, %v1372, 0
    %v1406 = vsel %vm128, %v1373, 0
    %v1409 = vsel %vm128, %v1374, 0
    %v1412 = vsel %vm128, %v1375, 0
    %v1415 = vsel %vm128, %v1376, 0
    %v1418 = vsel %vm128, %v1377, 0
    %v1421 = vsel %vm128, %v1378, 0
    %v1424 = vsel %vm128, %v1379, 0
    %1426 = vmatpush.msra.mxu0 0.0
    %1427 = vmatpush.msra.mxu0 0.0
    %1428 = vmatpush.msra.mxu0 0.0
    %1429 = vmatpush.msra.mxu0 0.0
    %1430 = vmatpush.msra.mxu0 0.0
    %1431 = vmatpush.msra.mxu0 0.0
    %1432 = vmatpush.msra.mxu0 0.0
    %1433 = vmatpush.msra.mxu0 0.0
    %1434 = vmatpush.msra.mxu0 %v1394
    %1435 = vmatpush.msra.mxu0 %v1392
    %1436 = vmatpush.msra.mxu0 %v1390
    %1437 = vmatpush.msra.mxu0 %v1388
    %1438 = vmatpush.msra.mxu0 %v1386
    %1439 = vmatpush.msra.mxu0 %v1384
    %1440 = vmatpush.msra.mxu0 %v1382
    %1441 = vmatpush.msra.mxu0 %v1380
    %1442 = vmatmul.f32.gmra.mxu0 %v1403
    %v1443 = vpop.f32.mrf.mxu0
    %v1444 = vadd.f32 %v1398, %v1443
    %1445 = vmatmul.f32.gmra.mxu0 %v1406
    %v1446 = vpop.f32.mrf.mxu0
    %v1447 = vadd.f32 %v1398, %v1446
    %1448 = vmatmul.f32.gmra.mxu0 %v1409
    %v1449 = vpop.f32.mrf.mxu0
    %v1450 = vadd.f32 %v1398, %v1449
    %1451 = vmatmul.f32.gmra.mxu0 %v1412
    %v1452 = vpop.f32.mrf.mxu0
    %v1453 = vadd.f32 %v1398, %v1452
    %1454 = vmatmul.f32.gmra.mxu0 %v1415
    %v1455 = vpop.f32.mrf.mxu0
    %v1456 = vadd.f32 %v1398, %v1455
    %1457 = vmatmul.f32.gmra.mxu0 %v1418
    %v1458 = vpop.f32.mrf.mxu0
    %v1459 = vadd.f32 %v1398, %v1458
    %1460 = vmatmul.f32.gmra.mxu0 %v1421
    %v1461 = vpop.f32.mrf.mxu0
    %v1462 = vadd.f32 %v1398, %v1461
    %1463 = vmatmul.f32.gmra.mxu0 %v1424
    %v1464 = vpop.f32.mrf.mxu0
    %v1465 = vadd.f32 %v1398, %v1464
    %1466 = vdwg.mxu0
    %1467 = vmatpush.msra.mxu0 0.0
    %1468 = vmatpush.msra.mxu0 0.0
    %1469 = vmatpush.msra.mxu0 0.0
    %1470 = vmatpush.msra.mxu0 0.0
    %1471 = vmatpush.msra.mxu0 0.0
    %1472 = vmatpush.msra.mxu0 0.0
    %1473 = vmatpush.msra.mxu0 0.0
    %1474 = vmatpush.msra.mxu0 0.0
    %1475 = vmatpush.msra.mxu0 %v1395
    %1476 = vmatpush.msra.mxu0 %v1393
    %1477 = vmatpush.msra.mxu0 %v1391
    %1478 = vmatpush.msra.mxu0 %v1389
    %1479 = vmatpush.msra.mxu0 %v1387
    %1480 = vmatpush.msra.mxu0 %v1385
    %1481 = vmatpush.msra.mxu0 %v1383
    %1482 = vmatpush.msra.mxu0 %v1381
    %1483 = vmatmul.f32.gmra.mxu0 %v1403
    %v1484 = vpop.f32.mrf.mxu0
    %v1485 = vadd.f32 %v1399, %v1484
    %1486 = vmatmul.f32.gmra.mxu0 %v1406
    %v1487 = vpop.f32.mrf.mxu0
    %v1488 = vadd.f32 %v1399, %v1487
    %1489 = vmatmul.f32.gmra.mxu0 %v1409
    %v1490 = vpop.f32.mrf.mxu0
    %v1491 = vadd.f32 %v1399, %v1490
    %1492 = vmatmul.f32.gmra.mxu0 %v1412
    %v1493 = vpop.f32.mrf.mxu0
    %v1494 = vadd.f32 %v1399, %v1493
    %1495 = vmatmul.f32.gmra.mxu0 %v1415
    %v1496 = vpop.f32.mrf.mxu0
    %v1497 = vadd.f32 %v1399, %v1496
    %1498 = vmatmul.f32.gmra.mxu0 %v1418
    %v1499 = vpop.f32.mrf.mxu0
    %v1500 = vadd.f32 %v1399, %v1499
    %1501 = vmatmul.f32.gmra.mxu0 %v1421
    %v1502 = vpop.f32.mrf.mxu0
    %v1503 = vadd.f32 %v1399, %v1502
    %1504 = vmatmul.f32.gmra.mxu0 %v1424
    %v1505 = vpop.f32.mrf.mxu0
    %v1506 = vadd.f32 %v1399, %v1505
    %1507 = vdwg.mxu0
    %1508 = vst [vmem:[#allocation2] sm:$0xff] %v1444
    %1509 = vst [vmem:[#allocation2 + $0x10] sm:$0xff] %v1447
    %1510 = vst [vmem:[#allocation2 + $0x20] sm:$0xff] %v1450
    %1511 = vst [vmem:[#allocation2 + $0x30] sm:$0xff] %v1453
    %1512 = vst [vmem:[#allocation2 + $0x40] sm:$0xff] %v1456
    %1513 = vst [vmem:[#allocation2 + $0x50] sm:$0xff] %v1459
    %1514 = vst [vmem:[#allocation2 + $0x60] sm:$0xff] %v1462
    %1515 = vst [vmem:[#allocation2 + $0x70] sm:$0xff] %v1465
    %1516 = vst [vmem:[#allocation2 + $0x8] sm:$0xff] %v1506
    %1517 = vst [vmem:[#allocation2 + $0x18] sm:$0xff] %v1503
    %1518 = vst [vmem:[#allocation2 + $0x28] sm:$0xff] %v1500
    %1519 = vst [vmem:[#allocation2 + $0x38] sm:$0xff] %v1497
    %1520 = vst [vmem:[#allocation2 + $0x48] sm:$0xff] %v1494
    %1521 = vst [vmem:[#allocation2 + $0x58] sm:$0xff] %v1491
    %1522 = vst [vmem:[#allocation2 + $0x68] sm:$0xff] %v1488
    %1523 = vst [vmem:[#allocation2 + $0x78] sm:$0xff] %v1485
    %v1524 = vld [vmem:[#allocation10] sm:$0xff]
    %v1525 = vld [vmem:[#allocation10 + $0x8] sm:$0xff]
    %v1526 = vld [vmem:[#allocation10 + $0x10] sm:$0xff]
    %v1527 = vld [vmem:[#allocation10 + $0x18] sm:$0xff]
    %v1528 = vld [vmem:[#allocation10 + $0x20] sm:$0xff]
    %v1529 = vld [vmem:[#allocation10 + $0x28] sm:$0xff]
    %v1530 = vld [vmem:[#allocation10 + $0x30] sm:$0xff]
    %v1531 = vld [vmem:[#allocation10 + $0x38] sm:$0xff]
    %v1532 = vld [vmem:[#allocation10 + $0x40] sm:$0xff]
    %v1533 = vld [vmem:[#allocation10 + $0x48] sm:$0xff]
    %v1534 = vld [vmem:[#allocation10 + $0x50] sm:$0xff]
    %v1535 = vld [vmem:[#allocation10 + $0x58] sm:$0xff]
    %v1536 = vld [vmem:[#allocation10 + $0x60] sm:$0xff]
    %v1537 = vld [vmem:[#allocation10 + $0x68] sm:$0xff]
    %v1538 = vld [vmem:[#allocation10 + $0x70] sm:$0xff]
    %v1539 = vld [vmem:[#allocation10 + $0x78] sm:$0xff]
    %v1540 = vld [vmem:[%s269] sm:$0xff]
    %v1541 = vld [vmem:[%s269 + $0x8] sm:$0xff]
    %1542 = vmatpush.msra.mxu0 0.0
    %1543 = vmatpush.msra.mxu0 0.0
    %1544 = vmatpush.msra.mxu0 0.0
    %1545 = vmatpush.msra.mxu0 0.0
    %1546 = vmatpush.msra.mxu0 0.0
    %1547 = vmatpush.msra.mxu0 0.0
    %1548 = vmatpush.msra.mxu0 0.0
    %1549 = vmatpush.msra.mxu0 0.0
    %1550 = vmatpush.msra.mxu0 %v1538
    %1551 = vmatpush.msra.mxu0 %v1536
    %1552 = vmatpush.msra.mxu0 %v1534
    %1553 = vmatpush.msra.mxu0 %v1532
    %1554 = vmatpush.msra.mxu0 %v1530
    %1555 = vmatpush.msra.mxu0 %v1528
    %1556 = vmatpush.msra.mxu0 %v1526
    %1557 = vmatpush.msra.mxu0 %v1524
    %1558 = vmatmul.f32.gmra.mxu0 %v273
    %v1559 = vpop.f32.mrf.mxu0
    %v1560 = vadd.f32 0.0, %v1559
    %1561 = vdwg.mxu0
    %1562 = vmatpush.msra.mxu0 0.0
    %1563 = vmatpush.msra.mxu0 0.0
    %1564 = vmatpush.msra.mxu0 0.0
    %1565 = vmatpush.msra.mxu0 0.0
    %1566 = vmatpush.msra.mxu0 0.0
    %1567 = vmatpush.msra.mxu0 0.0
    %1568 = vmatpush.msra.mxu0 0.0
    %1569 = vmatpush.msra.mxu0 0.0
    %1570 = vmatpush.msra.mxu0 %v1539
    %1571 = vmatpush.msra.mxu0 %v1537
    %1572 = vmatpush.msra.mxu0 %v1535
    %1573 = vmatpush.msra.mxu0 %v1533
    %1574 = vmatpush.msra.mxu0 %v1531
    %1575 = vmatpush.msra.mxu0 %v1529
    %1576 = vmatpush.msra.mxu0 %v1527
    %1577 = vmatpush.msra.mxu0 %v1525
    %1578 = vmatmul.f32.gmra.mxu0 %v273
    %v1579 = vpop.f32.mrf.mxu0
    %v1580 = vadd.f32 0.0, %v1579
    %1581 = vdwg.mxu0
    %v1582 = vadd.f32 %v1540, %v1560
    %v1583 = vadd.f32 %v1541, %v1580
    %v1584 = vxor.u32 %v1582, 2147483648
    %v1585 = vxor.u32 %v1583, 2147483648
    %v1586 = vmul.f32 %v1584, 1.442695
    %v1587 = vpow.pop %v1586
    %v1588 = vmul.f32 %v1585, 1.442695
    %v1589 = vpow.pop %v1588
    %v1590 = vadd.f32 %v1587, 1.0
    %v1591 = vadd.f32 %v1589, 1.0
    %v1592 = vrcp.pop %v1590
    %v1593 = vmul.f32 %v1590, %v1592
    %v1594 = vsub.f32 1.0, %v1593
    %v1595 = vmul.f32 %v1592, %v1594
    %v1596 = vadd.f32 %v1592, %v1595
    %vm1597 = vweird.f32 %v1590
    %vm1598 = vweird.f32 %v1592
    %vm1599 = vmor %vm1597, %vm1598
    %v1600 = vsel %vm1599, %v1592, %v1596
    %v1601 = vand.u32 2147483647, %v1590
    %vm1602 = vcmp.eq.f32.partialorder %v1601, 8.507059e+37
    %v1603 = vand.u32 %v1590, 2147483648
    %v1604 = vor.u32 1.1754944e-38, %v1603
    %v1605 = vsel %vm1602, %v1604, %v1600
    %v1606 = vmul.f32 1.0, %v1605
    %v1607 = vrcp.pop %v1591
    %v1608 = vmul.f32 %v1591, %v1607
    %v1609 = vsub.f32 1.0, %v1608
    %v1610 = vmul.f32 %v1607, %v1609
    %v1611 = vadd.f32 %v1607, %v1610
    %vm1612 = vweird.f32 %v1591
    %vm1613 = vweird.f32 %v1607
    %vm1614 = vmor %vm1612, %vm1613
    %v1615 = vsel %vm1614, %v1607, %v1611
    %v1616 = vand.u32 2147483647, %v1591
    %vm1617 = vcmp.eq.f32.partialorder %v1616, 8.507059e+37
    %v1618 = vand.u32 %v1591, 2147483648
    %v1619 = vor.u32 1.1754944e-38, %v1618
    %v1620 = vsel %vm1617, %v1619, %v1615
    %v1621 = vmul.f32 1.0, %v1620
    %v1622 = vtanh.pop %v1582
    %v1623 = vtanh.pop %v1583
    %v1624 = vmul.f32 %v1606, 0.0
    %1626 = vrot.lane.b32.xlu0 %v1622, 32
    %v1627 = vpop.permute.xlu0 %1626
    %v1629 = vmul.f32 %v1606, %v1627
    %1631 = vrot.lane.b32.xlu0 %v1629, 32
    %v1632 = vpop.permute.xlu0 %1631
    %v1634 = vadd.f32 %v1624, %v1632
    %v1635 = vmul.f32 %v1621, 0.0
    %1637 = vrot.lane.b32.xlu0 %v1623, 32
    %v1638 = vpop.permute.xlu0 %1637
    %v1640 = vmul.f32 %v1621, %v1638
    %1642 = vrot.lane.b32.xlu0 %v1640, 32
    %v1643 = vpop.permute.xlu0 %1642
    %v1645 = vadd.f32 %v1635, %v1643
    %v1646 = vtanh.pop %v1634
    %1648 = vrot.lane.b32.xlu0 %v1646, 32
    %v1649 = vpop.permute.xlu0 %1648
    %v1651 = vmul.f32 %v1606, %v1649
    %v1652 = vtanh.pop %v1645
    %1654 = vrot.lane.b32.xlu0 %v1652, 32
    %v1655 = vpop.permute.xlu0 %1654
    %v1657 = vmul.f32 %v1621, %v1655
    %1659 = vrot.lane.b32.xlu0 %v1651, 64
    %v1660 = vpop.permute.xlu0 %1659
    %1662 = vst.msk [vmem:[#allocation4] sm:$0xff] %vm395, %v1660
    %1664 = vrot.lane.b32.xlu0 %v1657, 96
    %v1665 = vpop.permute.xlu0 %1664
    %s1667 = scalar_lea.vmem [#allocation4], 56
    %1668 = vst.msk [vmem:[%s1667] sm:$0xff] %vm402, %v1665
    %v1669 = vsel %vm395, %v1660, %v1665
    %v1670 = vld [vmem:[%s407] sm:$0xff]
    %v1671 = vld [vmem:[%s407 + $0x8] sm:$0xff]
    %v1673 = vsel %vm128, %v1669, 0
    %1675 = vmatpush.msra.mxu0 0.0
    %1676 = vmatpush.msra.mxu0 0.0
    %1677 = vmatpush.msra.mxu0 0.0
    %1678 = vmatpush.msra.mxu0 0.0
    %1679 = vmatpush.msra.mxu0 0.0
    %1680 = vmatpush.msra.mxu0 0.0
    %1681 = vmatpush.msra.mxu0 0.0
    %1682 = vmatpush.msra.mxu0 0.0
    %1683 = vmatpush.msra.mxu0 %v1538
    %1684 = vmatpush.msra.mxu0 %v1536
    %1685 = vmatpush.msra.mxu0 %v1534
    %1686 = vmatpush.msra.mxu0 %v1532
    %1687 = vmatpush.msra.mxu0 %v1530
    %1688 = vmatpush.msra.mxu0 %v1528
    %1689 = vmatpush.msra.mxu0 %v1526
    %1690 = vmatpush.msra.mxu0 %v1524
    %1691 = vmatmul.f32.gmra.mxu0 %v1673
    %v1692 = vpop.f32.mrf.mxu0
    %v1693 = vadd.f32 0.0, %v1692
    %1694 = vdwg.mxu0
    %1695 = vmatpush.msra.mxu0 0.0
    %1696 = vmatpush.msra.mxu0 0.0
    %1697 = vmatpush.msra.mxu0 0.0
    %1698 = vmatpush.msra.mxu0 0.0
    %1699 = vmatpush.msra.mxu0 0.0
    %1700 = vmatpush.msra.mxu0 0.0
    %1701 = vmatpush.msra.mxu0 0.0
    %1702 = vmatpush.msra.mxu0 0.0
    %1703 = vmatpush.msra.mxu0 %v1539
    %1704 = vmatpush.msra.mxu0 %v1537
    %1705 = vmatpush.msra.mxu0 %v1535
    %1706 = vmatpush.msra.mxu0 %v1533
    %1707 = vmatpush.msra.mxu0 %v1531
    %1708 = vmatpush.msra.mxu0 %v1529
    %1709 = vmatpush.msra.mxu0 %v1527
    %1710 = vmatpush.msra.mxu0 %v1525
    %1711 = vmatmul.f32.gmra.mxu0 %v1673
    %v1712 = vpop.f32.mrf.mxu0
    %v1713 = vadd.f32 0.0, %v1712
    %1714 = vdwg.mxu0
    %v1715 = vadd.f32 %v1670, %v1693
    %v1716 = vadd.f32 %v1671, %v1713
    %v1717 = vxor.u32 %v1715, 2147483648
    %v1718 = vxor.u32 %v1716, 2147483648
    %v1719 = vmul.f32 %v1717, 1.442695
    %v1720 = vpow.pop %v1719
    %v1721 = vmul.f32 %v1718, 1.442695
    %v1722 = vpow.pop %v1721
    %v1723 = vadd.f32 %v1720, 1.0
    %v1724 = vadd.f32 %v1722, 1.0
    %v1725 = vrcp.pop %v1723
    %v1726 = vmul.f32 %v1723, %v1725
    %v1727 = vsub.f32 1.0, %v1726
    %v1728 = vmul.f32 %v1725, %v1727
    %v1729 = vadd.f32 %v1725, %v1728
    %vm1730 = vweird.f32 %v1723
    %vm1731 = vweird.f32 %v1725
    %vm1732 = vmor %vm1730, %vm1731
    %v1733 = vsel %vm1732, %v1725, %v1729
    %v1734 = vand.u32 2147483647, %v1723
    %vm1735 = vcmp.eq.f32.partialorder %v1734, 8.507059e+37
    %v1736 = vand.u32 %v1723, 2147483648
    %v1737 = vor.u32 1.1754944e-38, %v1736
    %v1738 = vsel %vm1735, %v1737, %v1733
    %v1739 = vmul.f32 1.0, %v1738
    %v1740 = vrcp.pop %v1724
    %v1741 = vmul.f32 %v1724, %v1740
    %v1742 = vsub.f32 1.0, %v1741
    %v1743 = vmul.f32 %v1740, %v1742
    %v1744 = vadd.f32 %v1740, %v1743
    %vm1745 = vweird.f32 %v1724
    %vm1746 = vweird.f32 %v1740
    %vm1747 = vmor %vm1745, %vm1746
    %v1748 = vsel %vm1747, %v1740, %v1744
    %v1749 = vand.u32 2147483647, %v1724
    %vm1750 = vcmp.eq.f32.partialorder %v1749, 8.507059e+37
    %v1751 = vand.u32 %v1724, 2147483648
    %v1752 = vor.u32 1.1754944e-38, %v1751
    %v1753 = vsel %vm1750, %v1752, %v1748
    %v1754 = vmul.f32 1.0, %v1753
    %v1755 = vtanh.pop %v1715
    %v1756 = vtanh.pop %v1716
    %v1757 = vmul.f32 %v1739, %v1634
    %1759 = vrot.lane.b32.xlu0 %v1755, 32
    %v1760 = vpop.permute.xlu0 %1759
    %v1762 = vmul.f32 %v1739, %v1760
    %1764 = vrot.lane.b32.xlu0 %v1762, 32
    %v1765 = vpop.permute.xlu0 %1764
    %v1767 = vadd.f32 %v1757, %v1765
    %v1768 = vmul.f32 %v1754, %v1645
    %1770 = vrot.lane.b32.xlu0 %v1756, 32
    %v1771 = vpop.permute.xlu0 %1770
    %v1773 = vmul.f32 %v1754, %v1771
    %1775 = vrot.lane.b32.xlu0 %v1773, 32
    %v1776 = vpop.permute.xlu0 %1775
    %v1778 = vadd.f32 %v1768, %v1776
    %v1779 = vtanh.pop %v1767
    %1781 = vrot.lane.b32.xlu0 %v1779, 32
    %v1782 = vpop.permute.xlu0 %1781
    %v1784 = vmul.f32 %v1739, %v1782
    %v1785 = vtanh.pop %v1778
    %1787 = vrot.lane.b32.xlu0 %v1785, 32
    %v1788 = vpop.permute.xlu0 %1787
    %v1790 = vmul.f32 %v1754, %v1788
    %1792 = vrot.lane.b32.xlu0 %v1784, 64
    %v1793 = vpop.permute.xlu0 %1792
    %s1795 = scalar_lea.vmem [#allocation4], 8
    %1796 = vst.msk [vmem:[%s1795] sm:$0xff] %vm395, %v1793
    %1798 = vrot.lane.b32.xlu0 %v1790, 96
    %v1799 = vpop.permute.xlu0 %1798
    %s1801 = scalar_lea.vmem [#allocation4], 48
    %1802 = vst.msk [vmem:[%s1801] sm:$0xff] %vm402, %v1799
    %v1803 = vsel %vm395, %v1793, %v1799
    %v1804 = vld [vmem:[%s544] sm:$0xff]
    %v1805 = vld [vmem:[%s544 + $0x8] sm:$0xff]
    %v1807 = vsel %vm128, %v1803, 0
    %1809 = vmatpush.msra.mxu0 0.0
    %1810 = vmatpush.msra.mxu0 0.0
    %1811 = vmatpush.msra.mxu0 0.0
    %1812 = vmatpush.msra.mxu0 0.0
    %1813 = vmatpush.msra.mxu0 0.0
    %1814 = vmatpush.msra.mxu0 0.0
    %1815 = vmatpush.msra.mxu0 0.0
    %1816 = vmatpush.msra.mxu0 0.0
    %1817 = vmatpush.msra.mxu0 %v1538
    %1818 = vmatpush.msra.mxu0 %v1536
    %1819 = vmatpush.msra.mxu0 %v1534
    %1820 = vmatpush.msra.mxu0 %v1532
    %1821 = vmatpush.msra.mxu0 %v1530
    %1822 = vmatpush.msra.mxu0 %v1528
    %1823 = vmatpush.msra.mxu0 %v1526
    %1824 = vmatpush.msra.mxu0 %v1524
    %1825 = vmatmul.f32.gmra.mxu0 %v1807
    %v1826 = vpop.f32.mrf.mxu0
    %v1827 = vadd.f32 0.0, %v1826
    %1828 = vdwg.mxu0
    %1829 = vmatpush.msra.mxu0 0.0
    %1830 = vmatpush.msra.mxu0 0.0
    %1831 = vmatpush.msra.mxu0 0.0
    %1832 = vmatpush.msra.mxu0 0.0
    %1833 = vmatpush.msra.mxu0 0.0
    %1834 = vmatpush.msra.mxu0 0.0
    %1835 = vmatpush.msra.mxu0 0.0
    %1836 = vmatpush.msra.mxu0 0.0
    %1837 = vmatpush.msra.mxu0 %v1539
    %1838 = vmatpush.msra.mxu0 %v1537
    %1839 = vmatpush.msra.mxu0 %v1535
    %1840 = vmatpush.msra.mxu0 %v1533
    %1841 = vmatpush.msra.mxu0 %v1531
    %1842 = vmatpush.msra.mxu0 %v1529
    %1843 = vmatpush.msra.mxu0 %v1527
    %1844 = vmatpush.msra.mxu0 %v1525
    %1845 = vmatmul.f32.gmra.mxu0 %v1807
    %v1846 = vpop.f32.mrf.mxu0
    %v1847 = vadd.f32 0.0, %v1846
    %1848 = vdwg.mxu0
    %v1849 = vadd.f32 %v1804, %v1827
    %v1850 = vadd.f32 %v1805, %v1847
    %v1851 = vxor.u32 %v1849, 2147483648
    %v1852 = vxor.u32 %v1850, 2147483648
    %v1853 = vmul.f32 %v1851, 1.442695
    %v1854 = vpow.pop %v1853
    %v1855 = vmul.f32 %v1852, 1.442695
    %v1856 = vpow.pop %v1855
    %v1857 = vadd.f32 %v1854, 1.0
    %v1858 = vadd.f32 %v1856, 1.0
    %v1859 = vrcp.pop %v1857
    %v1860 = vmul.f32 %v1857, %v1859
    %v1861 = vsub.f32 1.0, %v1860
    %v1862 = vmul.f32 %v1859, %v1861
    %v1863 = vadd.f32 %v1859, %v1862
    %vm1864 = vweird.f32 %v1857
    %vm1865 = vweird.f32 %v1859
    %vm1866 = vmor %vm1864, %vm1865
    %v1867 = vsel %vm1866, %v1859, %v1863
    %v1868 = vand.u32 2147483647, %v1857
    %vm1869 = vcmp.eq.f32.partialorder %v1868, 8.507059e+37
    %v1870 = vand.u32 %v1857, 2147483648
    %v1871 = vor.u32 1.1754944e-38, %v1870
    %v1872 = vsel %vm1869, %v1871, %v1867
    %v1873 = vmul.f32 1.0, %v1872
    %v1874 = vrcp.pop %v1858
    %v1875 = vmul.f32 %v1858, %v1874
    %v1876 = vsub.f32 1.0, %v1875
    %v1877 = vmul.f32 %v1874, %v1876
    %v1878 = vadd.f32 %v1874, %v1877
    %vm1879 = vweird.f32 %v1858
    %vm1880 = vweird.f32 %v1874
    %vm1881 = vmor %vm1879, %vm1880
    %v1882 = vsel %vm1881, %v1874, %v1878
    %v1883 = vand.u32 2147483647, %v1858
    %vm1884 = vcmp.eq.f32.partialorder %v1883, 8.507059e+37
    %v1885 = vand.u32 %v1858, 2147483648
    %v1886 = vor.u32 1.1754944e-38, %v1885
    %v1887 = vsel %vm1884, %v1886, %v1882
    %v1888 = vmul.f32 1.0, %v1887
    %v1889 = vtanh.pop %v1849
    %v1890 = vtanh.pop %v1850
    %v1891 = vmul.f32 %v1873, %v1767
    %1893 = vrot.lane.b32.xlu0 %v1889, 32
    %v1894 = vpop.permute.xlu0 %1893
    %v1896 = vmul.f32 %v1873, %v1894
    %1898 = vrot.lane.b32.xlu0 %v1896, 32
    %v1899 = vpop.permute.xlu0 %1898
    %v1901 = vadd.f32 %v1891, %v1899
    %v1902 = vmul.f32 %v1888, %v1778
    %1904 = vrot.lane.b32.xlu0 %v1890, 32
    %v1905 = vpop.permute.xlu0 %1904
    %v1907 = vmul.f32 %v1888, %v1905
    %1909 = vrot.lane.b32.xlu0 %v1907, 32
    %v1910 = vpop.permute.xlu0 %1909
    %v1912 = vadd.f32 %v1902, %v1910
    %v1913 = vtanh.pop %v1901
    %1915 = vrot.lane.b32.xlu0 %v1913, 32
    %v1916 = vpop.permute.xlu0 %1915
    %v1918 = vmul.f32 %v1873, %v1916
    %v1919 = vtanh.pop %v1912
    %1921 = vrot.lane.b32.xlu0 %v1919, 32
    %v1922 = vpop.permute.xlu0 %1921
    %v1924 = vmul.f32 %v1888, %v1922
    %1926 = vrot.lane.b32.xlu0 %v1918, 64
    %v1927 = vpop.permute.xlu0 %1926
    %s1929 = scalar_lea.vmem [#allocation4], 16
    %1930 = vst.msk [vmem:[%s1929] sm:$0xff] %vm395, %v1927
    %1932 = vrot.lane.b32.xlu0 %v1924, 96
    %v1933 = vpop.permute.xlu0 %1932
    %s1935 = scalar_lea.vmem [#allocation4], 40
    %1936 = vst.msk [vmem:[%s1935] sm:$0xff] %vm402, %v1933
    %v1937 = vsel %vm395, %v1927, %v1933
    %v1938 = vld [vmem:[%s681] sm:$0xff]
    %v1939 = vld [vmem:[%s681 + $0x8] sm:$0xff]
    %v1941 = vsel %vm128, %v1937, 0
    %1943 = vmatpush.msra.mxu0 0.0
    %1944 = vmatpush.msra.mxu0 0.0
    %1945 = vmatpush.msra.mxu0 0.0
    %1946 = vmatpush.msra.mxu0 0.0
    %1947 = vmatpush.msra.mxu0 0.0
    %1948 = vmatpush.msra.mxu0 0.0
    %1949 = vmatpush.msra.mxu0 0.0
    %1950 = vmatpush.msra.mxu0 0.0
    %1951 = vmatpush.msra.mxu0 %v1538
    %1952 = vmatpush.msra.mxu0 %v1536
    %1953 = vmatpush.msra.mxu0 %v1534
    %1954 = vmatpush.msra.mxu0 %v1532
    %1955 = vmatpush.msra.mxu0 %v1530
    %1956 = vmatpush.msra.mxu0 %v1528
    %1957 = vmatpush.msra.mxu0 %v1526
    %1958 = vmatpush.msra.mxu0 %v1524
    %1959 = vmatmul.f32.gmra.mxu0 %v1941
    %v1960 = vpop.f32.mrf.mxu0
    %v1961 = vadd.f32 0.0, %v1960
    %1962 = vdwg.mxu0
    %1963 = vmatpush.msra.mxu0 0.0
    %1964 = vmatpush.msra.mxu0 0.0
    %1965 = vmatpush.msra.mxu0 0.0
    %1966 = vmatpush.msra.mxu0 0.0
    %1967 = vmatpush.msra.mxu0 0.0
    %1968 = vmatpush.msra.mxu0 0.0
    %1969 = vmatpush.msra.mxu0 0.0
    %1970 = vmatpush.msra.mxu0 0.0
    %1971 = vmatpush.msra.mxu0 %v1539
    %1972 = vmatpush.msra.mxu0 %v1537
    %1973 = vmatpush.msra.mxu0 %v1535
    %1974 = vmatpush.msra.mxu0 %v1533
    %1975 = vmatpush.msra.mxu0 %v1531
    %1976 = vmatpush.msra.mxu0 %v1529
    %1977 = vmatpush.msra.mxu0 %v1527
    %1978 = vmatpush.msra.mxu0 %v1525
    %1979 = vmatmul.f32.gmra.mxu0 %v1941
    %v1980 = vpop.f32.mrf.mxu0
    %v1981 = vadd.f32 0.0, %v1980
    %1982 = vdwg.mxu0
    %v1983 = vadd.f32 %v1938, %v1961
    %v1984 = vadd.f32 %v1939, %v1981
    %v1985 = vxor.u32 %v1983, 2147483648
    %v1986 = vxor.u32 %v1984, 2147483648
    %v1987 = vmul.f32 %v1985, 1.442695
    %v1988 = vpow.pop %v1987
    %v1989 = vmul.f32 %v1986, 1.442695
    %v1990 = vpow.pop %v1989
    %v1991 = vadd.f32 %v1988, 1.0
    %v1992 = vadd.f32 %v1990, 1.0
    %v1993 = vrcp.pop %v1991
    %v1994 = vmul.f32 %v1991, %v1993
    %v1995 = vsub.f32 1.0, %v1994
    %v1996 = vmul.f32 %v1993, %v1995
    %v1997 = vadd.f32 %v1993, %v1996
    %vm1998 = vweird.f32 %v1991
    %vm1999 = vweird.f32 %v1993
    %vm2000 = vmor %vm1998, %vm1999
    %v2001 = vsel %vm2000, %v1993, %v1997
    %v2002 = vand.u32 2147483647, %v1991
    %vm2003 = vcmp.eq.f32.partialorder %v2002, 8.507059e+37
    %v2004 = vand.u32 %v1991, 2147483648
    %v2005 = vor.u32 1.1754944e-38, %v2004
    %v2006 = vsel %vm2003, %v2005, %v2001
    %v2007 = vmul.f32 1.0, %v2006
    %v2008 = vrcp.pop %v1992
    %v2009 = vmul.f32 %v1992, %v2008
    %v2010 = vsub.f32 1.0, %v2009
    %v2011 = vmul.f32 %v2008, %v2010
    %v2012 = vadd.f32 %v2008, %v2011
    %vm2013 = vweird.f32 %v1992
    %vm2014 = vweird.f32 %v2008
    %vm2015 = vmor %vm2013, %vm2014
    %v2016 = vsel %vm2015, %v2008, %v2012
    %v2017 = vand.u32 2147483647, %v1992
    %vm2018 = vcmp.eq.f32.partialorder %v2017, 8.507059e+37
    %v2019 = vand.u32 %v1992, 2147483648
    %v2020 = vor.u32 1.1754944e-38, %v2019
    %v2021 = vsel %vm2018, %v2020, %v2016
    %v2022 = vmul.f32 1.0, %v2021
    %v2023 = vtanh.pop %v1983
    %v2024 = vtanh.pop %v1984
    %v2025 = vmul.f32 %v2007, %v1901
    %2027 = vrot.lane.b32.xlu0 %v2023, 32
    %v2028 = vpop.permute.xlu0 %2027
    %v2030 = vmul.f32 %v2007, %v2028
    %2032 = vrot.lane.b32.xlu0 %v2030, 32
    %v2033 = vpop.permute.xlu0 %2032
    %v2035 = vadd.f32 %v2025, %v2033
    %v2036 = vmul.f32 %v2022, %v1912
    %2038 = vrot.lane.b32.xlu0 %v2024, 32
    %v2039 = vpop.permute.xlu0 %2038
    %v2041 = vmul.f32 %v2022, %v2039
    %2043 = vrot.lane.b32.xlu0 %v2041, 32
    %v2044 = vpop.permute.xlu0 %2043
    %v2046 = vadd.f32 %v2036, %v2044
    %v2047 = vtanh.pop %v2035
    %2049 = vrot.lane.b32.xlu0 %v2047, 32
    %v2050 = vpop.permute.xlu0 %2049
    %v2052 = vmul.f32 %v2007, %v2050
    %v2053 = vtanh.pop %v2046
    %2055 = vrot.lane.b32.xlu0 %v2053, 32
    %v2056 = vpop.permute.xlu0 %2055
    %v2058 = vmul.f32 %v2022, %v2056
    %2060 = vrot.lane.b32.xlu0 %v2052, 64
    %v2061 = vpop.permute.xlu0 %2060
    %s2063 = scalar_lea.vmem [#allocation4], 24
    %2064 = vst.msk [vmem:[%s2063] sm:$0xff] %vm395, %v2061
    %2066 = vrot.lane.b32.xlu0 %v2058, 96
    %v2067 = vpop.permute.xlu0 %2066
    %s2069 = scalar_lea.vmem [#allocation4], 32
    %2070 = vst.msk [vmem:[%s2069] sm:$0xff] %vm402, %v2067
    %v2071 = vsel %vm395, %v2061, %v2067
    %v2072 = vld [vmem:[%s818] sm:$0xff]
    %v2073 = vld [vmem:[%s818 + $0x8] sm:$0xff]
    %v2075 = vsel %vm128, %v2071, 0
    %2077 = vmatpush.msra.mxu0 0.0
    %2078 = vmatpush.msra.mxu0 0.0
    %2079 = vmatpush.msra.mxu0 0.0
    %2080 = vmatpush.msra.mxu0 0.0
    %2081 = vmatpush.msra.mxu0 0.0
    %2082 = vmatpush.msra.mxu0 0.0
    %2083 = vmatpush.msra.mxu0 0.0
    %2084 = vmatpush.msra.mxu0 0.0
    %2085 = vmatpush.msra.mxu0 %v1538
    %2086 = vmatpush.msra.mxu0 %v1536
    %2087 = vmatpush.msra.mxu0 %v1534
    %2088 = vmatpush.msra.mxu0 %v1532
    %2089 = vmatpush.msra.mxu0 %v1530
    %2090 = vmatpush.msra.mxu0 %v1528
    %2091 = vmatpush.msra.mxu0 %v1526
    %2092 = vmatpush.msra.mxu0 %v1524
    %2093 = vmatmul.f32.gmra.mxu0 %v2075
    %v2094 = vpop.f32.mrf.mxu0
    %v2095 = vadd.f32 0.0, %v2094
    %2096 = vdwg.mxu0
    %2097 = vmatpush.msra.mxu0 0.0
    %2098 = vmatpush.msra.mxu0 0.0
    %2099 = vmatpush.msra.mxu0 0.0
    %2100 = vmatpush.msra.mxu0 0.0
    %2101 = vmatpush.msra.mxu0 0.0
    %2102 = vmatpush.msra.mxu0 0.0
    %2103 = vmatpush.msra.mxu0 0.0
    %2104 = vmatpush.msra.mxu0 0.0
    %2105 = vmatpush.msra.mxu0 %v1539
    %2106 = vmatpush.msra.mxu0 %v1537
    %2107 = vmatpush.msra.mxu0 %v1535
    %2108 = vmatpush.msra.mxu0 %v1533
    %2109 = vmatpush.msra.mxu0 %v1531
    %2110 = vmatpush.msra.mxu0 %v1529
    %2111 = vmatpush.msra.mxu0 %v1527
    %2112 = vmatpush.msra.mxu0 %v1525
    %2113 = vmatmul.f32.gmra.mxu0 %v2075
    %v2114 = vpop.f32.mrf.mxu0
    %v2115 = vadd.f32 0.0, %v2114
    %2116 = vdwg.mxu0
    %v2117 = vadd.f32 %v2072, %v2095
    %v2118 = vadd.f32 %v2073, %v2115
    %v2119 = vxor.u32 %v2117, 2147483648
    %v2120 = vxor.u32 %v2118, 2147483648
    %v2121 = vmul.f32 %v2119, 1.442695
    %v2122 = vpow.pop %v2121
    %v2123 = vmul.f32 %v2120, 1.442695
    %v2124 = vpow.pop %v2123
    %v2125 = vadd.f32 %v2122, 1.0
    %v2126 = vadd.f32 %v2124, 1.0
    %v2127 = vrcp.pop %v2125
    %v2128 = vmul.f32 %v2125, %v2127
    %v2129 = vsub.f32 1.0, %v2128
    %v2130 = vmul.f32 %v2127, %v2129
    %v2131 = vadd.f32 %v2127, %v2130
    %vm2132 = vweird.f32 %v2125
    %vm2133 = vweird.f32 %v2127
    %vm2134 = vmor %vm2132, %vm2133
    %v2135 = vsel %vm2134, %v2127, %v2131
    %v2136 = vand.u32 2147483647, %v2125
    %vm2137 = vcmp.eq.f32.partialorder %v2136, 8.507059e+37
    %v2138 = vand.u32 %v2125, 2147483648
    %v2139 = vor.u32 1.1754944e-38, %v2138
    %v2140 = vsel %vm2137, %v2139, %v2135
    %v2141 = vmul.f32 1.0, %v2140
    %v2142 = vrcp.pop %v2126
    %v2143 = vmul.f32 %v2126, %v2142
    %v2144 = vsub.f32 1.0, %v2143
    %v2145 = vmul.f32 %v2142, %v2144
    %v2146 = vadd.f32 %v2142, %v2145
    %vm2147 = vweird.f32 %v2126
    %vm2148 = vweird.f32 %v2142
    %vm2149 = vmor %vm2147, %vm2148
    %v2150 = vsel %vm2149, %v2142, %v2146
    %v2151 = vand.u32 2147483647, %v2126
    %vm2152 = vcmp.eq.f32.partialorder %v2151, 8.507059e+37
    %v2153 = vand.u32 %v2126, 2147483648
    %v2154 = vor.u32 1.1754944e-38, %v2153
    %v2155 = vsel %vm2152, %v2154, %v2150
    %v2156 = vmul.f32 1.0, %v2155
    %v2157 = vtanh.pop %v2117
    %v2158 = vtanh.pop %v2118
    %v2159 = vmul.f32 %v2141, %v2035
    %2161 = vrot.lane.b32.xlu0 %v2157, 32
    %v2162 = vpop.permute.xlu0 %2161
    %v2164 = vmul.f32 %v2141, %v2162
    %2166 = vrot.lane.b32.xlu0 %v2164, 32
    %v2167 = vpop.permute.xlu0 %2166
    %v2169 = vadd.f32 %v2159, %v2167
    %v2170 = vmul.f32 %v2156, %v2046
    %2172 = vrot.lane.b32.xlu0 %v2158, 32
    %v2173 = vpop.permute.xlu0 %2172
    %v2175 = vmul.f32 %v2156, %v2173
    %2177 = vrot.lane.b32.xlu0 %v2175, 32
    %v2178 = vpop.permute.xlu0 %2177
    %v2180 = vadd.f32 %v2170, %v2178
    %v2181 = vtanh.pop %v2169
    %2183 = vrot.lane.b32.xlu0 %v2181, 32
    %v2184 = vpop.permute.xlu0 %2183
    %v2186 = vmul.f32 %v2141, %v2184
    %v2187 = vtanh.pop %v2180
    %2189 = vrot.lane.b32.xlu0 %v2187, 32
    %v2190 = vpop.permute.xlu0 %2189
    %v2192 = vmul.f32 %v2156, %v2190
    %2194 = vrot.lane.b32.xlu0 %v2186, 64
    %v2195 = vpop.permute.xlu0 %2194
    %2197 = vst.msk [vmem:[%s2069] sm:$0xff] %vm395, %v2195
    %2199 = vrot.lane.b32.xlu0 %v2192, 96
    %v2200 = vpop.permute.xlu0 %2199
    %2202 = vst.msk [vmem:[%s2063] sm:$0xff] %vm402, %v2200
    %v2203 = vsel %vm395, %v2195, %v2200
    %v2204 = vld [vmem:[%s953] sm:$0xff]
    %v2205 = vld [vmem:[%s953 + $0x8] sm:$0xff]
    %v2207 = vsel %vm128, %v2203, 0
    %2209 = vmatpush.msra.mxu0 0.0
    %2210 = vmatpush.msra.mxu0 0.0
    %2211 = vmatpush.msra.mxu0 0.0
    %2212 = vmatpush.msra.mxu0 0.0
    %2213 = vmatpush.msra.mxu0 0.0
    %2214 = vmatpush.msra.mxu0 0.0
    %2215 = vmatpush.msra.mxu0 0.0
    %2216 = vmatpush.msra.mxu0 0.0
    %2217 = vmatpush.msra.mxu0 %v1538
    %2218 = vmatpush.msra.mxu0 %v1536
    %2219 = vmatpush.msra.mxu0 %v1534
    %2220 = vmatpush.msra.mxu0 %v1532
    %2221 = vmatpush.msra.mxu0 %v1530
    %2222 = vmatpush.msra.mxu0 %v1528
    %2223 = vmatpush.msra.mxu0 %v1526
    %2224 = vmatpush.msra.mxu0 %v1524
    %2225 = vmatmul.f32.gmra.mxu0 %v2207
    %v2226 = vpop.f32.mrf.mxu0
    %v2227 = vadd.f32 0.0, %v2226
    %2228 = vdwg.mxu0
    %2229 = vmatpush.msra.mxu0 0.0
    %2230 = vmatpush.msra.mxu0 0.0
    %2231 = vmatpush.msra.mxu0 0.0
    %2232 = vmatpush.msra.mxu0 0.0
    %2233 = vmatpush.msra.mxu0 0.0
    %2234 = vmatpush.msra.mxu0 0.0
    %2235 = vmatpush.msra.mxu0 0.0
    %2236 = vmatpush.msra.mxu0 0.0
    %2237 = vmatpush.msra.mxu0 %v1539
    %2238 = vmatpush.msra.mxu0 %v1537
    %2239 = vmatpush.msra.mxu0 %v1535
    %2240 = vmatpush.msra.mxu0 %v1533
    %2241 = vmatpush.msra.mxu0 %v1531
    %2242 = vmatpush.msra.mxu0 %v1529
    %2243 = vmatpush.msra.mxu0 %v1527
    %2244 = vmatpush.msra.mxu0 %v1525
    %2245 = vmatmul.f32.gmra.mxu0 %v2207
    %v2246 = vpop.f32.mrf.mxu0
    %v2247 = vadd.f32 0.0, %v2246
    %2248 = vdwg.mxu0
    %v2249 = vadd.f32 %v2204, %v2227
    %v2250 = vadd.f32 %v2205, %v2247
    %v2251 = vxor.u32 %v2249, 2147483648
    %v2252 = vxor.u32 %v2250, 2147483648
    %v2253 = vmul.f32 %v2251, 1.442695
    %v2254 = vpow.pop %v2253
    %v2255 = vmul.f32 %v2252, 1.442695
    %v2256 = vpow.pop %v2255
    %v2257 = vadd.f32 %v2254, 1.0
    %v2258 = vadd.f32 %v2256, 1.0
    %v2259 = vrcp.pop %v2257
    %v2260 = vmul.f32 %v2257, %v2259
    %v2261 = vsub.f32 1.0, %v2260
    %v2262 = vmul.f32 %v2259, %v2261
    %v2263 = vadd.f32 %v2259, %v2262
    %vm2264 = vweird.f32 %v2257
    %vm2265 = vweird.f32 %v2259
    %vm2266 = vmor %vm2264, %vm2265
    %v2267 = vsel %vm2266, %v2259, %v2263
    %v2268 = vand.u32 2147483647, %v2257
    %vm2269 = vcmp.eq.f32.partialorder %v2268, 8.507059e+37
    %v2270 = vand.u32 %v2257, 2147483648
    %v2271 = vor.u32 1.1754944e-38, %v2270
    %v2272 = vsel %vm2269, %v2271, %v2267
    %v2273 = vmul.f32 1.0, %v2272
    %v2274 = vrcp.pop %v2258
    %v2275 = vmul.f32 %v2258, %v2274
    %v2276 = vsub.f32 1.0, %v2275
    %v2277 = vmul.f32 %v2274, %v2276
    %v2278 = vadd.f32 %v2274, %v2277
    %vm2279 = vweird.f32 %v2258
    %vm2280 = vweird.f32 %v2274
    %vm2281 = vmor %vm2279, %vm2280
    %v2282 = vsel %vm2281, %v2274, %v2278
    %v2283 = vand.u32 2147483647, %v2258
    %vm2284 = vcmp.eq.f32.partialorder %v2283, 8.507059e+37
    %v2285 = vand.u32 %v2258, 2147483648
    %v2286 = vor.u32 1.1754944e-38, %v2285
    %v2287 = vsel %vm2284, %v2286, %v2282
    %v2288 = vmul.f32 1.0, %v2287
    %v2289 = vtanh.pop %v2249
    %v2290 = vtanh.pop %v2250
    %v2291 = vmul.f32 %v2273, %v2169
    %2293 = vrot.lane.b32.xlu0 %v2289, 32
    %v2294 = vpop.permute.xlu0 %2293
    %v2296 = vmul.f32 %v2273, %v2294
    %2298 = vrot.lane.b32.xlu0 %v2296, 32
    %v2299 = vpop.permute.xlu0 %2298
    %v2301 = vadd.f32 %v2291, %v2299
    %v2302 = vmul.f32 %v2288, %v2180
    %2304 = vrot.lane.b32.xlu0 %v2290, 32
    %v2305 = vpop.permute.xlu0 %2304
    %v2307 = vmul.f32 %v2288, %v2305
    %2309 = vrot.lane.b32.xlu0 %v2307, 32
    %v2310 = vpop.permute.xlu0 %2309
    %v2312 = vadd.f32 %v2302, %v2310
    %v2313 = vtanh.pop %v2301
    %2315 = vrot.lane.b32.xlu0 %v2313, 32
    %v2316 = vpop.permute.xlu0 %2315
    %v2318 = vmul.f32 %v2273, %v2316
    %v2319 = vtanh.pop %v2312
    %2321 = vrot.lane.b32.xlu0 %v2319, 32
    %v2322 = vpop.permute.xlu0 %2321
    %v2324 = vmul.f32 %v2288, %v2322
    %2326 = vrot.lane.b32.xlu0 %v2318, 64
    %v2327 = vpop.permute.xlu0 %2326
    %2329 = vst.msk [vmem:[%s1935] sm:$0xff] %vm395, %v2327
    %2331 = vrot.lane.b32.xlu0 %v2324, 96
    %v2332 = vpop.permute.xlu0 %2331
    %2334 = vst.msk [vmem:[%s1929] sm:$0xff] %vm402, %v2332
    %v2335 = vsel %vm395, %v2327, %v2332
    %v2336 = vld [vmem:[%s1088] sm:$0xff]
    %v2337 = vld [vmem:[%s1088 + $0x8] sm:$0xff]
    %v2339 = vsel %vm128, %v2335, 0
    %2341 = vmatpush.msra.mxu0 0.0
    %2342 = vmatpush.msra.mxu0 0.0
    %2343 = vmatpush.msra.mxu0 0.0
    %2344 = vmatpush.msra.mxu0 0.0
    %2345 = vmatpush.msra.mxu0 0.0
    %2346 = vmatpush.msra.mxu0 0.0
    %2347 = vmatpush.msra.mxu0 0.0
    %2348 = vmatpush.msra.mxu0 0.0
    %2349 = vmatpush.msra.mxu0 %v1538
    %2350 = vmatpush.msra.mxu0 %v1536
    %2351 = vmatpush.msra.mxu0 %v1534
    %2352 = vmatpush.msra.mxu0 %v1532
    %2353 = vmatpush.msra.mxu0 %v1530
    %2354 = vmatpush.msra.mxu0 %v1528
    %2355 = vmatpush.msra.mxu0 %v1526
    %2356 = vmatpush.msra.mxu0 %v1524
    %2357 = vmatmul.f32.gmra.mxu0 %v2339
    %v2358 = vpop.f32.mrf.mxu0
    %v2359 = vadd.f32 0.0, %v2358
    %2360 = vdwg.mxu0
    %2361 = vmatpush.msra.mxu0 0.0
    %2362 = vmatpush.msra.mxu0 0.0
    %2363 = vmatpush.msra.mxu0 0.0
    %2364 = vmatpush.msra.mxu0 0.0
    %2365 = vmatpush.msra.mxu0 0.0
    %2366 = vmatpush.msra.mxu0 0.0
    %2367 = vmatpush.msra.mxu0 0.0
    %2368 = vmatpush.msra.mxu0 0.0
    %2369 = vmatpush.msra.mxu0 %v1539
    %2370 = vmatpush.msra.mxu0 %v1537
    %2371 = vmatpush.msra.mxu0 %v1535
    %2372 = vmatpush.msra.mxu0 %v1533
    %2373 = vmatpush.msra.mxu0 %v1531
    %2374 = vmatpush.msra.mxu0 %v1529
    %2375 = vmatpush.msra.mxu0 %v1527
    %2376 = vmatpush.msra.mxu0 %v1525
    %2377 = vmatmul.f32.gmra.mxu0 %v2339
    %v2378 = vpop.f32.mrf.mxu0
    %v2379 = vadd.f32 0.0, %v2378
    %2380 = vdwg.mxu0
    %v2381 = vadd.f32 %v2336, %v2359
    %v2382 = vadd.f32 %v2337, %v2379
    %v2383 = vxor.u32 %v2381, 2147483648
    %v2384 = vxor.u32 %v2382, 2147483648
    %v2385 = vmul.f32 %v2383, 1.442695
    %v2386 = vpow.pop %v2385
    %v2387 = vmul.f32 %v2384, 1.442695
    %v2388 = vpow.pop %v2387
    %v2389 = vadd.f32 %v2386, 1.0
    %v2390 = vadd.f32 %v2388, 1.0
    %v2391 = vrcp.pop %v2389
    %v2392 = vmul.f32 %v2389, %v2391
    %v2393 = vsub.f32 1.0, %v2392
    %v2394 = vmul.f32 %v2391, %v2393
    %v2395 = vadd.f32 %v2391, %v2394
    %vm2396 = vweird.f32 %v2389
    %vm2397 = vweird.f32 %v2391
    %vm2398 = vmor %vm2396, %vm2397
    %v2399 = vsel %vm2398, %v2391, %v2395
    %v2400 = vand.u32 2147483647, %v2389
    %vm2401 = vcmp.eq.f32.partialorder %v2400, 8.507059e+37
    %v2402 = vand.u32 %v2389, 2147483648
    %v2403 = vor.u32 1.1754944e-38, %v2402
    %v2404 = vsel %vm2401, %v2403, %v2399
    %v2405 = vmul.f32 1.0, %v2404
    %v2406 = vrcp.pop %v2390
    %v2407 = vmul.f32 %v2390, %v2406
    %v2408 = vsub.f32 1.0, %v2407
    %v2409 = vmul.f32 %v2406, %v2408
    %v2410 = vadd.f32 %v2406, %v2409
    %vm2411 = vweird.f32 %v2390
    %vm2412 = vweird.f32 %v2406
    %vm2413 = vmor %vm2411, %vm2412
    %v2414 = vsel %vm2413, %v2406, %v2410
    %v2415 = vand.u32 2147483647, %v2390
    %vm2416 = vcmp.eq.f32.partialorder %v2415, 8.507059e+37
    %v2417 = vand.u32 %v2390, 2147483648
    %v2418 = vor.u32 1.1754944e-38, %v2417
    %v2419 = vsel %vm2416, %v2418, %v2414
    %v2420 = vmul.f32 1.0, %v2419
    %v2421 = vtanh.pop %v2381
    %v2422 = vtanh.pop %v2382
    %v2423 = vmul.f32 %v2405, %v2301
    %2425 = vrot.lane.b32.xlu0 %v2421, 32
    %v2426 = vpop.permute.xlu0 %2425
    %v2428 = vmul.f32 %v2405, %v2426
    %2430 = vrot.lane.b32.xlu0 %v2428, 32
    %v2431 = vpop.permute.xlu0 %2430
    %v2433 = vadd.f32 %v2423, %v2431
    %v2434 = vmul.f32 %v2420, %v2312
    %2436 = vrot.lane.b32.xlu0 %v2422, 32
    %v2437 = vpop.permute.xlu0 %2436
    %v2439 = vmul.f32 %v2420, %v2437
    %2441 = vrot.lane.b32.xlu0 %v2439, 32
    %v2442 = vpop.permute.xlu0 %2441
    %v2444 = vadd.f32 %v2434, %v2442
    %v2445 = vtanh.pop %v2433
    %2447 = vrot.lane.b32.xlu0 %v2445, 32
    %v2448 = vpop.permute.xlu0 %2447
    %v2450 = vmul.f32 %v2405, %v2448
    %v2451 = vtanh.pop %v2444
    %2453 = vrot.lane.b32.xlu0 %v2451, 32
    %v2454 = vpop.permute.xlu0 %2453
    %v2456 = vmul.f32 %v2420, %v2454
    %2458 = vrot.lane.b32.xlu0 %v2450, 64
    %v2459 = vpop.permute.xlu0 %2458
    %2461 = vst.msk [vmem:[%s1801] sm:$0xff] %vm395, %v2459
    %2463 = vrot.lane.b32.xlu0 %v2456, 96
    %v2464 = vpop.permute.xlu0 %2463
    %2466 = vst.msk [vmem:[%s1795] sm:$0xff] %vm402, %v2464
    %v2467 = vsel %vm395, %v2459, %v2464
    %v2468 = vld [vmem:[%s1223] sm:$0xff]
    %v2469 = vld [vmem:[%s1223 + $0x8] sm:$0xff]
    %v2471 = vsel %vm128, %v2467, 0
    %2473 = vmatpush.msra.mxu0 0.0
    %2474 = vmatpush.msra.mxu0 0.0
    %2475 = vmatpush.msra.mxu0 0.0
    %2476 = vmatpush.msra.mxu0 0.0
    %2477 = vmatpush.msra.mxu0 0.0
    %2478 = vmatpush.msra.mxu0 0.0
    %2479 = vmatpush.msra.mxu0 0.0
    %2480 = vmatpush.msra.mxu0 0.0
    %2481 = vmatpush.msra.mxu0 %v1538
    %2482 = vmatpush.msra.mxu0 %v1536
    %2483 = vmatpush.msra.mxu0 %v1534
    %2484 = vmatpush.msra.mxu0 %v1532
    %2485 = vmatpush.msra.mxu0 %v1530
    %2486 = vmatpush.msra.mxu0 %v1528
    %2487 = vmatpush.msra.mxu0 %v1526
    %2488 = vmatpush.msra.mxu0 %v1524
    %2489 = vmatmul.f32.gmra.mxu0 %v2471
    %v2490 = vpop.f32.mrf.mxu0
    %v2491 = vadd.f32 0.0, %v2490
    %2492 = vdwg.mxu0
    %2493 = vmatpush.msra.mxu0 0.0
    %2494 = vmatpush.msra.mxu0 0.0
    %2495 = vmatpush.msra.mxu0 0.0
    %2496 = vmatpush.msra.mxu0 0.0
    %2497 = vmatpush.msra.mxu0 0.0
    %2498 = vmatpush.msra.mxu0 0.0
    %2499 = vmatpush.msra.mxu0 0.0
    %2500 = vmatpush.msra.mxu0 0.0
    %2501 = vmatpush.msra.mxu0 %v1539
    %2502 = vmatpush.msra.mxu0 %v1537
    %2503 = vmatpush.msra.mxu0 %v1535
    %2504 = vmatpush.msra.mxu0 %v1533
    %2505 = vmatpush.msra.mxu0 %v1531
    %2506 = vmatpush.msra.mxu0 %v1529
    %2507 = vmatpush.msra.mxu0 %v1527
    %2508 = vmatpush.msra.mxu0 %v1525
    %2509 = vmatmul.f32.gmra.mxu0 %v2471
    %v2510 = vpop.f32.mrf.mxu0
    %v2511 = vadd.f32 0.0, %v2510
    %2512 = vdwg.mxu0
    %v2513 = vadd.f32 %v2468, %v2491
    %v2514 = vadd.f32 %v2469, %v2511
    %v2515 = vxor.u32 %v2513, 2147483648
    %v2516 = vxor.u32 %v2514, 2147483648
    %v2517 = vmul.f32 %v2515, 1.442695
    %v2518 = vpow.pop %v2517
    %v2519 = vmul.f32 %v2516, 1.442695
    %v2520 = vpow.pop %v2519
    %v2521 = vadd.f32 %v2518, 1.0
    %v2522 = vadd.f32 %v2520, 1.0
    %v2523 = vrcp.pop %v2521
    %v2524 = vmul.f32 %v2521, %v2523
    %v2525 = vsub.f32 1.0, %v2524
    %v2526 = vmul.f32 %v2523, %v2525
    %v2527 = vadd.f32 %v2523, %v2526
    %vm2528 = vweird.f32 %v2521
    %vm2529 = vweird.f32 %v2523
    %vm2530 = vmor %vm2528, %vm2529
    %v2531 = vsel %vm2530, %v2523, %v2527
    %v2532 = vand.u32 2147483647, %v2521
    %vm2533 = vcmp.eq.f32.partialorder %v2532, 8.507059e+37
    %v2534 = vand.u32 %v2521, 2147483648
    %v2535 = vor.u32 1.1754944e-38, %v2534
    %v2536 = vsel %vm2533, %v2535, %v2531
    %v2537 = vmul.f32 1.0, %v2536
    %v2538 = vrcp.pop %v2522
    %v2539 = vmul.f32 %v2522, %v2538
    %v2540 = vsub.f32 1.0, %v2539
    %v2541 = vmul.f32 %v2538, %v2540
    %v2542 = vadd.f32 %v2538, %v2541
    %vm2543 = vweird.f32 %v2522
    %vm2544 = vweird.f32 %v2538
    %vm2545 = vmor %vm2543, %vm2544
    %v2546 = vsel %vm2545, %v2538, %v2542
    %v2547 = vand.u32 2147483647, %v2522
    %vm2548 = vcmp.eq.f32.partialorder %v2547, 8.507059e+37
    %v2549 = vand.u32 %v2522, 2147483648
    %v2550 = vor.u32 1.1754944e-38, %v2549
    %v2551 = vsel %vm2548, %v2550, %v2546
    %v2552 = vmul.f32 1.0, %v2551
    %v2553 = vtanh.pop %v2513
    %v2554 = vtanh.pop %v2514
    %v2555 = vmul.f32 %v2537, %v2433
    %2557 = vrot.lane.b32.xlu0 %v2553, 32
    %v2558 = vpop.permute.xlu0 %2557
    %v2560 = vmul.f32 %v2537, %v2558
    %2562 = vrot.lane.b32.xlu0 %v2560, 32
    %v2563 = vpop.permute.xlu0 %2562
    %v2565 = vadd.f32 %v2555, %v2563
    %v2566 = vmul.f32 %v2552, %v2444
    %2568 = vrot.lane.b32.xlu0 %v2554, 32
    %v2569 = vpop.permute.xlu0 %2568
    %v2571 = vmul.f32 %v2552, %v2569
    %2573 = vrot.lane.b32.xlu0 %v2571, 32
    %v2574 = vpop.permute.xlu0 %2573
    %v2576 = vadd.f32 %v2566, %v2574
    %v2577 = vtanh.pop %v2565
    %2579 = vrot.lane.b32.xlu0 %v2577, 32
    %v2580 = vpop.permute.xlu0 %2579
    %v2582 = vmul.f32 %v2537, %v2580
    %v2583 = vtanh.pop %v2576
    %2585 = vrot.lane.b32.xlu0 %v2583, 32
    %v2586 = vpop.permute.xlu0 %2585
    %v2588 = vmul.f32 %v2552, %v2586
    %2590 = vrot.lane.b32.xlu0 %v2582, 64
    %v2591 = vpop.permute.xlu0 %2590
    %2593 = vst.msk [vmem:[%s1667] sm:$0xff] %vm395, %v2591
    %2595 = vrot.lane.b32.xlu0 %v2588, 96
    %v2596 = vpop.permute.xlu0 %2595
    %2598 = vst.msk [vmem:[#allocation4] sm:$0xff] %vm402, %v2596
    %s2599 = scalar_lea.vmem %s10, 16
    %2600 = vst.msk [vmem:[%s2599] sm:$0xff] %vm395, %v2591
    %2601 = vrot.lane.b32.xlu0 %v2588, 64
    %v2602 = vpop.permute.xlu0 %2601
    %s2604 = scalar_lea.vmem %s10, 24
    %2605 = vst.msk [vmem:[%s2604] sm:$0xff] %vm395, %v2602
    %2607 = vrot.lane.b32.xlu0 %v2565, 96
    %v2608 = vpop.permute.xlu0 %2607
    %s2610 = scalar_lea.vmem %s11, 16
    %2611 = vst.msk [vmem:[%s2610] sm:$0xff] %vm395, %v2608
    %2613 = vrot.lane.b32.xlu0 %v2576, 96
    %v2614 = vpop.permute.xlu0 %2613
    %s2616 = scalar_lea.vmem %s11, 24
    %2617 = vst.msk [vmem:[%s2616] sm:$0xff] %vm395, %v2614
    %v2618 = vld [vmem:[#allocation4] sm:$0xff]
    %v2619 = vld [vmem:[#allocation4 + $0x8] sm:$0xff]
    %v2620 = vld [vmem:[#allocation4 + $0x10] sm:$0xff]
    %v2621 = vld [vmem:[#allocation4 + $0x18] sm:$0xff]
    %v2622 = vld [vmem:[#allocation4 + $0x20] sm:$0xff]
    %v2623 = vld [vmem:[#allocation4 + $0x28] sm:$0xff]
    %v2624 = vld [vmem:[#allocation4 + $0x30] sm:$0xff]
    %v2625 = vld [vmem:[#allocation4 + $0x38] sm:$0xff]
    %v2626 = vld [vmem:[%s7] sm:$0xff]
    %v2627 = vld [vmem:[%s7 + $0x8] sm:$0xff]
    %v2628 = vld [vmem:[%s7 + $0x10] sm:$0xff]
    %v2629 = vld [vmem:[%s7 + $0x18] sm:$0xff]
    %v2630 = vld [vmem:[%s7 + $0x20] sm:$0xff]
    %v2631 = vld [vmem:[%s7 + $0x28] sm:$0xff]
    %v2632 = vld [vmem:[%s7 + $0x30] sm:$0xff]
    %v2633 = vld [vmem:[%s7 + $0x38] sm:$0xff]
    %v2634 = vld [vmem:[%s8] sm:$0x1]
    %v2636 = vperm.slane %v2634, 0
    %v2639 = vsel %vm128, %v2618, 0
    %v2642 = vsel %vm128, %v2619, 0
    %v2645 = vsel %vm128, %v2620, 0
    %v2648 = vsel %vm128, %v2621, 0
    %v2651 = vsel %vm128, %v2622, 0
    %v2654 = vsel %vm128, %v2623, 0
    %v2657 = vsel %vm128, %v2624, 0
    %v2660 = vsel %vm128, %v2625, 0
    %2662 = vmatpush.msra.mxu0 0.0
    %2663 = vmatpush.msra.mxu0 0.0
    %2664 = vmatpush.msra.mxu0 0.0
    %2665 = vmatpush.msra.mxu0 0.0
    %2666 = vmatpush.msra.mxu0 0.0
    %2667 = vmatpush.msra.mxu0 0.0
    %2668 = vmatpush.msra.mxu0 0.0
    %2669 = vmatpush.msra.mxu0 0.0
    %2670 = vmatpush.msra.mxu0 %v2633
    %2671 = vmatpush.msra.mxu0 %v2632
    %2672 = vmatpush.msra.mxu0 %v2631
    %2673 = vmatpush.msra.mxu0 %v2630
    %2674 = vmatpush.msra.mxu0 %v2629
    %2675 = vmatpush.msra.mxu0 %v2628
    %2676 = vmatpush.msra.mxu0 %v2627
    %2677 = vmatpush.msra.mxu0 %v2626
    %2678 = vmatmul.f32.gmra.mxu0 %v2639
    %v2679 = vpop.f32.mrf.mxu0
    %v2680 = vadd.f32 %v2636, %v2679
    %2681 = vmatmul.f32.gmra.mxu0 %v2642
    %v2682 = vpop.f32.mrf.mxu0
    %v2683 = vadd.f32 %v2636, %v2682
    %2684 = vmatmul.f32.gmra.mxu0 %v2645
    %v2685 = vpop.f32.mrf.mxu0
    %v2686 = vadd.f32 %v2636, %v2685
    %2687 = vmatmul.f32.gmra.mxu0 %v2648
    %v2688 = vpop.f32.mrf.mxu0
    %v2689 = vadd.f32 %v2636, %v2688
    %2690 = vmatmul.f32.gmra.mxu0 %v2651
    %v2691 = vpop.f32.mrf.mxu0
    %v2692 = vadd.f32 %v2636, %v2691
    %2693 = vmatmul.f32.gmra.mxu0 %v2654
    %v2694 = vpop.f32.mrf.mxu0
    %v2695 = vadd.f32 %v2636, %v2694
    %2696 = vmatmul.f32.gmra.mxu0 %v2657
    %v2697 = vpop.f32.mrf.mxu0
    %v2698 = vadd.f32 %v2636, %v2697
    %2699 = vmatmul.f32.gmra.mxu0 %v2660
    %v2700 = vpop.f32.mrf.mxu0
    %v2701 = vadd.f32 %v2636, %v2700
    %2702 = vdwg.mxu0
    %2703 = vst [vmem:[%s9] sm:$0xff] %v2680
    %2704 = vst [vmem:[%s9 + $0x8] sm:$0xff] %v2683
    %2705 = vst [vmem:[%s9 + $0x10] sm:$0xff] %v2686
    %2706 = vst [vmem:[%s9 + $0x18] sm:$0xff] %v2689
    %2707 = vst [vmem:[%s9 + $0x20] sm:$0xff] %v2692
    %2708 = vst [vmem:[%s9 + $0x28] sm:$0xff] %v2695
    %2709 = vst [vmem:[%s9 + $0x30] sm:$0xff] %v2698
    %2710 = vst [vmem:[%s9 + $0x38] sm:$0xff] %v2701
    // Predicated region
    $region54: #{rnn_bilstm_forward.1} parent=1 // pred_check
      _
    $region55: #{rnn_bilstm_forward.1} parent=1 // pred_check_branch
      %2712 = sbr.rel (0) target = $region57
    $region56: #{rnn_bilstm_forward.1} parent=1 // pred_region
      _
    $region57: #{rnn_bilstm_forward.1} parent=1 // pred_fallthru
      _
    // Predicated region
    $region58: #{rnn_bilstm_forward.1} parent=1 // pred_check
      _
    $region59: #{rnn_bilstm_forward.1} parent=1 // pred_check_branch
      %2714 = sbr.rel (0) target = $region61
    $region60: #{rnn_bilstm_forward.1} parent=1 // pred_region
      _
    $region61: #{rnn_bilstm_forward.1} parent=1 // pred_fallthru
      _
    // Predicated region
    $region62: #{rnn_bilstm_forward.1} parent=1 // pred_check
      _
    $region63: #{rnn_bilstm_forward.1} parent=1 // pred_check_branch
      %2716 = sbr.rel (0) target = $region65
    $region64: #{rnn_bilstm_forward.1} parent=1 // pred_region
      _
    $region65: #{rnn_bilstm_forward.1} parent=1 // pred_fallthru
      _
    // Predicated region
    $region66: #{rnn_bilstm_forward.1} parent=1 // pred_check
      _
    $region67: #{rnn_bilstm_forward.1} parent=1 // pred_check_branch
      %2718 = sbr.rel (0) target = $region69
    $region68: #{rnn_bilstm_forward.1} parent=1 // pred_region
      _
    $region69: #{rnn_bilstm_forward.1} parent=1 // pred_fallthru
      _
    // Predicated region
    $region70: #{rnn_bilstm_forward.1} parent=1 // pred_check
      _
    $region71: #{rnn_bilstm_forward.1} parent=1 // pred_check_branch
      %2720 = sbr.rel (0) target = $region73
    $region72: #{rnn_bilstm_forward.1} parent=1 // pred_region
      _
    $region73: #{rnn_bilstm_forward.1} parent=1 // pred_fallthru
      _
    // Predicated region
    $region74: #{rnn_bilstm_forward.1} parent=1 // pred_check
      _
    $region75: #{rnn_bilstm_forward.1} parent=1 // pred_check_branch
      %2722 = sbr.rel (0) target = $region77
    $region76: #{rnn_bilstm_forward.1} parent=1 // pred_region
      _
    $region77: #{rnn_bilstm_forward.1} parent=1 // pred_fallthru
      _
    %2723 = vsyncpa [#allocation6], 1
    %2724 = vsyncpa [#allocation8], 1
    %2725 = vsyncpa [#allocation11], 1

</llo_original>
